<compile_context>
chip_gen: v7x
topology: tpu7x:2x2x1
jax: 0.10.0
libtpu: 0.0.40
codegen_flags: <defaults>
</compile_context>

<pallas_src>
import functools

import jax
import jax.numpy as jnp
from jax.experimental import pallas as pl
from jax.experimental.pallas import tpu as pltpu


def _round_up(x, m):
    return ((x + m - 1) // m) * m


def _char_cnn_highway_kernel(ids_ref, wfold_ref, bc_ref, wpg_ref, bpg_ref, o_ref,
                             *, k, vp):
    """ids (tm, m_word) int32 -> word embeddings (tm, e_word) f32.

    wfold: (k*vp, e_word) bf16, tap-stacked char-table-folded conv weights:
           wfold[j*vp + v, o] = sum_c T[v, c] * Wconv[o, c, j]
    bc   : (1, e_word) f32        conv bias
    wpg  : (e_word, 2*e_word) bf16 = [W_proj^T | W_gate^T]
    bpg  : (1, 2*e_word) f32       = [b_proj   | b_gate ]
    """
    tm, m_word = ids_ref.shape
    e_word = bc_ref.shape[-1]
    t_out = m_word - k + 1                       # valid conv positions

    ids = ids_ref[...]                           # (tm, m_word) int32, load once
    lane_iota = jax.lax.broadcasted_iota(jnp.int32, (tm, vp), 1)
    wfold = wfold_ref[...]                       # (k*vp, e_word) bf16, load once

    # ---- char-CNN: one (tm, k*vp) @ (k*vp, e_word) bf16 MXU matmul per conv position.
    # The one-hot window is rebuilt from ids each step (cheap VPU compares; no big
    # f32 intermediates kept live).  128-aligned lane concat is layout-trivial.
    # conv[n, t, o] = sum_j wfold[j*vp + ids[n, t+j], o]   (bias added after the max).
    mx = jnp.full((tm, e_word), -jnp.inf, dtype=jnp.float32)
    for t in range(t_out):
        oh_win = jnp.concatenate(
            [(ids[:, t + j:t + j + 1] == lane_iota).astype(jnp.bfloat16)
             for j in range(k)],
            axis=1)                                              # (tm, k*vp) bf16, exact
        conv_t = jnp.dot(oh_win, wfold,
                         preferred_element_type=jnp.float32)     # (tm, e_word) f32
        mx = jnp.maximum(mx, conv_t)                             # running max-pool

    # bias hoisted out of the time loop; relu(max(.)+b) == max(relu(.+b))
    x_conv = jnp.maximum(mx + bc_ref[...], 0.0)                  # (tm, e_word) f32

    # ---- Highway (both linears fused into one bf16 matmul, f32 accumulate) ---------
    h = jnp.dot(x_conv.astype(jnp.bfloat16), wpg_ref[...],
                preferred_element_type=jnp.float32) + bpg_ref[...]
    proj = jnp.maximum(h[:, 0:e_word], 0.0)
    gate = jax.nn.sigmoid(h[:, e_word:2 * e_word])
    out = gate * proj + (1.0 - gate) * x_conv

    # TODO(synk): nn.Dropout(p=0.3) is identity in eval mode; training-mode RNG
    # dropout (pltpu.prng_seed / prng_random_bits) is not reproduced here.
    o_ref[...] = out.astype(o_ref.dtype)


def model_embeddings_forward(input_tensor, params, *, tm=512):
    """input_tensor: (L, B, m_word) int32 char ids -> (L, B, embed_size) f32."""
    L, B, m_word = input_tensor.shape
    emb_table = params["char_emb"]                       # (V, e_char), pad row zeroed
    v_size, e_char = emb_table.shape
    wc = params["conv_w"]                                # (e_word, e_char, k) torch Conv1d layout
    bc = params["conv_b"]                                # (e_word,)
    wp, bp = params["proj_w"], params["proj_b"]          # (e_word, e_word), (e_word,)
    wg, bg = params["gate_w"], params["gate_b"]
    e_word, _, k = wc.shape
    assert m_word >= k, "word length must be >= conv kernel width"

    # One-time weight preprocessing in the wrapper (f32 HIGHEST, then cast to bf16):
    # fold the char-embedding table into each conv tap and stack the taps along the
    # contraction axis, padding the vocab to a lane-dense multiple of 128.
    # wfold[j*Vp + v, o] = sum_c T[v, c] * Wconv[o, c, j]; padded rows are zero.
    # NOTE: out-of-range char ids (>= V) hit a zero row -> zero embedding (same as pad).
    v_pad = _round_up(v_size, 128)
    wfold = jnp.einsum("vc,ocj->jvo", emb_table, wc,
                       precision=jax.lax.Precision.HIGHEST)      # (k, V, e_word)
    wfold = jnp.pad(wfold, ((0, 0), (0, v_pad - v_size), (0, 0)))
    wfold = wfold.reshape(k * v_pad, e_word).astype(jnp.bfloat16)

    wpg = jnp.concatenate([wp.T, wg.T], axis=1).astype(jnp.bfloat16)   # (e_word, 2*e_word)
    bpg = jnp.concatenate([bp, bg]).reshape(1, 2 * e_word).astype(jnp.float32)
    bc2 = bc.reshape(1, e_word).astype(jnp.float32)

    ids = input_tensor.reshape(L * B, m_word).astype(jnp.int32)
    N = L * B
    # Big row tile, but cap so the grid keeps >=2 parallel steps (v7x has 2 TensorCores)
    # and stays a multiple of 8.
    tm_eff = max(8, min(int(tm), _round_up(pl.cdiv(N, 2), 8)))
    N_pad = _round_up(N, tm_eff)
    if N_pad != N:
        ids = jnp.pad(ids, ((0, N_pad - N), (0, 0)))     # pad rows (char id 0) sliced off below

    kernel = functools.partial(_char_cnn_highway_kernel, k=int(k), vp=int(v_pad))

    out = pl.pallas_call(
        kernel,
        out_shape=jax.ShapeDtypeStruct((N_pad, e_word), jnp.float32),
        grid_spec=pltpu.PrefetchScalarGridSpec(
            num_scalar_prefetch=0,
            grid=(N_pad // tm_eff,),
            in_specs=[
                pl.BlockSpec((tm_eff, m_word), lambda i: (i, 0)),           # char ids
                pl.BlockSpec((k * v_pad, e_word), lambda i: (0, 0)),        # folded conv W (bf16)
                pl.BlockSpec((1, e_word), lambda i: (0, 0)),                # conv bias
                pl.BlockSpec((e_word, 2 * e_word), lambda i: (0, 0)),       # highway [Wp|Wg] (bf16)
                pl.BlockSpec((1, 2 * e_word), lambda i: (0, 0)),            # highway [bp|bg]
            ],
            out_specs=pl.BlockSpec((tm_eff, e_word), lambda i: (i, 0)),
        ),
        compiler_params=pltpu.CompilerParams(
            dimension_semantics=("parallel",),
            # Explicit VMEM budget with lots of headroom; safe on v5e/v6e (128 MiB)
            # and v7x (64 MiB physical per TC).
            vmem_limit_bytes=32 * 1024 * 1024,
        ),
    )(ids, wfold, bc2, wpg, bpg)

    return out[:N].reshape(L, B, e_word)


def reference_forward(input_tensor, params):
    """Pure-JAX reference mirroring the PyTorch forward (eval mode)."""
    L, B, m_word = input_tensor.shape
    e_char = params["char_emb"].shape[1]
    emb = jnp.take(params["char_emb"], input_tensor.reshape(-1), axis=0)
    emb = emb.reshape(L * B, m_word, e_char)
    x = jnp.transpose(emb, (0, 2, 1))                    # (N, e_char, m_word) == NCH
    conv = jax.lax.conv_general_dilated(
        x, params["conv_w"], window_strides=(1,), padding="VALID",
        dimension_numbers=("NCH", "OIH", "NCH"))
    conv = conv + params["conv_b"][None, :, None]
    x_conv = jnp.max(jax.nn.relu(conv), axis=-1)         # (N, e_word)
    proj = jax.nn.relu(x_conv @ params["proj_w"].T + params["proj_b"])
    gate = jax.nn.sigmoid(x_conv @ params["gate_w"].T + params["gate_b"])
    out = gate * proj + (1.0 - gate) * x_conv
    return out.reshape(L, B, -1)


if __name__ == "__main__":
    # Small shapes consistent with the module: A5 uses e_char=50, k=5, max_word_length=21;
    # embed_size=128 keeps output stores lane-dense; N=65 exercises row padding + 2 grid steps.
    L, B, m_word = 13, 5, 21
    V, e_char, e_word, k, pad_idx = 96, 50, 128, 5, 0

    key = jax.random.PRNGKey(0)
    k0, k1, k2, k3, k4, k5, k6, k7 = jax.random.split(key, 8)
    params = {
        "char_emb": (0.1 * jax.random.normal(k0, (V, e_char), jnp.float32)
                     ).at[pad_idx].set(0.0),             # nn.Embedding(padding_idx)
        "conv_w": 0.05 * jax.random.normal(k1, (e_word, e_char, k), jnp.float32),
        "conv_b": 0.05 * jax.random.normal(k2, (e_word,), jnp.float32),
        "proj_w": 0.05 * jax.random.normal(k3, (e_word, e_word), jnp.float32),
        "proj_b": 0.05 * jax.random.normal(k4, (e_word,), jnp.float32),
        "gate_w": 0.05 * jax.random.normal(k5, (e_word, e_word), jnp.float32),
        "gate_b": 0.05 * jax.random.normal(k6, (e_word,), jnp.float32),
    }
    input_tensor = jax.random.randint(k7, (L, B, m_word), 0, V, dtype=jnp.int32)

    fwd = jax.jit(functools.partial(model_embeddings_forward, tm=512))
    out = jax.block_until_ready(fwd(input_tensor, params))

    ref = reference_forward(input_tensor, params)
    assert out.shape == (L, B, e_word), out.shape
    # bf16 weights / f32 accumulation vs. an f32 reference: 2e-3 tolerance.
    assert bool(jnp.allclose(out, ref, atol=2e-3, rtol=2e-3)), "mismatch vs reference"
    print("KERNEL_OK")
</pallas_src>

<mosaic_0001>
module attributes {stable_mosaic.version = 11 : i64} {
  func.func @_char_cnn_highway_kernel(%arg0: i32, %arg1: memref<40x21xi32, #tpu.memory_space<vmem>>, %arg2: memref<640x128xbf16, #tpu.memory_space<vmem>>, %arg3: memref<1x128xf32, #tpu.memory_space<vmem>>, %arg4: memref<128x256xbf16, #tpu.memory_space<vmem>>, %arg5: memref<1x256xf32, #tpu.memory_space<vmem>>, %arg6: memref<40x128xf32, #tpu.memory_space<vmem>>) attributes {dimension_semantics = [#tpu.dimension_semantics<parallel>], iteration_bounds = array<i64: 2>, scalar_prefetch = 0 : i64, scratch_operands = 0 : i64, tpu.core_type = #tpu.core_type<tc>, window_params = [{transform_indices = @transform_0, window_bounds = array<i64: 40, 21>}, {pipeline_mode = #tpu.pipeline_mode<synchronous>, transform_indices = @transform_1, window_bounds = array<i64: 640, 128>}, {pipeline_mode = #tpu.pipeline_mode<synchronous>, transform_indices = @transform_2, window_bounds = array<i64: 1, 128>}, {pipeline_mode = #tpu.pipeline_mode<synchronous>, transform_indices = @transform_3, window_bounds = array<i64: 128, 256>}, {pipeline_mode = #tpu.pipeline_mode<synchronous>, transform_indices = @transform_4, window_bounds = array<i64: 1, 256>}, {transform_indices = @transform_5, window_bounds = array<i64: 40, 128>}]} {
    %c0 = arith.constant 0 : index
    %c0_0 = arith.constant 0 : index
    %0 = vector.load %arg1[%c0, %c0_0] : memref<40x21xi32, #tpu.memory_space<vmem>>, vector<40x21xi32>
    %1 = tpu.iota {dimensions = array<i32: 1>} : vector<40x128xi32>
    %c0_1 = arith.constant 0 : index
    %c0_2 = arith.constant 0 : index
    %2 = vector.load %arg2[%c0_1, %c0_2] : memref<640x128xbf16, #tpu.memory_space<vmem>>, vector<640x128xbf16>
    %cst = arith.constant 0xFF800000 : f32
    %3 = vector.broadcast %cst : f32 to vector<40x128xf32>
    %4 = vector.extract_strided_slice %0 {offsets = [0, 0], sizes = [40, 1], strides = [1, 1]} : vector<40x21xi32> to vector<40x1xi32>
    %5 = vector.broadcast %4 : vector<40x1xi32> to vector<40x128xi32>
    %6 = arith.cmpi eq, %5, %1 : vector<40x128xi32>
    %7 = arith.extui %6 : vector<40x128xi1> to vector<40x128xi32>
    %8 = arith.sitofp %7 : vector<40x128xi32> to vector<40x128xf32>
    %9 = arith.truncf %8 : vector<40x128xf32> to vector<40x128xbf16>
    %10 = vector.extract_strided_slice %0 {offsets = [0, 1], sizes = [40, 1], strides = [1, 1]} : vector<40x21xi32> to vector<40x1xi32>
    %11 = vector.broadcast %10 : vector<40x1xi32> to vector<40x128xi32>
    %12 = arith.cmpi eq, %11, %1 : vector<40x128xi32>
    %13 = arith.extui %12 : vector<40x128xi1> to vector<40x128xi32>
    %14 = arith.sitofp %13 : vector<40x128xi32> to vector<40x128xf32>
    %15 = arith.truncf %14 : vector<40x128xf32> to vector<40x128xbf16>
    %16 = vector.extract_strided_slice %0 {offsets = [0, 2], sizes = [40, 1], strides = [1, 1]} : vector<40x21xi32> to vector<40x1xi32>
    %17 = vector.broadcast %16 : vector<40x1xi32> to vector<40x128xi32>
    %18 = arith.cmpi eq, %17, %1 : vector<40x128xi32>
    %19 = arith.extui %18 : vector<40x128xi1> to vector<40x128xi32>
    %20 = arith.sitofp %19 : vector<40x128xi32> to vector<40x128xf32>
    %21 = arith.truncf %20 : vector<40x128xf32> to vector<40x128xbf16>
    %22 = vector.extract_strided_slice %0 {offsets = [0, 3], sizes = [40, 1], strides = [1, 1]} : vector<40x21xi32> to vector<40x1xi32>
    %23 = vector.broadcast %22 : vector<40x1xi32> to vector<40x128xi32>
    %24 = arith.cmpi eq, %23, %1 : vector<40x128xi32>
    %25 = arith.extui %24 : vector<40x128xi1> to vector<40x128xi32>
    %26 = arith.sitofp %25 : vector<40x128xi32> to vector<40x128xf32>
    %27 = arith.truncf %26 : vector<40x128xf32> to vector<40x128xbf16>
    %28 = vector.extract_strided_slice %0 {offsets = [0, 4], sizes = [40, 1], strides = [1, 1]} : vector<40x21xi32> to vector<40x1xi32>
    %29 = vector.broadcast %28 : vector<40x1xi32> to vector<40x128xi32>
    %30 = arith.cmpi eq, %29, %1 : vector<40x128xi32>
    %31 = arith.extui %30 : vector<40x128xi1> to vector<40x128xi32>
    %32 = arith.sitofp %31 : vector<40x128xi32> to vector<40x128xf32>
    %33 = arith.truncf %32 : vector<40x128xf32> to vector<40x128xbf16>
    %34 = tpu.concatenate %9, %15, %21, %27, %33 in 1 : vector<40x128xbf16>, vector<40x128xbf16>, vector<40x128xbf16>, vector<40x128xbf16>, vector<40x128xbf16> -> vector<40x640xbf16>
    %cst_3 = arith.constant dense<0.000000e+00> : vector<40x128xf32>
    %35 = tpu.matmul %34, %2, %cst_3 {dimension_numbers = #tpu.dot_dimension_numbers<[1], [0], [0], [1], [0, 0, 1, 1], [], []>} : vector<40x640xbf16>, vector<640x128xbf16>, vector<40x128xf32> -> vector<40x128xf32>
    %36 = arith.maximumf %3, %35 : vector<40x128xf32>
    %37 = vector.extract_strided_slice %0 {offsets = [0, 1], sizes = [40, 1], strides = [1, 1]} : vector<40x21xi32> to vector<40x1xi32>
    %38 = vector.broadcast %37 : vector<40x1xi32> to vector<40x128xi32>
    %39 = arith.cmpi eq, %38, %1 : vector<40x128xi32>
    %40 = arith.extui %39 : vector<40x128xi1> to vector<40x128xi32>
    %41 = arith.sitofp %40 : vector<40x128xi32> to vector<40x128xf32>
    %42 = arith.truncf %41 : vector<40x128xf32> to vector<40x128xbf16>
    %43 = vector.extract_strided_slice %0 {offsets = [0, 2], sizes = [40, 1], strides = [1, 1]} : vector<40x21xi32> to vector<40x1xi32>
    %44 = vector.broadcast %43 : vector<40x1xi32> to vector<40x128xi32>
    %45 = arith.cmpi eq, %44, %1 : vector<40x128xi32>
    %46 = arith.extui %45 : vector<40x128xi1> to vector<40x128xi32>
    %47 = arith.sitofp %46 : vector<40x128xi32> to vector<40x128xf32>
    %48 = arith.truncf %47 : vector<40x128xf32> to vector<40x128xbf16>
    %49 = vector.extract_strided_slice %0 {offsets = [0, 3], sizes = [40, 1], strides = [1, 1]} : vector<40x21xi32> to vector<40x1xi32>
    %50 = vector.broadcast %49 : vector<40x1xi32> to vector<40x128xi32>
    %51 = arith.cmpi eq, %50, %1 : vector<40x128xi32>
    %52 = arith.extui %51 : vector<40x128xi1> to vector<40x128xi32>
    %53 = arith.sitofp %52 : vector<40x128xi32> to vector<40x128xf32>
    %54 = arith.truncf %53 : vector<40x128xf32> to vector<40x128xbf16>
    %55 = vector.extract_strided_slice %0 {offsets = [0, 4], sizes = [40, 1], strides = [1, 1]} : vector<40x21xi32> to vector<40x1xi32>
    %56 = vector.broadcast %55 : vector<40x1xi32> to vector<40x128xi32>
    %57 = arith.cmpi eq, %56, %1 : vector<40x128xi32>
    %58 = arith.extui %57 : vector<40x128xi1> to vector<40x128xi32>
    %59 = arith.sitofp %58 : vector<40x128xi32> to vector<40x128xf32>
    %60 = arith.truncf %59 : vector<40x128xf32> to vector<40x128xbf16>
    %61 = vector.extract_strided_slice %0 {offsets = [0, 5], sizes = [40, 1], strides = [1, 1]} : vector<40x21xi32> to vector<40x1xi32>
    %62 = vector.broadcast %61 : vector<40x1xi32> to vector<40x128xi32>
    %63 = arith.cmpi eq, %62, %1 : vector<40x128xi32>
    %64 = arith.extui %63 : vector<40x128xi1> to vector<40x128xi32>
    %65 = arith.sitofp %64 : vector<40x128xi32> to vector<40x128xf32>
    %66 = arith.truncf %65 : vector<40x128xf32> to vector<40x128xbf16>
    %67 = tpu.concatenate %42, %48, %54, %60, %66 in 1 : vector<40x128xbf16>, vector<40x128xbf16>, vector<40x128xbf16>, vector<40x128xbf16>, vector<40x128xbf16> -> vector<40x640xbf16>
    %cst_4 = arith.constant dense<0.000000e+00> : vector<40x128xf32>
    %68 = tpu.matmul %67, %2, %cst_4 {dimension_numbers = #tpu.dot_dimension_numbers<[1], [0], [0], [1], [0, 0, 1, 1], [], []>} : vector<40x640xbf16>, vector<640x128xbf16>, vector<40x128xf32> -> vector<40x128xf32>
    %69 = arith.maximumf %36, %68 : vector<40x128xf32>
    %70 = vector.extract_strided_slice %0 {offsets = [0, 2], sizes = [40, 1], strides = [1, 1]} : vector<40x21xi32> to vector<40x1xi32>
    %71 = vector.broadcast %70 : vector<40x1xi32> to vector<40x128xi32>
    %72 = arith.cmpi eq, %71, %1 : vector<40x128xi32>
    %73 = arith.extui %72 : vector<40x128xi1> to vector<40x128xi32>
    %74 = arith.sitofp %73 : vector<40x128xi32> to vector<40x128xf32>
    %75 = arith.truncf %74 : vector<40x128xf32> to vector<40x128xbf16>
    %76 = vector.extract_strided_slice %0 {offsets = [0, 3], sizes = [40, 1], strides = [1, 1]} : vector<40x21xi32> to vector<40x1xi32>
    %77 = vector.broadcast %76 : vector<40x1xi32> to vector<40x128xi32>
    %78 = arith.cmpi eq, %77, %1 : vector<40x128xi32>
    %79 = arith.extui %78 : vector<40x128xi1> to vector<40x128xi32>
    %80 = arith.sitofp %79 : vector<40x128xi32> to vector<40x128xf32>
    %81 = arith.truncf %80 : vector<40x128xf32> to vector<40x128xbf16>
    %82 = vector.extract_strided_slice %0 {offsets = [0, 4], sizes = [40, 1], strides = [1, 1]} : vector<40x21xi32> to vector<40x1xi32>
    %83 = vector.broadcast %82 : vector<40x1xi32> to vector<40x128xi32>
    %84 = arith.cmpi eq, %83, %1 : vector<40x128xi32>
    %85 = arith.extui %84 : vector<40x128xi1> to vector<40x128xi32>
    %86 = arith.sitofp %85 : vector<40x128xi32> to vector<40x128xf32>
    %87 = arith.truncf %86 : vector<40x128xf32> to vector<40x128xbf16>
    %88 = vector.extract_strided_slice %0 {offsets = [0, 5], sizes = [40, 1], strides = [1, 1]} : vector<40x21xi32> to vector<40x1xi32>
    %89 = vector.broadcast %88 : vector<40x1xi32> to vector<40x128xi32>
    %90 = arith.cmpi eq, %89, %1 : vector<40x128xi32>
    %91 = arith.extui %90 : vector<40x128xi1> to vector<40x128xi32>
    %92 = arith.sitofp %91 : vector<40x128xi32> to vector<40x128xf32>
    %93 = arith.truncf %92 : vector<40x128xf32> to vector<40x128xbf16>
    %94 = vector.extract_strided_slice %0 {offsets = [0, 6], sizes = [40, 1], strides = [1, 1]} : vector<40x21xi32> to vector<40x1xi32>
    %95 = vector.broadcast %94 : vector<40x1xi32> to vector<40x128xi32>
    %96 = arith.cmpi eq, %95, %1 : vector<40x128xi32>
    %97 = arith.extui %96 : vector<40x128xi1> to vector<40x128xi32>
    %98 = arith.sitofp %97 : vector<40x128xi32> to vector<40x128xf32>
    %99 = arith.truncf %98 : vector<40x128xf32> to vector<40x128xbf16>
    %100 = tpu.concatenate %75, %81, %87, %93, %99 in 1 : vector<40x128xbf16>, vector<40x128xbf16>, vector<40x128xbf16>, vector<40x128xbf16>, vector<40x128xbf16> -> vector<40x640xbf16>
    %cst_5 = arith.constant dense<0.000000e+00> : vector<40x128xf32>
    %101 = tpu.matmul %100, %2, %cst_5 {dimension_numbers = #tpu.dot_dimension_numbers<[1], [0], [0], [1], [0, 0, 1, 1], [], []>} : vector<40x640xbf16>, vector<640x128xbf16>, vector<40x128xf32> -> vector<40x128xf32>
    %102 = arith.maximumf %69, %101 : vector<40x128xf32>
    %103 = vector.extract_strided_slice %0 {offsets = [0, 3], sizes = [40, 1], strides = [1, 1]} : vector<40x21xi32> to vector<40x1xi32>
    %104 = vector.broadcast %103 : vector<40x1xi32> to vector<40x128xi32>
    %105 = arith.cmpi eq, %104, %1 : vector<40x128xi32>
    %106 = arith.extui %105 : vector<40x128xi1> to vector<40x128xi32>
    %107 = arith.sitofp %106 : vector<40x128xi32> to vector<40x128xf32>
    %108 = arith.truncf %107 : vector<40x128xf32> to vector<40x128xbf16>
    %109 = vector.extract_strided_slice %0 {offsets = [0, 4], sizes = [40, 1], strides = [1, 1]} : vector<40x21xi32> to vector<40x1xi32>
    %110 = vector.broadcast %109 : vector<40x1xi32> to vector<40x128xi32>
    %111 = arith.cmpi eq, %110, %1 : vector<40x128xi32>
    %112 = arith.extui %111 : vector<40x128xi1> to vector<40x128xi32>
    %113 = arith.sitofp %112 : vector<40x128xi32> to vector<40x128xf32>
    %114 = arith.truncf %113 : vector<40x128xf32> to vector<40x128xbf16>
    %115 = vector.extract_strided_slice %0 {offsets = [0, 5], sizes = [40, 1], strides = [1, 1]} : vector<40x21xi32> to vector<40x1xi32>
    %116 = vector.broadcast %115 : vector<40x1xi32> to vector<40x128xi32>
    %117 = arith.cmpi eq, %116, %1 : vector<40x128xi32>
    %118 = arith.extui %117 : vector<40x128xi1> to vector<40x128xi32>
    %119 = arith.sitofp %118 : vector<40x128xi32> to vector<40x128xf32>
    %120 = arith.truncf %119 : vector<40x128xf32> to vector<40x128xbf16>
    %121 = vector.extract_strided_slice %0 {offsets = [0, 6], sizes = [40, 1], strides = [1, 1]} : vector<40x21xi32> to vector<40x1xi32>
    %122 = vector.broadcast %121 : vector<40x1xi32> to vector<40x128xi32>
    %123 = arith.cmpi eq, %122, %1 : vector<40x128xi32>
    %124 = arith.extui %123 : vector<40x128xi1> to vector<40x128xi32>
    %125 = arith.sitofp %124 : vector<40x128xi32> to vector<40x128xf32>
    %126 = arith.truncf %125 : vector<40x128xf32> to vector<40x128xbf16>
    %127 = vector.extract_strided_slice %0 {offsets = [0, 7], sizes = [40, 1], strides = [1, 1]} : vector<40x21xi32> to vector<40x1xi32>
    %128 = vector.broadcast %127 : vector<40x1xi32> to vector<40x128xi32>
    %129 = arith.cmpi eq, %128, %1 : vector<40x128xi32>
    %130 = arith.extui %129 : vector<40x128xi1> to vector<40x128xi32>
    %131 = arith.sitofp %130 : vector<40x128xi32> to vector<40x128xf32>
    %132 = arith.truncf %131 : vector<40x128xf32> to vector<40x128xbf16>
    %133 = tpu.concatenate %108, %114, %120, %126, %132 in 1 : vector<40x128xbf16>, vector<40x128xbf16>, vector<40x128xbf16>, vector<40x128xbf16>, vector<40x128xbf16> -> vector<40x640xbf16>
    %cst_6 = arith.constant dense<0.000000e+00> : vector<40x128xf32>
    %134 = tpu.matmul %133, %2, %cst_6 {dimension_numbers = #tpu.dot_dimension_numbers<[1], [0], [0], [1], [0, 0, 1, 1], [], []>} : vector<40x640xbf16>, vector<640x128xbf16>, vector<40x128xf32> -> vector<40x128xf32>
    %135 = arith.maximumf %102, %134 : vector<40x128xf32>
    %136 = vector.extract_strided_slice %0 {offsets = [0, 4], sizes = [40, 1], strides = [1, 1]} : vector<40x21xi32> to vector<40x1xi32>
    %137 = vector.broadcast %136 : vector<40x1xi32> to vector<40x128xi32>
    %138 = arith.cmpi eq, %137, %1 : vector<40x128xi32>
    %139 = arith.extui %138 : vector<40x128xi1> to vector<40x128xi32>
    %140 = arith.sitofp %139 : vector<40x128xi32> to vector<40x128xf32>
    %141 = arith.truncf %140 : vector<40x128xf32> to vector<40x128xbf16>
    %142 = vector.extract_strided_slice %0 {offsets = [0, 5], sizes = [40, 1], strides = [1, 1]} : vector<40x21xi32> to vector<40x1xi32>
    %143 = vector.broadcast %142 : vector<40x1xi32> to vector<40x128xi32>
    %144 = arith.cmpi eq, %143, %1 : vector<40x128xi32>
    %145 = arith.extui %144 : vector<40x128xi1> to vector<40x128xi32>
    %146 = arith.sitofp %145 : vector<40x128xi32> to vector<40x128xf32>
    %147 = arith.truncf %146 : vector<40x128xf32> to vector<40x128xbf16>
    %148 = vector.extract_strided_slice %0 {offsets = [0, 6], sizes = [40, 1], strides = [1, 1]} : vector<40x21xi32> to vector<40x1xi32>
    %149 = vector.broadcast %148 : vector<40x1xi32> to vector<40x128xi32>
    %150 = arith.cmpi eq, %149, %1 : vector<40x128xi32>
    %151 = arith.extui %150 : vector<40x128xi1> to vector<40x128xi32>
    %152 = arith.sitofp %151 : vector<40x128xi32> to vector<40x128xf32>
    %153 = arith.truncf %152 : vector<40x128xf32> to vector<40x128xbf16>
    %154 = vector.extract_strided_slice %0 {offsets = [0, 7], sizes = [40, 1], strides = [1, 1]} : vector<40x21xi32> to vector<40x1xi32>
    %155 = vector.broadcast %154 : vector<40x1xi32> to vector<40x128xi32>
    %156 = arith.cmpi eq, %155, %1 : vector<40x128xi32>
    %157 = arith.extui %156 : vector<40x128xi1> to vector<40x128xi32>
    %158 = arith.sitofp %157 : vector<40x128xi32> to vector<40x128xf32>
    %159 = arith.truncf %158 : vector<40x128xf32> to vector<40x128xbf16>
    %160 = vector.extract_strided_slice %0 {offsets = [0, 8], sizes = [40, 1], strides = [1, 1]} : vector<40x21xi32> to vector<40x1xi32>
    %161 = vector.broadcast %160 : vector<40x1xi32> to vector<40x128xi32>
    %162 = arith.cmpi eq, %161, %1 : vector<40x128xi32>
    %163 = arith.extui %162 : vector<40x128xi1> to vector<40x128xi32>
    %164 = arith.sitofp %163 : vector<40x128xi32> to vector<40x128xf32>
    %165 = arith.truncf %164 : vector<40x128xf32> to vector<40x128xbf16>
    %166 = tpu.concatenate %141, %147, %153, %159, %165 in 1 : vector<40x128xbf16>, vector<40x128xbf16>, vector<40x128xbf16>, vector<40x128xbf16>, vector<40x128xbf16> -> vector<40x640xbf16>
    %cst_7 = arith.constant dense<0.000000e+00> : vector<40x128xf32>
    %167 = tpu.matmul %166, %2, %cst_7 {dimension_numbers = #tpu.dot_dimension_numbers<[1], [0], [0], [1], [0, 0, 1, 1], [], []>} : vector<40x640xbf16>, vector<640x128xbf16>, vector<40x128xf32> -> vector<40x128xf32>
    %168 = arith.maximumf %135, %167 : vector<40x128xf32>
    %169 = vector.extract_strided_slice %0 {offsets = [0, 5], sizes = [40, 1], strides = [1, 1]} : vector<40x21xi32> to vector<40x1xi32>
    %170 = vector.broadcast %169 : vector<40x1xi32> to vector<40x128xi32>
    %171 = arith.cmpi eq, %170, %1 : vector<40x128xi32>
    %172 = arith.extui %171 : vector<40x128xi1> to vector<40x128xi32>
    %173 = arith.sitofp %172 : vector<40x128xi32> to vector<40x128xf32>
    %174 = arith.truncf %173 : vector<40x128xf32> to vector<40x128xbf16>
    %175 = vector.extract_strided_slice %0 {offsets = [0, 6], sizes = [40, 1], strides = [1, 1]} : vector<40x21xi32> to vector<40x1xi32>
    %176 = vector.broadcast %175 : vector<40x1xi32> to vector<40x128xi32>
    %177 = arith.cmpi eq, %176, %1 : vector<40x128xi32>
    %178 = arith.extui %177 : vector<40x128xi1> to vector<40x128xi32>
    %179 = arith.sitofp %178 : vector<40x128xi32> to vector<40x128xf32>
    %180 = arith.truncf %179 : vector<40x128xf32> to vector<40x128xbf16>
    %181 = vector.extract_strided_slice %0 {offsets = [0, 7], sizes = [40, 1], strides = [1, 1]} : vector<40x21xi32> to vector<40x1xi32>
    %182 = vector.broadcast %181 : vector<40x1xi32> to vector<40x128xi32>
    %183 = arith.cmpi eq, %182, %1 : vector<40x128xi32>
    %184 = arith.extui %183 : vector<40x128xi1> to vector<40x128xi32>
    %185 = arith.sitofp %184 : vector<40x128xi32> to vector<40x128xf32>
    %186 = arith.truncf %185 : vector<40x128xf32> to vector<40x128xbf16>
    %187 = vector.extract_strided_slice %0 {offsets = [0, 8], sizes = [40, 1], strides = [1, 1]} : vector<40x21xi32> to vector<40x1xi32>
    %188 = vector.broadcast %187 : vector<40x1xi32> to vector<40x128xi32>
    %189 = arith.cmpi eq, %188, %1 : vector<40x128xi32>
    %190 = arith.extui %189 : vector<40x128xi1> to vector<40x128xi32>
    %191 = arith.sitofp %190 : vector<40x128xi32> to vector<40x128xf32>
    %192 = arith.truncf %191 : vector<40x128xf32> to vector<40x128xbf16>
    %193 = vector.extract_strided_slice %0 {offsets = [0, 9], sizes = [40, 1], strides = [1, 1]} : vector<40x21xi32> to vector<40x1xi32>
    %194 = vector.broadcast %193 : vector<40x1xi32> to vector<40x128xi32>
    %195 = arith.cmpi eq, %194, %1 : vector<40x128xi32>
    %196 = arith.extui %195 : vector<40x128xi1> to vector<40x128xi32>
    %197 = arith.sitofp %196 : vector<40x128xi32> to vector<40x128xf32>
    %198 = arith.truncf %197 : vector<40x128xf32> to vector<40x128xbf16>
    %199 = tpu.concatenate %174, %180, %186, %192, %198 in 1 : vector<40x128xbf16>, vector<40x128xbf16>, vector<40x128xbf16>, vector<40x128xbf16>, vector<40x128xbf16> -> vector<40x640xbf16>
    %cst_8 = arith.constant dense<0.000000e+00> : vector<40x128xf32>
    %200 = tpu.matmul %199, %2, %cst_8 {dimension_numbers = #tpu.dot_dimension_numbers<[1], [0], [0], [1], [0, 0, 1, 1], [], []>} : vector<40x640xbf16>, vector<640x128xbf16>, vector<40x128xf32> -> vector<40x128xf32>
    %201 = arith.maximumf %168, %200 : vector<40x128xf32>
    %202 = vector.extract_strided_slice %0 {offsets = [0, 6], sizes = [40, 1], strides = [1, 1]} : vector<40x21xi32> to vector<40x1xi32>
    %203 = vector.broadcast %202 : vector<40x1xi32> to vector<40x128xi32>
    %204 = arith.cmpi eq, %203, %1 : vector<40x128xi32>
    %205 = arith.extui %204 : vector<40x128xi1> to vector<40x128xi32>
    %206 = arith.sitofp %205 : vector<40x128xi32> to vector<40x128xf32>
    %207 = arith.truncf %206 : vector<40x128xf32> to vector<40x128xbf16>
    %208 = vector.extract_strided_slice %0 {offsets = [0, 7], sizes = [40, 1], strides = [1, 1]} : vector<40x21xi32> to vector<40x1xi32>
    %209 = vector.broadcast %208 : vector<40x1xi32> to vector<40x128xi32>
    %210 = arith.cmpi eq, %209, %1 : vector<40x128xi32>
    %211 = arith.extui %210 : vector<40x128xi1> to vector<40x128xi32>
    %212 = arith.sitofp %211 : vector<40x128xi32> to vector<40x128xf32>
    %213 = arith.truncf %212 : vector<40x128xf32> to vector<40x128xbf16>
    %214 = vector.extract_strided_slice %0 {offsets = [0, 8], sizes = [40, 1], strides = [1, 1]} : vector<40x21xi32> to vector<40x1xi32>
    %215 = vector.broadcast %214 : vector<40x1xi32> to vector<40x128xi32>
    %216 = arith.cmpi eq, %215, %1 : vector<40x128xi32>
    %217 = arith.extui %216 : vector<40x128xi1> to vector<40x128xi32>
    %218 = arith.sitofp %217 : vector<40x128xi32> to vector<40x128xf32>
    %219 = arith.truncf %218 : vector<40x128xf32> to vector<40x128xbf16>
    %220 = vector.extract_strided_slice %0 {offsets = [0, 9], sizes = [40, 1], strides = [1, 1]} : vector<40x21xi32> to vector<40x1xi32>
    %221 = vector.broadcast %220 : vector<40x1xi32> to vector<40x128xi32>
    %222 = arith.cmpi eq, %221, %1 : vector<40x128xi32>
    %223 = arith.extui %222 : vector<40x128xi1> to vector<40x128xi32>
    %224 = arith.sitofp %223 : vector<40x128xi32> to vector<40x128xf32>
    %225 = arith.truncf %224 : vector<40x128xf32> to vector<40x128xbf16>
    %226 = vector.extract_strided_slice %0 {offsets = [0, 10], sizes = [40, 1], strides = [1, 1]} : vector<40x21xi32> to vector<40x1xi32>
    %227 = vector.broadcast %226 : vector<40x1xi32> to vector<40x128xi32>
    %228 = arith.cmpi eq, %227, %1 : vector<40x128xi32>
    %229 = arith.extui %228 : vector<40x128xi1> to vector<40x128xi32>
    %230 = arith.sitofp %229 : vector<40x128xi32> to vector<40x128xf32>
    %231 = arith.truncf %230 : vector<40x128xf32> to vector<40x128xbf16>
    %232 = tpu.concatenate %207, %213, %219, %225, %231 in 1 : vector<40x128xbf16>, vector<40x128xbf16>, vector<40x128xbf16>, vector<40x128xbf16>, vector<40x128xbf16> -> vector<40x640xbf16>
    %cst_9 = arith.constant dense<0.000000e+00> : vector<40x128xf32>
    %233 = tpu.matmul %232, %2, %cst_9 {dimension_numbers = #tpu.dot_dimension_numbers<[1], [0], [0], [1], [0, 0, 1, 1], [], []>} : vector<40x640xbf16>, vector<640x128xbf16>, vector<40x128xf32> -> vector<40x128xf32>
    %234 = arith.maximumf %201, %233 : vector<40x128xf32>
    %235 = vector.extract_strided_slice %0 {offsets = [0, 7], sizes = [40, 1], strides = [1, 1]} : vector<40x21xi32> to vector<40x1xi32>
    %236 = vector.broadcast %235 : vector<40x1xi32> to vector<40x128xi32>
    %237 = arith.cmpi eq, %236, %1 : vector<40x128xi32>
    %238 = arith.extui %237 : vector<40x128xi1> to vector<40x128xi32>
    %239 = arith.sitofp %238 : vector<40x128xi32> to vector<40x128xf32>
    %240 = arith.truncf %239 : vector<40x128xf32> to vector<40x128xbf16>
    %241 = vector.extract_strided_slice %0 {offsets = [0, 8], sizes = [40, 1], strides = [1, 1]} : vector<40x21xi32> to vector<40x1xi32>
    %242 = vector.broadcast %241 : vector<40x1xi32> to vector<40x128xi32>
    %243 = arith.cmpi eq, %242, %1 : vector<40x128xi32>
    %244 = arith.extui %243 : vector<40x128xi1> to vector<40x128xi32>
    %245 = arith.sitofp %244 : vector<40x128xi32> to vector<40x128xf32>
    %246 = arith.truncf %245 : vector<40x128xf32> to vector<40x128xbf16>
    %247 = vector.extract_strided_slice %0 {offsets = [0, 9], sizes = [40, 1], strides = [1, 1]} : vector<40x21xi32> to vector<40x1xi32>
    %248 = vector.broadcast %247 : vector<40x1xi32> to vector<40x128xi32>
    %249 = arith.cmpi eq, %248, %1 : vector<40x128xi32>
    %250 = arith.extui %249 : vector<40x128xi1> to vector<40x128xi32>
    %251 = arith.sitofp %250 : vector<40x128xi32> to vector<40x128xf32>
    %252 = arith.truncf %251 : vector<40x128xf32> to vector<40x128xbf16>
    %253 = vector.extract_strided_slice %0 {offsets = [0, 10], sizes = [40, 1], strides = [1, 1]} : vector<40x21xi32> to vector<40x1xi32>
    %254 = vector.broadcast %253 : vector<40x1xi32> to vector<40x128xi32>
    %255 = arith.cmpi eq, %254, %1 : vector<40x128xi32>
    %256 = arith.extui %255 : vector<40x128xi1> to vector<40x128xi32>
    %257 = arith.sitofp %256 : vector<40x128xi32> to vector<40x128xf32>
    %258 = arith.truncf %257 : vector<40x128xf32> to vector<40x128xbf16>
    %259 = vector.extract_strided_slice %0 {offsets = [0, 11], sizes = [40, 1], strides = [1, 1]} : vector<40x21xi32> to vector<40x1xi32>
    %260 = vector.broadcast %259 : vector<40x1xi32> to vector<40x128xi32>
    %261 = arith.cmpi eq, %260, %1 : vector<40x128xi32>
    %262 = arith.extui %261 : vector<40x128xi1> to vector<40x128xi32>
    %263 = arith.sitofp %262 : vector<40x128xi32> to vector<40x128xf32>
    %264 = arith.truncf %263 : vector<40x128xf32> to vector<40x128xbf16>
    %265 = tpu.concatenate %240, %246, %252, %258, %264 in 1 : vector<40x128xbf16>, vector<40x128xbf16>, vector<40x128xbf16>, vector<40x128xbf16>, vector<40x128xbf16> -> vector<40x640xbf16>
    %cst_10 = arith.constant dense<0.000000e+00> : vector<40x128xf32>
    %266 = tpu.matmul %265, %2, %cst_10 {dimension_numbers = #tpu.dot_dimension_numbers<[1], [0], [0], [1], [0, 0, 1, 1], [], []>} : vector<40x640xbf16>, vector<640x128xbf16>, vector<40x128xf32> -> vector<40x128xf32>
    %267 = arith.maximumf %234, %266 : vector<40x128xf32>
    %268 = vector.extract_strided_slice %0 {offsets = [0, 8], sizes = [40, 1], strides = [1, 1]} : vector<40x21xi32> to vector<40x1xi32>
    %269 = vector.broadcast %268 : vector<40x1xi32> to vector<40x128xi32>
    %270 = arith.cmpi eq, %269, %1 : vector<40x128xi32>
    %271 = arith.extui %270 : vector<40x128xi1> to vector<40x128xi32>
    %272 = arith.sitofp %271 : vector<40x128xi32> to vector<40x128xf32>
    %273 = arith.truncf %272 : vector<40x128xf32> to vector<40x128xbf16>
    %274 = vector.extract_strided_slice %0 {offsets = [0, 9], sizes = [40, 1], strides = [1, 1]} : vector<40x21xi32> to vector<40x1xi32>
    %275 = vector.broadcast %274 : vector<40x1xi32> to vector<40x128xi32>
    %276 = arith.cmpi eq, %275, %1 : vector<40x128xi32>
    %277 = arith.extui %276 : vector<40x128xi1> to vector<40x128xi32>
    %278 = arith.sitofp %277 : vector<40x128xi32> to vector<40x128xf32>
    %279 = arith.truncf %278 : vector<40x128xf32> to vector<40x128xbf16>
    %280 = vector.extract_strided_slice %0 {offsets = [0, 10], sizes = [40, 1], strides = [1, 1]} : vector<40x21xi32> to vector<40x1xi32>
    %281 = vector.broadcast %280 : vector<40x1xi32> to vector<40x128xi32>
    %282 = arith.cmpi eq, %281, %1 : vector<40x128xi32>
    %283 = arith.extui %282 : vector<40x128xi1> to vector<40x128xi32>
    %284 = arith.sitofp %283 : vector<40x128xi32> to vector<40x128xf32>
    %285 = arith.truncf %284 : vector<40x128xf32> to vector<40x128xbf16>
    %286 = vector.extract_strided_slice %0 {offsets = [0, 11], sizes = [40, 1], strides = [1, 1]} : vector<40x21xi32> to vector<40x1xi32>
    %287 = vector.broadcast %286 : vector<40x1xi32> to vector<40x128xi32>
    %288 = arith.cmpi eq, %287, %1 : vector<40x128xi32>
    %289 = arith.extui %288 : vector<40x128xi1> to vector<40x128xi32>
    %290 = arith.sitofp %289 : vector<40x128xi32> to vector<40x128xf32>
    %291 = arith.truncf %290 : vector<40x128xf32> to vector<40x128xbf16>
    %292 = vector.extract_strided_slice %0 {offsets = [0, 12], sizes = [40, 1], strides = [1, 1]} : vector<40x21xi32> to vector<40x1xi32>
    %293 = vector.broadcast %292 : vector<40x1xi32> to vector<40x128xi32>
    %294 = arith.cmpi eq, %293, %1 : vector<40x128xi32>
    %295 = arith.extui %294 : vector<40x128xi1> to vector<40x128xi32>
    %296 = arith.sitofp %295 : vector<40x128xi32> to vector<40x128xf32>
    %297 = arith.truncf %296 : vector<40x128xf32> to vector<40x128xbf16>
    %298 = tpu.concatenate %273, %279, %285, %291, %297 in 1 : vector<40x128xbf16>, vector<40x128xbf16>, vector<40x128xbf16>, vector<40x128xbf16>, vector<40x128xbf16> -> vector<40x640xbf16>
    %cst_11 = arith.constant dense<0.000000e+00> : vector<40x128xf32>
    %299 = tpu.matmul %298, %2, %cst_11 {dimension_numbers = #tpu.dot_dimension_numbers<[1], [0], [0], [1], [0, 0, 1, 1], [], []>} : vector<40x640xbf16>, vector<640x128xbf16>, vector<40x128xf32> -> vector<40x128xf32>
    %300 = arith.maximumf %267, %299 : vector<40x128xf32>
    %301 = vector.extract_strided_slice %0 {offsets = [0, 9], sizes = [40, 1], strides = [1, 1]} : vector<40x21xi32> to vector<40x1xi32>
    %302 = vector.broadcast %301 : vector<40x1xi32> to vector<40x128xi32>
    %303 = arith.cmpi eq, %302, %1 : vector<40x128xi32>
    %304 = arith.extui %303 : vector<40x128xi1> to vector<40x128xi32>
    %305 = arith.sitofp %304 : vector<40x128xi32> to vector<40x128xf32>
    %306 = arith.truncf %305 : vector<40x128xf32> to vector<40x128xbf16>
    %307 = vector.extract_strided_slice %0 {offsets = [0, 10], sizes = [40, 1], strides = [1, 1]} : vector<40x21xi32> to vector<40x1xi32>
    %308 = vector.broadcast %307 : vector<40x1xi32> to vector<40x128xi32>
    %309 = arith.cmpi eq, %308, %1 : vector<40x128xi32>
    %310 = arith.extui %309 : vector<40x128xi1> to vector<40x128xi32>
    %311 = arith.sitofp %310 : vector<40x128xi32> to vector<40x128xf32>
    %312 = arith.truncf %311 : vector<40x128xf32> to vector<40x128xbf16>
    %313 = vector.extract_strided_slice %0 {offsets = [0, 11], sizes = [40, 1], strides = [1, 1]} : vector<40x21xi32> to vector<40x1xi32>
    %314 = vector.broadcast %313 : vector<40x1xi32> to vector<40x128xi32>
    %315 = arith.cmpi eq, %314, %1 : vector<40x128xi32>
    %316 = arith.extui %315 : vector<40x128xi1> to vector<40x128xi32>
    %317 = arith.sitofp %316 : vector<40x128xi32> to vector<40x128xf32>
    %318 = arith.truncf %317 : vector<40x128xf32> to vector<40x128xbf16>
    %319 = vector.extract_strided_slice %0 {offsets = [0, 12], sizes = [40, 1], strides = [1, 1]} : vector<40x21xi32> to vector<40x1xi32>
    %320 = vector.broadcast %319 : vector<40x1xi32> to vector<40x128xi32>
    %321 = arith.cmpi eq, %320, %1 : vector<40x128xi32>
    %322 = arith.extui %321 : vector<40x128xi1> to vector<40x128xi32>
    %323 = arith.sitofp %322 : vector<40x128xi32> to vector<40x128xf32>
    %324 = arith.truncf %323 : vector<40x128xf32> to vector<40x128xbf16>
    %325 = vector.extract_strided_slice %0 {offsets = [0, 13], sizes = [40, 1], strides = [1, 1]} : vector<40x21xi32> to vector<40x1xi32>
    %326 = vector.broadcast %325 : vector<40x1xi32> to vector<40x128xi32>
    %327 = arith.cmpi eq, %326, %1 : vector<40x128xi32>
    %328 = arith.extui %327 : vector<40x128xi1> to vector<40x128xi32>
    %329 = arith.sitofp %328 : vector<40x128xi32> to vector<40x128xf32>
    %330 = arith.truncf %329 : vector<40x128xf32> to vector<40x128xbf16>
    %331 = tpu.concatenate %306, %312, %318, %324, %330 in 1 : vector<40x128xbf16>, vector<40x128xbf16>, vector<40x128xbf16>, vector<40x128xbf16>, vector<40x128xbf16> -> vector<40x640xbf16>
    %cst_12 = arith.constant dense<0.000000e+00> : vector<40x128xf32>
    %332 = tpu.matmul %331, %2, %cst_12 {dimension_numbers = #tpu.dot_dimension_numbers<[1], [0], [0], [1], [0, 0, 1, 1], [], []>} : vector<40x640xbf16>, vector<640x128xbf16>, vector<40x128xf32> -> vector<40x128xf32>
    %333 = arith.maximumf %300, %332 : vector<40x128xf32>
    %334 = vector.extract_strided_slice %0 {offsets = [0, 10], sizes = [40, 1], strides = [1, 1]} : vector<40x21xi32> to vector<40x1xi32>
    %335 = vector.broadcast %334 : vector<40x1xi32> to vector<40x128xi32>
    %336 = arith.cmpi eq, %335, %1 : vector<40x128xi32>
    %337 = arith.extui %336 : vector<40x128xi1> to vector<40x128xi32>
    %338 = arith.sitofp %337 : vector<40x128xi32> to vector<40x128xf32>
    %339 = arith.truncf %338 : vector<40x128xf32> to vector<40x128xbf16>
    %340 = vector.extract_strided_slice %0 {offsets = [0, 11], sizes = [40, 1], strides = [1, 1]} : vector<40x21xi32> to vector<40x1xi32>
    %341 = vector.broadcast %340 : vector<40x1xi32> to vector<40x128xi32>
    %342 = arith.cmpi eq, %341, %1 : vector<40x128xi32>
    %343 = arith.extui %342 : vector<40x128xi1> to vector<40x128xi32>
    %344 = arith.sitofp %343 : vector<40x128xi32> to vector<40x128xf32>
    %345 = arith.truncf %344 : vector<40x128xf32> to vector<40x128xbf16>
    %346 = vector.extract_strided_slice %0 {offsets = [0, 12], sizes = [40, 1], strides = [1, 1]} : vector<40x21xi32> to vector<40x1xi32>
    %347 = vector.broadcast %346 : vector<40x1xi32> to vector<40x128xi32>
    %348 = arith.cmpi eq, %347, %1 : vector<40x128xi32>
    %349 = arith.extui %348 : vector<40x128xi1> to vector<40x128xi32>
    %350 = arith.sitofp %349 : vector<40x128xi32> to vector<40x128xf32>
    %351 = arith.truncf %350 : vector<40x128xf32> to vector<40x128xbf16>
    %352 = vector.extract_strided_slice %0 {offsets = [0, 13], sizes = [40, 1], strides = [1, 1]} : vector<40x21xi32> to vector<40x1xi32>
    %353 = vector.broadcast %352 : vector<40x1xi32> to vector<40x128xi32>
    %354 = arith.cmpi eq, %353, %1 : vector<40x128xi32>
    %355 = arith.extui %354 : vector<40x128xi1> to vector<40x128xi32>
    %356 = arith.sitofp %355 : vector<40x128xi32> to vector<40x128xf32>
    %357 = arith.truncf %356 : vector<40x128xf32> to vector<40x128xbf16>
    %358 = vector.extract_strided_slice %0 {offsets = [0, 14], sizes = [40, 1], strides = [1, 1]} : vector<40x21xi32> to vector<40x1xi32>
    %359 = vector.broadcast %358 : vector<40x1xi32> to vector<40x128xi32>
    %360 = arith.cmpi eq, %359, %1 : vector<40x128xi32>
    %361 = arith.extui %360 : vector<40x128xi1> to vector<40x128xi32>
    %362 = arith.sitofp %361 : vector<40x128xi32> to vector<40x128xf32>
    %363 = arith.truncf %362 : vector<40x128xf32> to vector<40x128xbf16>
    %364 = tpu.concatenate %339, %345, %351, %357, %363 in 1 : vector<40x128xbf16>, vector<40x128xbf16>, vector<40x128xbf16>, vector<40x128xbf16>, vector<40x128xbf16> -> vector<40x640xbf16>
    %cst_13 = arith.constant dense<0.000000e+00> : vector<40x128xf32>
    %365 = tpu.matmul %364, %2, %cst_13 {dimension_numbers = #tpu.dot_dimension_numbers<[1], [0], [0], [1], [0, 0, 1, 1], [], []>} : vector<40x640xbf16>, vector<640x128xbf16>, vector<40x128xf32> -> vector<40x128xf32>
    %366 = arith.maximumf %333, %365 : vector<40x128xf32>
    %367 = vector.extract_strided_slice %0 {offsets = [0, 11], sizes = [40, 1], strides = [1, 1]} : vector<40x21xi32> to vector<40x1xi32>
    %368 = vector.broadcast %367 : vector<40x1xi32> to vector<40x128xi32>
    %369 = arith.cmpi eq, %368, %1 : vector<40x128xi32>
    %370 = arith.extui %369 : vector<40x128xi1> to vector<40x128xi32>
    %371 = arith.sitofp %370 : vector<40x128xi32> to vector<40x128xf32>
    %372 = arith.truncf %371 : vector<40x128xf32> to vector<40x128xbf16>
    %373 = vector.extract_strided_slice %0 {offsets = [0, 12], sizes = [40, 1], strides = [1, 1]} : vector<40x21xi32> to vector<40x1xi32>
    %374 = vector.broadcast %373 : vector<40x1xi32> to vector<40x128xi32>
    %375 = arith.cmpi eq, %374, %1 : vector<40x128xi32>
    %376 = arith.extui %375 : vector<40x128xi1> to vector<40x128xi32>
    %377 = arith.sitofp %376 : vector<40x128xi32> to vector<40x128xf32>
    %378 = arith.truncf %377 : vector<40x128xf32> to vector<40x128xbf16>
    %379 = vector.extract_strided_slice %0 {offsets = [0, 13], sizes = [40, 1], strides = [1, 1]} : vector<40x21xi32> to vector<40x1xi32>
    %380 = vector.broadcast %379 : vector<40x1xi32> to vector<40x128xi32>
    %381 = arith.cmpi eq, %380, %1 : vector<40x128xi32>
    %382 = arith.extui %381 : vector<40x128xi1> to vector<40x128xi32>
    %383 = arith.sitofp %382 : vector<40x128xi32> to vector<40x128xf32>
    %384 = arith.truncf %383 : vector<40x128xf32> to vector<40x128xbf16>
    %385 = vector.extract_strided_slice %0 {offsets = [0, 14], sizes = [40, 1], strides = [1, 1]} : vector<40x21xi32> to vector<40x1xi32>
    %386 = vector.broadcast %385 : vector<40x1xi32> to vector<40x128xi32>
    %387 = arith.cmpi eq, %386, %1 : vector<40x128xi32>
    %388 = arith.extui %387 : vector<40x128xi1> to vector<40x128xi32>
    %389 = arith.sitofp %388 : vector<40x128xi32> to vector<40x128xf32>
    %390 = arith.truncf %389 : vector<40x128xf32> to vector<40x128xbf16>
    %391 = vector.extract_strided_slice %0 {offsets = [0, 15], sizes = [40, 1], strides = [1, 1]} : vector<40x21xi32> to vector<40x1xi32>
    %392 = vector.broadcast %391 : vector<40x1xi32> to vector<40x128xi32>
    %393 = arith.cmpi eq, %392, %1 : vector<40x128xi32>
    %394 = arith.extui %393 : vector<40x128xi1> to vector<40x128xi32>
    %395 = arith.sitofp %394 : vector<40x128xi32> to vector<40x128xf32>
    %396 = arith.truncf %395 : vector<40x128xf32> to vector<40x128xbf16>
    %397 = tpu.concatenate %372, %378, %384, %390, %396 in 1 : vector<40x128xbf16>, vector<40x128xbf16>, vector<40x128xbf16>, vector<40x128xbf16>, vector<40x128xbf16> -> vector<40x640xbf16>
    %cst_14 = arith.constant dense<0.000000e+00> : vector<40x128xf32>
    %398 = tpu.matmul %397, %2, %cst_14 {dimension_numbers = #tpu.dot_dimension_numbers<[1], [0], [0], [1], [0, 0, 1, 1], [], []>} : vector<40x640xbf16>, vector<640x128xbf16>, vector<40x128xf32> -> vector<40x128xf32>
    %399 = arith.maximumf %366, %398 : vector<40x128xf32>
    %400 = vector.extract_strided_slice %0 {offsets = [0, 12], sizes = [40, 1], strides = [1, 1]} : vector<40x21xi32> to vector<40x1xi32>
    %401 = vector.broadcast %400 : vector<40x1xi32> to vector<40x128xi32>
    %402 = arith.cmpi eq, %401, %1 : vector<40x128xi32>
    %403 = arith.extui %402 : vector<40x128xi1> to vector<40x128xi32>
    %404 = arith.sitofp %403 : vector<40x128xi32> to vector<40x128xf32>
    %405 = arith.truncf %404 : vector<40x128xf32> to vector<40x128xbf16>
    %406 = vector.extract_strided_slice %0 {offsets = [0, 13], sizes = [40, 1], strides = [1, 1]} : vector<40x21xi32> to vector<40x1xi32>
    %407 = vector.broadcast %406 : vector<40x1xi32> to vector<40x128xi32>
    %408 = arith.cmpi eq, %407, %1 : vector<40x128xi32>
    %409 = arith.extui %408 : vector<40x128xi1> to vector<40x128xi32>
    %410 = arith.sitofp %409 : vector<40x128xi32> to vector<40x128xf32>
    %411 = arith.truncf %410 : vector<40x128xf32> to vector<40x128xbf16>
    %412 = vector.extract_strided_slice %0 {offsets = [0, 14], sizes = [40, 1], strides = [1, 1]} : vector<40x21xi32> to vector<40x1xi32>
    %413 = vector.broadcast %412 : vector<40x1xi32> to vector<40x128xi32>
    %414 = arith.cmpi eq, %413, %1 : vector<40x128xi32>
    %415 = arith.extui %414 : vector<40x128xi1> to vector<40x128xi32>
    %416 = arith.sitofp %415 : vector<40x128xi32> to vector<40x128xf32>
    %417 = arith.truncf %416 : vector<40x128xf32> to vector<40x128xbf16>
    %418 = vector.extract_strided_slice %0 {offsets = [0, 15], sizes = [40, 1], strides = [1, 1]} : vector<40x21xi32> to vector<40x1xi32>
    %419 = vector.broadcast %418 : vector<40x1xi32> to vector<40x128xi32>
    %420 = arith.cmpi eq, %419, %1 : vector<40x128xi32>
    %421 = arith.extui %420 : vector<40x128xi1> to vector<40x128xi32>
    %422 = arith.sitofp %421 : vector<40x128xi32> to vector<40x128xf32>
    %423 = arith.truncf %422 : vector<40x128xf32> to vector<40x128xbf16>
    %424 = vector.extract_strided_slice %0 {offsets = [0, 16], sizes = [40, 1], strides = [1, 1]} : vector<40x21xi32> to vector<40x1xi32>
    %425 = vector.broadcast %424 : vector<40x1xi32> to vector<40x128xi32>
    %426 = arith.cmpi eq, %425, %1 : vector<40x128xi32>
    %427 = arith.extui %426 : vector<40x128xi1> to vector<40x128xi32>
    %428 = arith.sitofp %427 : vector<40x128xi32> to vector<40x128xf32>
    %429 = arith.truncf %428 : vector<40x128xf32> to vector<40x128xbf16>
    %430 = tpu.concatenate %405, %411, %417, %423, %429 in 1 : vector<40x128xbf16>, vector<40x128xbf16>, vector<40x128xbf16>, vector<40x128xbf16>, vector<40x128xbf16> -> vector<40x640xbf16>
    %cst_15 = arith.constant dense<0.000000e+00> : vector<40x128xf32>
    %431 = tpu.matmul %430, %2, %cst_15 {dimension_numbers = #tpu.dot_dimension_numbers<[1], [0], [0], [1], [0, 0, 1, 1], [], []>} : vector<40x640xbf16>, vector<640x128xbf16>, vector<40x128xf32> -> vector<40x128xf32>
    %432 = arith.maximumf %399, %431 : vector<40x128xf32>
    %433 = vector.extract_strided_slice %0 {offsets = [0, 13], sizes = [40, 1], strides = [1, 1]} : vector<40x21xi32> to vector<40x1xi32>
    %434 = vector.broadcast %433 : vector<40x1xi32> to vector<40x128xi32>
    %435 = arith.cmpi eq, %434, %1 : vector<40x128xi32>
    %436 = arith.extui %435 : vector<40x128xi1> to vector<40x128xi32>
    %437 = arith.sitofp %436 : vector<40x128xi32> to vector<40x128xf32>
    %438 = arith.truncf %437 : vector<40x128xf32> to vector<40x128xbf16>
    %439 = vector.extract_strided_slice %0 {offsets = [0, 14], sizes = [40, 1], strides = [1, 1]} : vector<40x21xi32> to vector<40x1xi32>
    %440 = vector.broadcast %439 : vector<40x1xi32> to vector<40x128xi32>
    %441 = arith.cmpi eq, %440, %1 : vector<40x128xi32>
    %442 = arith.extui %441 : vector<40x128xi1> to vector<40x128xi32>
    %443 = arith.sitofp %442 : vector<40x128xi32> to vector<40x128xf32>
    %444 = arith.truncf %443 : vector<40x128xf32> to vector<40x128xbf16>
    %445 = vector.extract_strided_slice %0 {offsets = [0, 15], sizes = [40, 1], strides = [1, 1]} : vector<40x21xi32> to vector<40x1xi32>
    %446 = vector.broadcast %445 : vector<40x1xi32> to vector<40x128xi32>
    %447 = arith.cmpi eq, %446, %1 : vector<40x128xi32>
    %448 = arith.extui %447 : vector<40x128xi1> to vector<40x128xi32>
    %449 = arith.sitofp %448 : vector<40x128xi32> to vector<40x128xf32>
    %450 = arith.truncf %449 : vector<40x128xf32> to vector<40x128xbf16>
    %451 = vector.extract_strided_slice %0 {offsets = [0, 16], sizes = [40, 1], strides = [1, 1]} : vector<40x21xi32> to vector<40x1xi32>
    %452 = vector.broadcast %451 : vector<40x1xi32> to vector<40x128xi32>
    %453 = arith.cmpi eq, %452, %1 : vector<40x128xi32>
    %454 = arith.extui %453 : vector<40x128xi1> to vector<40x128xi32>
    %455 = arith.sitofp %454 : vector<40x128xi32> to vector<40x128xf32>
    %456 = arith.truncf %455 : vector<40x128xf32> to vector<40x128xbf16>
    %457 = vector.extract_strided_slice %0 {offsets = [0, 17], sizes = [40, 1], strides = [1, 1]} : vector<40x21xi32> to vector<40x1xi32>
    %458 = vector.broadcast %457 : vector<40x1xi32> to vector<40x128xi32>
    %459 = arith.cmpi eq, %458, %1 : vector<40x128xi32>
    %460 = arith.extui %459 : vector<40x128xi1> to vector<40x128xi32>
    %461 = arith.sitofp %460 : vector<40x128xi32> to vector<40x128xf32>
    %462 = arith.truncf %461 : vector<40x128xf32> to vector<40x128xbf16>
    %463 = tpu.concatenate %438, %444, %450, %456, %462 in 1 : vector<40x128xbf16>, vector<40x128xbf16>, vector<40x128xbf16>, vector<40x128xbf16>, vector<40x128xbf16> -> vector<40x640xbf16>
    %cst_16 = arith.constant dense<0.000000e+00> : vector<40x128xf32>
    %464 = tpu.matmul %463, %2, %cst_16 {dimension_numbers = #tpu.dot_dimension_numbers<[1], [0], [0], [1], [0, 0, 1, 1], [], []>} : vector<40x640xbf16>, vector<640x128xbf16>, vector<40x128xf32> -> vector<40x128xf32>
    %465 = arith.maximumf %432, %464 : vector<40x128xf32>
    %466 = vector.extract_strided_slice %0 {offsets = [0, 14], sizes = [40, 1], strides = [1, 1]} : vector<40x21xi32> to vector<40x1xi32>
    %467 = vector.broadcast %466 : vector<40x1xi32> to vector<40x128xi32>
    %468 = arith.cmpi eq, %467, %1 : vector<40x128xi32>
    %469 = arith.extui %468 : vector<40x128xi1> to vector<40x128xi32>
    %470 = arith.sitofp %469 : vector<40x128xi32> to vector<40x128xf32>
    %471 = arith.truncf %470 : vector<40x128xf32> to vector<40x128xbf16>
    %472 = vector.extract_strided_slice %0 {offsets = [0, 15], sizes = [40, 1], strides = [1, 1]} : vector<40x21xi32> to vector<40x1xi32>
    %473 = vector.broadcast %472 : vector<40x1xi32> to vector<40x128xi32>
    %474 = arith.cmpi eq, %473, %1 : vector<40x128xi32>
    %475 = arith.extui %474 : vector<40x128xi1> to vector<40x128xi32>
    %476 = arith.sitofp %475 : vector<40x128xi32> to vector<40x128xf32>
    %477 = arith.truncf %476 : vector<40x128xf32> to vector<40x128xbf16>
    %478 = vector.extract_strided_slice %0 {offsets = [0, 16], sizes = [40, 1], strides = [1, 1]} : vector<40x21xi32> to vector<40x1xi32>
    %479 = vector.broadcast %478 : vector<40x1xi32> to vector<40x128xi32>
    %480 = arith.cmpi eq, %479, %1 : vector<40x128xi32>
    %481 = arith.extui %480 : vector<40x128xi1> to vector<40x128xi32>
    %482 = arith.sitofp %481 : vector<40x128xi32> to vector<40x128xf32>
    %483 = arith.truncf %482 : vector<40x128xf32> to vector<40x128xbf16>
    %484 = vector.extract_strided_slice %0 {offsets = [0, 17], sizes = [40, 1], strides = [1, 1]} : vector<40x21xi32> to vector<40x1xi32>
    %485 = vector.broadcast %484 : vector<40x1xi32> to vector<40x128xi32>
    %486 = arith.cmpi eq, %485, %1 : vector<40x128xi32>
    %487 = arith.extui %486 : vector<40x128xi1> to vector<40x128xi32>
    %488 = arith.sitofp %487 : vector<40x128xi32> to vector<40x128xf32>
    %489 = arith.truncf %488 : vector<40x128xf32> to vector<40x128xbf16>
    %490 = vector.extract_strided_slice %0 {offsets = [0, 18], sizes = [40, 1], strides = [1, 1]} : vector<40x21xi32> to vector<40x1xi32>
    %491 = vector.broadcast %490 : vector<40x1xi32> to vector<40x128xi32>
    %492 = arith.cmpi eq, %491, %1 : vector<40x128xi32>
    %493 = arith.extui %492 : vector<40x128xi1> to vector<40x128xi32>
    %494 = arith.sitofp %493 : vector<40x128xi32> to vector<40x128xf32>
    %495 = arith.truncf %494 : vector<40x128xf32> to vector<40x128xbf16>
    %496 = tpu.concatenate %471, %477, %483, %489, %495 in 1 : vector<40x128xbf16>, vector<40x128xbf16>, vector<40x128xbf16>, vector<40x128xbf16>, vector<40x128xbf16> -> vector<40x640xbf16>
    %cst_17 = arith.constant dense<0.000000e+00> : vector<40x128xf32>
    %497 = tpu.matmul %496, %2, %cst_17 {dimension_numbers = #tpu.dot_dimension_numbers<[1], [0], [0], [1], [0, 0, 1, 1], [], []>} : vector<40x640xbf16>, vector<640x128xbf16>, vector<40x128xf32> -> vector<40x128xf32>
    %498 = arith.maximumf %465, %497 : vector<40x128xf32>
    %499 = vector.extract_strided_slice %0 {offsets = [0, 15], sizes = [40, 1], strides = [1, 1]} : vector<40x21xi32> to vector<40x1xi32>
    %500 = vector.broadcast %499 : vector<40x1xi32> to vector<40x128xi32>
    %501 = arith.cmpi eq, %500, %1 : vector<40x128xi32>
    %502 = arith.extui %501 : vector<40x128xi1> to vector<40x128xi32>
    %503 = arith.sitofp %502 : vector<40x128xi32> to vector<40x128xf32>
    %504 = arith.truncf %503 : vector<40x128xf32> to vector<40x128xbf16>
    %505 = vector.extract_strided_slice %0 {offsets = [0, 16], sizes = [40, 1], strides = [1, 1]} : vector<40x21xi32> to vector<40x1xi32>
    %506 = vector.broadcast %505 : vector<40x1xi32> to vector<40x128xi32>
    %507 = arith.cmpi eq, %506, %1 : vector<40x128xi32>
    %508 = arith.extui %507 : vector<40x128xi1> to vector<40x128xi32>
    %509 = arith.sitofp %508 : vector<40x128xi32> to vector<40x128xf32>
    %510 = arith.truncf %509 : vector<40x128xf32> to vector<40x128xbf16>
    %511 = vector.extract_strided_slice %0 {offsets = [0, 17], sizes = [40, 1], strides = [1, 1]} : vector<40x21xi32> to vector<40x1xi32>
    %512 = vector.broadcast %511 : vector<40x1xi32> to vector<40x128xi32>
    %513 = arith.cmpi eq, %512, %1 : vector<40x128xi32>
    %514 = arith.extui %513 : vector<40x128xi1> to vector<40x128xi32>
    %515 = arith.sitofp %514 : vector<40x128xi32> to vector<40x128xf32>
    %516 = arith.truncf %515 : vector<40x128xf32> to vector<40x128xbf16>
    %517 = vector.extract_strided_slice %0 {offsets = [0, 18], sizes = [40, 1], strides = [1, 1]} : vector<40x21xi32> to vector<40x1xi32>
    %518 = vector.broadcast %517 : vector<40x1xi32> to vector<40x128xi32>
    %519 = arith.cmpi eq, %518, %1 : vector<40x128xi32>
    %520 = arith.extui %519 : vector<40x128xi1> to vector<40x128xi32>
    %521 = arith.sitofp %520 : vector<40x128xi32> to vector<40x128xf32>
    %522 = arith.truncf %521 : vector<40x128xf32> to vector<40x128xbf16>
    %523 = vector.extract_strided_slice %0 {offsets = [0, 19], sizes = [40, 1], strides = [1, 1]} : vector<40x21xi32> to vector<40x1xi32>
    %524 = vector.broadcast %523 : vector<40x1xi32> to vector<40x128xi32>
    %525 = arith.cmpi eq, %524, %1 : vector<40x128xi32>
    %526 = arith.extui %525 : vector<40x128xi1> to vector<40x128xi32>
    %527 = arith.sitofp %526 : vector<40x128xi32> to vector<40x128xf32>
    %528 = arith.truncf %527 : vector<40x128xf32> to vector<40x128xbf16>
    %529 = tpu.concatenate %504, %510, %516, %522, %528 in 1 : vector<40x128xbf16>, vector<40x128xbf16>, vector<40x128xbf16>, vector<40x128xbf16>, vector<40x128xbf16> -> vector<40x640xbf16>
    %cst_18 = arith.constant dense<0.000000e+00> : vector<40x128xf32>
    %530 = tpu.matmul %529, %2, %cst_18 {dimension_numbers = #tpu.dot_dimension_numbers<[1], [0], [0], [1], [0, 0, 1, 1], [], []>} : vector<40x640xbf16>, vector<640x128xbf16>, vector<40x128xf32> -> vector<40x128xf32>
    %531 = arith.maximumf %498, %530 : vector<40x128xf32>
    %532 = vector.extract_strided_slice %0 {offsets = [0, 16], sizes = [40, 1], strides = [1, 1]} : vector<40x21xi32> to vector<40x1xi32>
    %533 = vector.broadcast %532 : vector<40x1xi32> to vector<40x128xi32>
    %534 = arith.cmpi eq, %533, %1 : vector<40x128xi32>
    %535 = arith.extui %534 : vector<40x128xi1> to vector<40x128xi32>
    %536 = arith.sitofp %535 : vector<40x128xi32> to vector<40x128xf32>
    %537 = arith.truncf %536 : vector<40x128xf32> to vector<40x128xbf16>
    %538 = vector.extract_strided_slice %0 {offsets = [0, 17], sizes = [40, 1], strides = [1, 1]} : vector<40x21xi32> to vector<40x1xi32>
    %539 = vector.broadcast %538 : vector<40x1xi32> to vector<40x128xi32>
    %540 = arith.cmpi eq, %539, %1 : vector<40x128xi32>
    %541 = arith.extui %540 : vector<40x128xi1> to vector<40x128xi32>
    %542 = arith.sitofp %541 : vector<40x128xi32> to vector<40x128xf32>
    %543 = arith.truncf %542 : vector<40x128xf32> to vector<40x128xbf16>
    %544 = vector.extract_strided_slice %0 {offsets = [0, 18], sizes = [40, 1], strides = [1, 1]} : vector<40x21xi32> to vector<40x1xi32>
    %545 = vector.broadcast %544 : vector<40x1xi32> to vector<40x128xi32>
    %546 = arith.cmpi eq, %545, %1 : vector<40x128xi32>
    %547 = arith.extui %546 : vector<40x128xi1> to vector<40x128xi32>
    %548 = arith.sitofp %547 : vector<40x128xi32> to vector<40x128xf32>
    %549 = arith.truncf %548 : vector<40x128xf32> to vector<40x128xbf16>
    %550 = vector.extract_strided_slice %0 {offsets = [0, 19], sizes = [40, 1], strides = [1, 1]} : vector<40x21xi32> to vector<40x1xi32>
    %551 = vector.broadcast %550 : vector<40x1xi32> to vector<40x128xi32>
    %552 = arith.cmpi eq, %551, %1 : vector<40x128xi32>
    %553 = arith.extui %552 : vector<40x128xi1> to vector<40x128xi32>
    %554 = arith.sitofp %553 : vector<40x128xi32> to vector<40x128xf32>
    %555 = arith.truncf %554 : vector<40x128xf32> to vector<40x128xbf16>
    %556 = vector.extract_strided_slice %0 {offsets = [0, 20], sizes = [40, 1], strides = [1, 1]} : vector<40x21xi32> to vector<40x1xi32>
    %557 = vector.broadcast %556 : vector<40x1xi32> to vector<40x128xi32>
    %558 = arith.cmpi eq, %557, %1 : vector<40x128xi32>
    %559 = arith.extui %558 : vector<40x128xi1> to vector<40x128xi32>
    %560 = arith.sitofp %559 : vector<40x128xi32> to vector<40x128xf32>
    %561 = arith.truncf %560 : vector<40x128xf32> to vector<40x128xbf16>
    %562 = tpu.concatenate %537, %543, %549, %555, %561 in 1 : vector<40x128xbf16>, vector<40x128xbf16>, vector<40x128xbf16>, vector<40x128xbf16>, vector<40x128xbf16> -> vector<40x640xbf16>
    %cst_19 = arith.constant dense<0.000000e+00> : vector<40x128xf32>
    %563 = tpu.matmul %562, %2, %cst_19 {dimension_numbers = #tpu.dot_dimension_numbers<[1], [0], [0], [1], [0, 0, 1, 1], [], []>} : vector<40x640xbf16>, vector<640x128xbf16>, vector<40x128xf32> -> vector<40x128xf32>
    %564 = arith.maximumf %531, %563 : vector<40x128xf32>
    %c0_20 = arith.constant 0 : index
    %c0_21 = arith.constant 0 : index
    %565 = vector.load %arg3[%c0_20, %c0_21] : memref<1x128xf32, #tpu.memory_space<vmem>>, vector<1x128xf32>
    %566 = vector.broadcast %565 : vector<1x128xf32> to vector<40x128xf32>
    %567 = arith.addf %564, %566 : vector<40x128xf32>
    %cst_22 = arith.constant 0.000000e+00 : f32
    %568 = vector.broadcast %cst_22 : f32 to vector<40x128xf32>
    %569 = arith.maximumf %567, %568 : vector<40x128xf32>
    %570 = arith.truncf %569 : vector<40x128xf32> to vector<40x128xbf16>
    %c0_23 = arith.constant 0 : index
    %c0_24 = arith.constant 0 : index
    %571 = vector.load %arg4[%c0_23, %c0_24] : memref<128x256xbf16, #tpu.memory_space<vmem>>, vector<128x256xbf16>
    %cst_25 = arith.constant dense<0.000000e+00> : vector<40x256xf32>
    %572 = tpu.matmul %570, %571, %cst_25 {dimension_numbers = #tpu.dot_dimension_numbers<[1], [0], [0], [1], [0, 0, 1, 1], [], []>} : vector<40x128xbf16>, vector<128x256xbf16>, vector<40x256xf32> -> vector<40x256xf32>
    %c0_26 = arith.constant 0 : index
    %c0_27 = arith.constant 0 : index
    %573 = vector.load %arg5[%c0_26, %c0_27] : memref<1x256xf32, #tpu.memory_space<vmem>>, vector<1x256xf32>
    %574 = vector.broadcast %573 : vector<1x256xf32> to vector<40x256xf32>
    %575 = arith.addf %572, %574 : vector<40x256xf32>
    %576 = vector.extract_strided_slice %575 {offsets = [0, 0], sizes = [40, 128], strides = [1, 1]} : vector<40x256xf32> to vector<40x128xf32>
    %cst_28 = arith.constant 0.000000e+00 : f32
    %577 = vector.broadcast %cst_28 : f32 to vector<40x128xf32>
    %578 = arith.maximumf %576, %577 : vector<40x128xf32>
    %579 = vector.extract_strided_slice %575 {offsets = [0, 128], sizes = [40, 128], strides = [1, 1]} : vector<40x256xf32> to vector<40x128xf32>
    %580 = arith.negf %579 : vector<40x128xf32>
    %581 = math.exp %580 : vector<40x128xf32>
    %cst_29 = arith.constant 1.000000e+00 : f32
    %582 = vector.broadcast %cst_29 : f32 to vector<40x128xf32>
    %583 = arith.addf %582, %581 : vector<40x128xf32>
    %584 = arith.divf %582, %583 : vector<40x128xf32>
    %585 = arith.mulf %584, %578 : vector<40x128xf32>
    %cst_30 = arith.constant 1.000000e+00 : f32
    %586 = vector.broadcast %cst_30 : f32 to vector<40x128xf32>
    %587 = arith.subf %586, %584 : vector<40x128xf32>
    %588 = arith.mulf %587, %569 : vector<40x128xf32>
    %589 = arith.addf %585, %588 : vector<40x128xf32>
    %c0_31 = arith.constant 0 : index
    %c0_32 = arith.constant 0 : index
    %590 = vector.load %arg6[%c0_31, %c0_32] : memref<40x128xf32, #tpu.memory_space<vmem>>, vector<40x128xf32>
    tpu.vector_store %arg6[%c0_31, %c0_32], %589 {strides = array<i32>} : memref<40x128xf32, #tpu.memory_space<vmem>>, vector<40x128xf32>,
    return
  }
  func.func @transform_0(%arg0: i32) -> (i32, i32) {
    %c0_i32 = arith.constant 0 : i32
    %c0_i32_0 = arith.constant 0 : i32
    return %arg0, %c0_i32 : i32, i32
  }
  func.func @transform_1(%arg0: i32) -> (i32, i32) {
    %c0_i32 = arith.constant 0 : i32
    %c0_i32_0 = arith.constant 0 : i32
    %c0_i32_1 = arith.constant 0 : i32
    return %c0_i32, %c0_i32_0 : i32, i32
  }
  func.func @transform_2(%arg0: i32) -> (i32, i32) {
    %c0_i32 = arith.constant 0 : i32
    %c0_i32_0 = arith.constant 0 : i32
    %c0_i32_1 = arith.constant 0 : i32
    return %c0_i32, %c0_i32_0 : i32, i32
  }
  func.func @transform_3(%arg0: i32) -> (i32, i32) {
    %c0_i32 = arith.constant 0 : i32
    %c0_i32_0 = arith.constant 0 : i32
    %c0_i32_1 = arith.constant 0 : i32
    return %c0_i32, %c0_i32_0 : i32, i32
  }
  func.func @transform_4(%arg0: i32) -> (i32, i32) {
    %c0_i32 = arith.constant 0 : i32
    %c0_i32_0 = arith.constant 0 : i32
    %c0_i32_1 = arith.constant 0 : i32
    return %c0_i32, %c0_i32_0 : i32, i32
  }
  func.func @transform_5(%arg0: i32) -> (i32, i32) {
    %c0_i32 = arith.constant 0 : i32
    %c0_i32_0 = arith.constant 0 : i32
    return %arg0, %c0_i32 : i32, i32
  }
}

</mosaic_0001>

<llo_original>
// kernel: model_embeddings_forward.1
$region0: #{model_embeddings_forward.1}
  #allocation0 [shape = 'u32[]', space=smem, size = 0x4, offset = 0x4, fixed_abs, tag = 'smem constant byte address 0x4 - core index']
  #allocation1 [shape = 'u32[144,128]{1,0:T(1,128)}', space=vmem, size = 0x12000, scoped, tag = 'internal scratch']
  %s0 = inlined_call_operand.vmem [shape: s32[80,21], index: 0, kind: input, shape index: {}]
  %s1 = inlined_call_operand.vmem [shape: bf16[640,128], index: 1, kind: input, shape index: {}]
  %s2 = inlined_call_operand.vmem [shape: f32[1,128], index: 2, kind: input, shape index: {}]
  %s3 = inlined_call_operand.vmem [shape: bf16[128,256], index: 3, kind: input, shape index: {}]
  %s4 = inlined_call_operand.vmem [shape: f32[1,256], index: 4, kind: input, shape index: {}]
  %s5 = inlined_call_operand.vmem [shape: f32[80,128], index: 5, kind: output, shape index: {}]
  %s6 = sld [smem:[#allocation0]]
  $region53: #{model_embeddings_forward.1} parent=0
    _
  %s8 = ssub.s32 1, %s6
  %s9 = scalar_select 0, %s8, %s6
  loop: start=0, step=1, limit=4
  $region2: #{model_embeddings_forward.1} parent=0 // loop_pre_header
    _
  $region3: #{model_embeddings_forward.1} parent=0 // loop_header
    %s11 = sphi 0, %s15
    %p12 = scmp.ge.s32.totalorder %s11, 4
    %s21 = sphi 0, %s23
    %s24 = sphi 0, %s21
    %s25 = sphi 0, %s24
    %s41 = sphi 0, %s25
    %s45 = sphi 0, %s45
    %s47 = sphi 0, %s45
    %s48 = sphi 0, %s47
    %s62 = sphi 0, %s48
    %s66 = sphi 0, %s66
    %s68 = sphi 0, %s66
    %s69 = sphi 0, %s68
    %s83 = sphi 0, %s69
    %s87 = sphi 0, %s87
    %s89 = sphi 0, %s87
    %s90 = sphi 0, %s89
    %s104 = sphi 0, %s90
    %s108 = sphi 0, %s108
    %s110 = sphi 0, %s108
    %s111 = sphi 0, %s110
    %s125 = sphi 0, %s111
    %s131 = sphi 0, %s133
    %s134 = sphi 0, %s131
    %s135 = sphi 0, %s134
    %s151 = sphi 0, %s135
  $region4: #{model_embeddings_forward.1} parent=0 // loop_header_branch
    %14 = sbr.rel (%p12) target = $region8
  $region5: #{model_embeddings_forward.1} parent=0 // loop_body
    %s16 = ssub.s32 %s11, 1
    %s17 = ssub.s32 %s11, 2
    %s18 = sadd.s32 %s11, 1
    %s19 = ssub.s32 %s11, %s18
    %p20 = scmp.eq.s32.totalorder %s19, 0
    %s22 = sadd.s32 %s21, 1
    %s23 = scalar_select %p20, %s21, %s22
    %p26 = pneg %p20
    %p27 = scmp.eq.s32.totalorder %s11, 1
    %p28 = por %p26, %p27
    %p29 = scmp.ne.s32.totalorder %s21, %s24
    %p30 = scmp.eq.s32.totalorder %s11, 0
    %p31 = por %p29, %p30
    %p32 = scmp.ne.s32.totalorder %s21, %s24
    %p33 = scmp.eq.s32.totalorder %s16, 1
    %p34 = por %p32, %p33
    %p35 = scmp.ne.s32.totalorder %s24, %s25
    %p36 = scmp.eq.s32.totalorder %s16, 0
    %p37 = por %p35, %p36
    %p38 = scmp.ne.s32.totalorder %s24, %s25
    %p39 = scmp.eq.s32.totalorder %s17, 1
    %p40 = por %p38, %p39
    %p42 = scmp.ne.s32.totalorder %s25, %s41
    %p43 = scmp.eq.s32.totalorder %s17, 0
    %p44 = por %p42, %p43
    %s46 = sadd.s32 %s45, 1
    %p49 = scmp.eq.s32.totalorder %s11, 1
    %p50 = scmp.ne.s32.totalorder %s45, %s47
    %p51 = scmp.eq.s32.totalorder %s11, 0
    %p52 = por %p50, %p51
    %p53 = scmp.ne.s32.totalorder %s45, %s47
    %p54 = scmp.eq.s32.totalorder %s16, 1
    %p55 = por %p53, %p54
    %p56 = scmp.ne.s32.totalorder %s47, %s48
    %p57 = scmp.eq.s32.totalorder %s16, 0
    %p58 = por %p56, %p57
    %p59 = scmp.ne.s32.totalorder %s47, %s48
    %p60 = scmp.eq.s32.totalorder %s17, 1
    %p61 = por %p59, %p60
    %p63 = scmp.ne.s32.totalorder %s48, %s62
    %p64 = scmp.eq.s32.totalorder %s17, 0
    %p65 = por %p63, %p64
    %s67 = sadd.s32 %s66, 1
    %p70 = scmp.eq.s32.totalorder %s11, 1
    %p71 = scmp.ne.s32.totalorder %s66, %s68
    %p72 = scmp.eq.s32.totalorder %s11, 0
    %p73 = por %p71, %p72
    %p74 = scmp.ne.s32.totalorder %s66, %s68
    %p75 = scmp.eq.s32.totalorder %s16, 1
    %p76 = por %p74, %p75
    %p77 = scmp.ne.s32.totalorder %s68, %s69
    %p78 = scmp.eq.s32.totalorder %s16, 0
    %p79 = por %p77, %p78
    %p80 = scmp.ne.s32.totalorder %s68, %s69
    %p81 = scmp.eq.s32.totalorder %s17, 1
    %p82 = por %p80, %p81
    %p84 = scmp.ne.s32.totalorder %s69, %s83
    %p85 = scmp.eq.s32.totalorder %s17, 0
    %p86 = por %p84, %p85
    %s88 = sadd.s32 %s87, 1
    %p91 = scmp.eq.s32.totalorder %s11, 1
    %p92 = scmp.ne.s32.totalorder %s87, %s89
    %p93 = scmp.eq.s32.totalorder %s11, 0
    %p94 = por %p92, %p93
    %p95 = scmp.ne.s32.totalorder %s87, %s89
    %p96 = scmp.eq.s32.totalorder %s16, 1
    %p97 = por %p95, %p96
    %p98 = scmp.ne.s32.totalorder %s89, %s90
    %p99 = scmp.eq.s32.totalorder %s16, 0
    %p100 = por %p98, %p99
    %p101 = scmp.ne.s32.totalorder %s89, %s90
    %p102 = scmp.eq.s32.totalorder %s17, 1
    %p103 = por %p101, %p102
    %p105 = scmp.ne.s32.totalorder %s90, %s104
    %p106 = scmp.eq.s32.totalorder %s17, 0
    %p107 = por %p105, %p106
    %s109 = sadd.s32 %s108, 1
    %p112 = scmp.eq.s32.totalorder %s11, 1
    %p113 = scmp.ne.s32.totalorder %s108, %s110
    %p114 = scmp.eq.s32.totalorder %s11, 0
    %p115 = por %p113, %p114
    %p116 = scmp.ne.s32.totalorder %s108, %s110
    %p117 = scmp.eq.s32.totalorder %s16, 1
    %p118 = por %p116, %p117
    %p119 = scmp.ne.s32.totalorder %s110, %s111
    %p120 = scmp.eq.s32.totalorder %s16, 0
    %p121 = por %p119, %p120
    %p122 = scmp.ne.s32.totalorder %s110, %s111
    %p123 = scmp.eq.s32.totalorder %s17, 1
    %p124 = por %p122, %p123
    %p126 = scmp.ne.s32.totalorder %s111, %s125
    %p127 = scmp.eq.s32.totalorder %s17, 0
    %p128 = por %p126, %p127
    %s129 = ssub.s32 %s11, %s18
    %p130 = scmp.eq.s32.totalorder %s129, 0
    %s132 = sadd.s32 %s131, 1
    %s133 = scalar_select %p130, %s131, %s132
    %p136 = pneg %p130
    %p137 = scmp.eq.s32.totalorder %s11, 1
    %p138 = por %p136, %p137
    %p139 = scmp.ne.s32.totalorder %s131, %s134
    %p140 = scmp.eq.s32.totalorder %s11, 0
    %p141 = por %p139, %p140
    %p142 = scmp.ne.s32.totalorder %s131, %s134
    %p143 = scmp.eq.s32.totalorder %s16, 1
    %p144 = por %p142, %p143
    %p145 = scmp.ne.s32.totalorder %s134, %s135
    %p146 = scmp.eq.s32.totalorder %s16, 0
    %p147 = por %p145, %p146
    %p148 = scmp.ne.s32.totalorder %s134, %s135
    %p149 = scmp.eq.s32.totalorder %s17, 1
    %p150 = por %p148, %p149
    %p152 = scmp.ne.s32.totalorder %s135, %s151
    %p153 = scmp.eq.s32.totalorder %s17, 0
    %p154 = por %p152, %p153
    %p155 = scmp.le.s32.totalorder 1, %s11
    %p156 = scmp.lt.s32.totalorder %s11, 3
    %p157 = pnand %p155, %p156
    %p158 = pneg %p157
    // Predicated region
    $region9: #{model_embeddings_forward.1} parent=5 // pred_check
      _
    $region10: #{model_embeddings_forward.1} parent=5 // pred_check_branch
      %160 = sbr.rel (%p157) target = $region12
    $region11: #{model_embeddings_forward.1} parent=5 // pred_region
      %s161 = ssub.s32 %s11, 1
      // Predicated region
      $region13: #{model_embeddings_forward.1} parent=11 // pred_check
        %p162 = pneg %p58
      $region14: #{model_embeddings_forward.1} parent=11 // pred_check_branch
        %164 = sbr.rel (%p162) target = $region16
      $region15: #{model_embeddings_forward.1} parent=11 // pred_region
        _
      $region16: #{model_embeddings_forward.1} parent=11 // pred_fallthru
        _
      // Predicated region
      $region17: #{model_embeddings_forward.1} parent=11 // pred_check
        %p165 = pneg %p79
      $region18: #{model_embeddings_forward.1} parent=11 // pred_check_branch
        %167 = sbr.rel (%p165) target = $region20
      $region19: #{model_embeddings_forward.1} parent=11 // pred_region
        _
      $region20: #{model_embeddings_forward.1} parent=11 // pred_fallthru
        _
      // Predicated region
      $region21: #{model_embeddings_forward.1} parent=11 // pred_check
        %p168 = pneg %p100
      $region22: #{model_embeddings_forward.1} parent=11 // pred_check_branch
        %170 = sbr.rel (%p168) target = $region24
      $region23: #{model_embeddings_forward.1} parent=11 // pred_region
        _
      $region24: #{model_embeddings_forward.1} parent=11 // pred_fallthru
        _
      // Predicated region
      $region25: #{model_embeddings_forward.1} parent=11 // pred_check
        %p171 = pneg %p121
      $region26: #{model_embeddings_forward.1} parent=11 // pred_check_branch
        %173 = sbr.rel (%p171) target = $region28
      $region27: #{model_embeddings_forward.1} parent=11 // pred_region
        _
      $region28: #{model_embeddings_forward.1} parent=11 // pred_fallthru
        _
    $region12: #{model_embeddings_forward.1} parent=5 // pred_fallthru
      _
    %p174 = scmp.lt.s32.totalorder %s11, 2
    // Predicated region
    $region29: #{model_embeddings_forward.1} parent=5 // pred_check
      %p175 = pneg %p174
    $region30: #{model_embeddings_forward.1} parent=5 // pred_check_branch
      %177 = sbr.rel (%p175) target = $region32
    $region31: #{model_embeddings_forward.1} parent=5 // pred_region
      // Predicated region
      $region33: #{model_embeddings_forward.1} parent=31 // pred_check
        %p178 = pneg %p31
      $region34: #{model_embeddings_forward.1} parent=31 // pred_check_branch
        %180 = sbr.rel (%p178) target = $region36
      $region35: #{model_embeddings_forward.1} parent=31 // pred_region
        %s181 = smul.u32 5, %s11
        %p182 = scmp.lt.s32.totalorder %s181, 9
        %s183 = scalar_select %p182, %s181, 9
        %s184 = smul.addr %s183, 8
        %s185 = scalar_lea.vmem %s0, %s184
        %s186 = smul.u32 5, %s11
      $region36: #{model_embeddings_forward.1} parent=31 // pred_fallthru
        _
    $region32: #{model_embeddings_forward.1} parent=5 // pred_fallthru
      _
    %p187 = scmp.le.s32.totalorder 1, %s11
    %p188 = scmp.lt.s32.totalorder %s11, 3
    %p189 = pnand %p187, %p188
    %p190 = pneg %p189
    // Predicated region
    $region37: #{model_embeddings_forward.1} parent=5 // pred_check
      _
    $region38: #{model_embeddings_forward.1} parent=5 // pred_check_branch
      %192 = sbr.rel (%p189) target = $region40
    $region39: #{model_embeddings_forward.1} parent=5 // pred_region
      %s193 = ssub.s32 %s11, 1
      %s194 = smul.u32 5, %s16
      %p195 = scmp.lt.s32.totalorder %s194, 9
      %s196 = scalar_select %p195, %s194, 9
      %s197 = smul.addr %s196, 8
      %s198 = scalar_lea.vmem %s0, %s197
      %p199 = pneg %p37
      %p200 = pneg %p34
      %p201 = pneg %p58
      %p202 = pneg %p55
      %p203 = pneg %p79
      %p204 = pneg %p76
      %p205 = pneg %p100
      %p206 = pneg %p97
      %p207 = pneg %p121
      %p208 = pneg %p118
      %p209 = pneg %p147
      %p210 = pneg %p144
      %s211 = smul.u32 5, %s16
      %p212 = scmp.lt.s32.totalorder %s211, 9
      %s213 = scalar_select %p212, %s211, 9
      %s214 = smul.addr %s213, 8
      %s215 = scalar_lea.vmem %s5, %s214
      %s216 = smul.u32 5, %s16
      %p217 = scmp.lt.s32.totalorder %s216, 9
      %s218 = scalar_select %p217, %s216, 9
      %s219 = smul.addr %s218, 8
      %s220 = scalar_lea.vmem %s0, %s219
      %s221 = smul.u32 5, %s16
      %s222 = smul.u32 5, %s16
      %p223 = scmp.lt.s32.totalorder %s222, 9
      %s224 = scalar_select %p223, %s222, 9
      %s225 = smul.addr %s224, 8
      %s226 = scalar_lea.vmem %s5, %s225
      %s227 = smul.u32 5, %s16
      %v229 = vld [vmem:[%s220] sm:$0xff]
      %v230 = vld [vmem:[%s220 + $0x8] sm:$0xff]
      %v231 = vld [vmem:[%s220 + $0x10] sm:$0xff]
      %v232 = vld [vmem:[%s220 + $0x18] sm:$0xff]
      %v233 = vld [vmem:[%s220 + $0x20] sm:$0xff]
      %v234 = vlaneseq
      %v235 = vand.u32 %v234, 127
      %v236 = vld [vmem:[%s1] sm:$0xf]
      %v237 = vld [vmem:[%s1 + $0x4] sm:$0xf]
      %v238 = vld [vmem:[%s1 + $0x8] sm:$0xf]
      %v239 = vld [vmem:[%s1 + $0xc] sm:$0xf]
      %v240 = vld [vmem:[%s1 + $0x10] sm:$0xf]
      %v241 = vld [vmem:[%s1 + $0x14] sm:$0xf]
      %v242 = vld [vmem:[%s1 + $0x18] sm:$0xf]
      %v243 = vld [vmem:[%s1 + $0x1c] sm:$0xf]
      %v244 = vld [vmem:[%s1 + $0x20] sm:$0xf]
      %v245 = vld [vmem:[%s1 + $0x24] sm:$0xf]
      %v246 = vld [vmem:[%s1 + $0x28] sm:$0xf]
      %v247 = vld [vmem:[%s1 + $0x2c] sm:$0xf]
      %v248 = vld [vmem:[%s1 + $0x30] sm:$0xf]
      %v249 = vld [vmem:[%s1 + $0x34] sm:$0xf]
      %v250 = vld [vmem:[%s1 + $0x38] sm:$0xf]
      %v251 = vld [vmem:[%s1 + $0x3c] sm:$0xf]
      %v252 = vld [vmem:[%s1 + $0x40] sm:$0xf]
      %v253 = vld [vmem:[%s1 + $0x44] sm:$0xf]
      %v254 = vld [vmem:[%s1 + $0x48] sm:$0xf]
      %v255 = vld [vmem:[%s1 + $0x4c] sm:$0xf]
      %v256 = vld [vmem:[%s1 + $0x50] sm:$0xf]
      %v257 = vld [vmem:[%s1 + $0x54] sm:$0xf]
      %v258 = vld [vmem:[%s1 + $0x58] sm:$0xf]
      %v259 = vld [vmem:[%s1 + $0x5c] sm:$0xf]
      %v260 = vld [vmem:[%s1 + $0x60] sm:$0xf]
      %v261 = vld [vmem:[%s1 + $0x64] sm:$0xf]
      %v262 = vld [vmem:[%s1 + $0x68] sm:$0xf]
      %v263 = vld [vmem:[%s1 + $0x6c] sm:$0xf]
      %v264 = vld [vmem:[%s1 + $0x70] sm:$0xf]
      %v265 = vld [vmem:[%s1 + $0x74] sm:$0xf]
      %v266 = vld [vmem:[%s1 + $0x78] sm:$0xf]
      %v267 = vld [vmem:[%s1 + $0x7c] sm:$0xf]
      %v268 = vld [vmem:[%s1 + $0x80] sm:$0xf]
      %v269 = vld [vmem:[%s1 + $0x84] sm:$0xf]
      %v270 = vld [vmem:[%s1 + $0x88] sm:$0xf]
      %v271 = vld [vmem:[%s1 + $0x8c] sm:$0xf]
      %v272 = vld [vmem:[%s1 + $0x90] sm:$0xf]
      %v273 = vld [vmem:[%s1 + $0x94] sm:$0xf]
      %v274 = vld [vmem:[%s1 + $0x98] sm:$0xf]
      %v275 = vld [vmem:[%s1 + $0x9c] sm:$0xf]
      %v276 = vld [vmem:[%s1 + $0xa0] sm:$0xf]
      %v277 = vld [vmem:[%s1 + $0xa4] sm:$0xf]
      %v278 = vld [vmem:[%s1 + $0xa8] sm:$0xf]
      %v279 = vld [vmem:[%s1 + $0xac] sm:$0xf]
      %v280 = vld [vmem:[%s1 + $0xb0] sm:$0xf]
      %v281 = vld [vmem:[%s1 + $0xb4] sm:$0xf]
      %v282 = vld [vmem:[%s1 + $0xb8] sm:$0xf]
      %v283 = vld [vmem:[%s1 + $0xbc] sm:$0xf]
      %v284 = vld [vmem:[%s1 + $0xc0] sm:$0xf]
      %v285 = vld [vmem:[%s1 + $0xc4] sm:$0xf]
      %v286 = vld [vmem:[%s1 + $0xc8] sm:$0xf]
      %v287 = vld [vmem:[%s1 + $0xcc] sm:$0xf]
      %v288 = vld [vmem:[%s1 + $0xd0] sm:$0xf]
      %v289 = vld [vmem:[%s1 + $0xd4] sm:$0xf]
      %v290 = vld [vmem:[%s1 + $0xd8] sm:$0xf]
      %v291 = vld [vmem:[%s1 + $0xdc] sm:$0xf]
      %v292 = vld [vmem:[%s1 + $0xe0] sm:$0xf]
      %v293 = vld [vmem:[%s1 + $0xe4] sm:$0xf]
      %v294 = vld [vmem:[%s1 + $0xe8] sm:$0xf]
      %v295 = vld [vmem:[%s1 + $0xec] sm:$0xf]
      %v296 = vld [vmem:[%s1 + $0xf0] sm:$0xf]
      %v297 = vld [vmem:[%s1 + $0xf4] sm:$0xf]
      %v298 = vld [vmem:[%s1 + $0xf8] sm:$0xf]
      %v299 = vld [vmem:[%s1 + $0xfc] sm:$0xf]
      %v300 = vld [vmem:[%s1 + $0x100] sm:$0xf]
      %v301 = vld [vmem:[%s1 + $0x104] sm:$0xf]
      %v302 = vld [vmem:[%s1 + $0x108] sm:$0xf]
      %v303 = vld [vmem:[%s1 + $0x10c] sm:$0xf]
      %v304 = vld [vmem:[%s1 + $0x110] sm:$0xf]
      %v305 = vld [vmem:[%s1 + $0x114] sm:$0xf]
      %v306 = vld [vmem:[%s1 + $0x118] sm:$0xf]
      %v307 = vld [vmem:[%s1 + $0x11c] sm:$0xf]
      %v308 = vld [vmem:[%s1 + $0x120] sm:$0xf]
      %v309 = vld [vmem:[%s1 + $0x124] sm:$0xf]
      %v310 = vld [vmem:[%s1 + $0x128] sm:$0xf]
      %v311 = vld [vmem:[%s1 + $0x12c] sm:$0xf]
      %v312 = vld [vmem:[%s1 + $0x130] sm:$0xf]
      %v313 = vld [vmem:[%s1 + $0x134] sm:$0xf]
      %v314 = vld [vmem:[%s1 + $0x138] sm:$0xf]
      %v315 = vld [vmem:[%s1 + $0x13c] sm:$0xf]
      %316 = vset.pattern.permute.xlu0 0
      %317 = vperm.xlu0 %316, %v229
      %v318 = vpop.permute.xlu0 %317
      %319 = vset.pattern.permute.xlu0 0
      %320 = vperm.xlu0 %319, %v230
      %v321 = vpop.permute.xlu0 %320
      %322 = vset.pattern.permute.xlu0 0
      %323 = vperm.xlu0 %322, %v231
      %v324 = vpop.permute.xlu0 %323
      %325 = vset.pattern.permute.xlu0 0
      %326 = vperm.xlu0 %325, %v232
      %v327 = vpop.permute.xlu0 %326
      %328 = vset.pattern.permute.xlu0 0
      %329 = vperm.xlu0 %328, %v233
      %v330 = vpop.permute.xlu0 %329
      %vm331 = vcmp.eq.s32.totalorder %v318, %v235
      %vm332 = vcmp.eq.s32.totalorder %v321, %v235
      %vm333 = vcmp.eq.s32.totalorder %v324, %v235
      %vm334 = vcmp.eq.s32.totalorder %v327, %v235
      %vm335 = vcmp.eq.s32.totalorder %v330, %v235
      %v336 = vsel %vm331, 1, 0
      %v337 = vsel %vm332, 1, 0
      %v338 = vsel %vm333, 1, 0
      %v339 = vsel %vm334, 1, 0
      %v340 = vsel %vm335, 1, 0
      %v341 = vcvt.s32.f32 %v336
      %v342 = vcvt.s32.f32 %v337
      %v343 = vcvt.s32.f32 %v338
      %v344 = vcvt.s32.f32 %v339
      %v345 = vcvt.s32.f32 %v340
      %v346 = vpack.c.bf16 %v342, %v341
      %v347 = vpack.c.bf16 %v344, %v343
      %v348 = vpack.c.bf16 %v345, %v345
      %349 = vset.pattern.permute.xlu0 1
      %350 = vperm.xlu0 %349, %v229
      %v351 = vpop.permute.xlu0 %350
      %352 = vset.pattern.permute.xlu0 1
      %353 = vperm.xlu0 %352, %v230
      %v354 = vpop.permute.xlu0 %353
      %355 = vset.pattern.permute.xlu0 1
      %356 = vperm.xlu0 %355, %v231
      %v357 = vpop.permute.xlu0 %356
      %358 = vset.pattern.permute.xlu0 1
      %359 = vperm.xlu0 %358, %v232
      %v360 = vpop.permute.xlu0 %359
      %361 = vset.pattern.permute.xlu0 1
      %362 = vperm.xlu0 %361, %v233
      %v363 = vpop.permute.xlu0 %362
      %vm364 = vcmp.eq.s32.totalorder %v351, %v235
      %vm365 = vcmp.eq.s32.totalorder %v354, %v235
      %vm366 = vcmp.eq.s32.totalorder %v357, %v235
      %vm367 = vcmp.eq.s32.totalorder %v360, %v235
      %vm368 = vcmp.eq.s32.totalorder %v363, %v235
      %v369 = vsel %vm364, 1, 0
      %v370 = vsel %vm365, 1, 0
      %v371 = vsel %vm366, 1, 0
      %v372 = vsel %vm367, 1, 0
      %v373 = vsel %vm368, 1, 0
      %v374 = vcvt.s32.f32 %v369
      %v375 = vcvt.s32.f32 %v370
      %v376 = vcvt.s32.f32 %v371
      %v377 = vcvt.s32.f32 %v372
      %v378 = vcvt.s32.f32 %v373
      %v379 = vpack.c.bf16 %v375, %v374
      %v380 = vpack.c.bf16 %v377, %v376
      %v381 = vpack.c.bf16 %v378, %v378
      %382 = vset.pattern.permute.xlu0 2
      %383 = vperm.xlu0 %382, %v229
      %v384 = vpop.permute.xlu0 %383
      %385 = vset.pattern.permute.xlu0 2
      %386 = vperm.xlu0 %385, %v230
      %v387 = vpop.permute.xlu0 %386
      %388 = vset.pattern.permute.xlu0 2
      %389 = vperm.xlu0 %388, %v231
      %v390 = vpop.permute.xlu0 %389
      %391 = vset.pattern.permute.xlu0 2
      %392 = vperm.xlu0 %391, %v232
      %v393 = vpop.permute.xlu0 %392
      %394 = vset.pattern.permute.xlu0 2
      %395 = vperm.xlu0 %394, %v233
      %v396 = vpop.permute.xlu0 %395
      %vm397 = vcmp.eq.s32.totalorder %v384, %v235
      %vm398 = vcmp.eq.s32.totalorder %v387, %v235
      %vm399 = vcmp.eq.s32.totalorder %v390, %v235
      %vm400 = vcmp.eq.s32.totalorder %v393, %v235
      %vm401 = vcmp.eq.s32.totalorder %v396, %v235
      %v402 = vsel %vm397, 1, 0
      %v403 = vsel %vm398, 1, 0
      %v404 = vsel %vm399, 1, 0
      %v405 = vsel %vm400, 1, 0
      %v406 = vsel %vm401, 1, 0
      %v407 = vcvt.s32.f32 %v402
      %v408 = vcvt.s32.f32 %v403
      %v409 = vcvt.s32.f32 %v404
      %v410 = vcvt.s32.f32 %v405
      %v411 = vcvt.s32.f32 %v406
      %v412 = vpack.c.bf16 %v408, %v407
      %v413 = vpack.c.bf16 %v410, %v409
      %v414 = vpack.c.bf16 %v411, %v411
      %415 = vset.pattern.permute.xlu0 3
      %416 = vperm.xlu0 %415, %v229
      %v417 = vpop.permute.xlu0 %416
      %418 = vset.pattern.permute.xlu0 3
      %419 = vperm.xlu0 %418, %v230
      %v420 = vpop.permute.xlu0 %419
      %421 = vset.pattern.permute.xlu0 3
      %422 = vperm.xlu0 %421, %v231
      %v423 = vpop.permute.xlu0 %422
      %424 = vset.pattern.permute.xlu0 3
      %425 = vperm.xlu0 %424, %v232
      %v426 = vpop.permute.xlu0 %425
      %427 = vset.pattern.permute.xlu0 3
      %428 = vperm.xlu0 %427, %v233
      %v429 = vpop.permute.xlu0 %428
      %vm430 = vcmp.eq.s32.totalorder %v417, %v235
      %vm431 = vcmp.eq.s32.totalorder %v420, %v235
      %vm432 = vcmp.eq.s32.totalorder %v423, %v235
      %vm433 = vcmp.eq.s32.totalorder %v426, %v235
      %vm434 = vcmp.eq.s32.totalorder %v429, %v235
      %v435 = vsel %vm430, 1, 0
      %v436 = vsel %vm431, 1, 0
      %v437 = vsel %vm432, 1, 0
      %v438 = vsel %vm433, 1, 0
      %v439 = vsel %vm434, 1, 0
      %v440 = vcvt.s32.f32 %v435
      %v441 = vcvt.s32.f32 %v436
      %v442 = vcvt.s32.f32 %v437
      %v443 = vcvt.s32.f32 %v438
      %v444 = vcvt.s32.f32 %v439
      %v445 = vpack.c.bf16 %v441, %v440
      %v446 = vpack.c.bf16 %v443, %v442
      %v447 = vpack.c.bf16 %v444, %v444
      %448 = vset.pattern.permute.xlu0 4
      %449 = vperm.xlu0 %448, %v229
      %v450 = vpop.permute.xlu0 %449
      %451 = vset.pattern.permute.xlu0 4
      %452 = vperm.xlu0 %451, %v230
      %v453 = vpop.permute.xlu0 %452
      %454 = vset.pattern.permute.xlu0 4
      %455 = vperm.xlu0 %454, %v231
      %v456 = vpop.permute.xlu0 %455
      %457 = vset.pattern.permute.xlu0 4
      %458 = vperm.xlu0 %457, %v232
      %v459 = vpop.permute.xlu0 %458
      %460 = vset.pattern.permute.xlu0 4
      %461 = vperm.xlu0 %460, %v233
      %v462 = vpop.permute.xlu0 %461
      %vm463 = vcmp.eq.s32.totalorder %v450, %v235
      %vm464 = vcmp.eq.s32.totalorder %v453, %v235
      %vm465 = vcmp.eq.s32.totalorder %v456, %v235
      %vm466 = vcmp.eq.s32.totalorder %v459, %v235
      %vm467 = vcmp.eq.s32.totalorder %v462, %v235
      %v468 = vsel %vm463, 1, 0
      %v469 = vsel %vm464, 1, 0
      %v470 = vsel %vm465, 1, 0
      %v471 = vsel %vm466, 1, 0
      %v472 = vsel %vm467, 1, 0
      %v473 = vcvt.s32.f32 %v468
      %v474 = vcvt.s32.f32 %v469
      %v475 = vcvt.s32.f32 %v470
      %v476 = vcvt.s32.f32 %v471
      %v477 = vcvt.s32.f32 %v472
      %v478 = vpack.c.bf16 %v474, %v473
      %v479 = vpack.c.bf16 %v476, %v475
      %v480 = vpack.c.bf16 %v477, %v477
      %v561 = vunpack.c.l.b16 %v236
      %v562 = vunpack.c.l.b16 %v237
      %v563 = vunpack.c.l.b16 %v238
      %v564 = vunpack.c.l.b16 %v239
      %v565 = vunpack.c.l.b16 %v240
      %v566 = vunpack.c.l.b16 %v241
      %v567 = vunpack.c.l.b16 %v242
      %v568 = vunpack.c.l.b16 %v243
      %v569 = vunpack.c.l.b16 %v244
      %v570 = vunpack.c.l.b16 %v245
      %v571 = vunpack.c.l.b16 %v246
      %v572 = vunpack.c.l.b16 %v247
      %v573 = vunpack.c.l.b16 %v248
      %v574 = vunpack.c.l.b16 %v249
      %v575 = vunpack.c.l.b16 %v250
      %v576 = vunpack.c.l.b16 %v251
      %v577 = vunpack.c.l.b16 %v252
      %v578 = vunpack.c.l.b16 %v253
      %v579 = vunpack.c.l.b16 %v254
      %v580 = vunpack.c.l.b16 %v255
      %v581 = vunpack.c.l.b16 %v256
      %v582 = vunpack.c.l.b16 %v257
      %v583 = vunpack.c.l.b16 %v258
      %v584 = vunpack.c.l.b16 %v259
      %v585 = vunpack.c.l.b16 %v260
      %v586 = vunpack.c.l.b16 %v261
      %v587 = vunpack.c.l.b16 %v262
      %v588 = vunpack.c.l.b16 %v263
      %v589 = vunpack.c.l.b16 %v264
      %v590 = vunpack.c.l.b16 %v265
      %v591 = vunpack.c.l.b16 %v266
      %v592 = vunpack.c.l.b16 %v267
      %v593 = vunpack.c.l.b16 %v268
      %v594 = vunpack.c.l.b16 %v269
      %v595 = vunpack.c.l.b16 %v270
      %v596 = vunpack.c.l.b16 %v271
      %v597 = vunpack.c.l.b16 %v272
      %v598 = vunpack.c.l.b16 %v273
      %v599 = vunpack.c.l.b16 %v274
      %v600 = vunpack.c.l.b16 %v275
      %v601 = vunpack.c.l.b16 %v276
      %v602 = vunpack.c.l.b16 %v277
      %v603 = vunpack.c.l.b16 %v278
      %v604 = vunpack.c.l.b16 %v279
      %v605 = vunpack.c.l.b16 %v280
      %v606 = vunpack.c.l.b16 %v281
      %v607 = vunpack.c.l.b16 %v282
      %v608 = vunpack.c.l.b16 %v283
      %v609 = vunpack.c.l.b16 %v284
      %v610 = vunpack.c.l.b16 %v285
      %v611 = vunpack.c.l.b16 %v286
      %v612 = vunpack.c.l.b16 %v287
      %v613 = vunpack.c.l.b16 %v288
      %v614 = vunpack.c.l.b16 %v289
      %v615 = vunpack.c.l.b16 %v290
      %v616 = vunpack.c.l.b16 %v291
      %v617 = vunpack.c.l.b16 %v292
      %v618 = vunpack.c.l.b16 %v293
      %v619 = vunpack.c.l.b16 %v294
      %v620 = vunpack.c.l.b16 %v295
      %v621 = vunpack.c.l.b16 %v296
      %v622 = vunpack.c.l.b16 %v297
      %v623 = vunpack.c.l.b16 %v298
      %v624 = vunpack.c.l.b16 %v299
      %v625 = vunpack.c.l.b16 %v300
      %v626 = vunpack.c.l.b16 %v301
      %v627 = vunpack.c.l.b16 %v302
      %v628 = vunpack.c.l.b16 %v303
      %v629 = vunpack.c.l.b16 %v304
      %v630 = vunpack.c.l.b16 %v305
      %v631 = vunpack.c.l.b16 %v306
      %v632 = vunpack.c.l.b16 %v307
      %v633 = vunpack.c.l.b16 %v308
      %v634 = vunpack.c.l.b16 %v309
      %v635 = vunpack.c.l.b16 %v310
      %v636 = vunpack.c.l.b16 %v311
      %v637 = vunpack.c.l.b16 %v312
      %v638 = vunpack.c.l.b16 %v313
      %v639 = vunpack.c.l.b16 %v314
      %v640 = vunpack.c.l.b16 %v315
      %v641 = vpack.c.b16 %v562, %v561
      %v642 = vpack.c.b16 %v564, %v563
      %v643 = vpack.c.b16 %v566, %v565
      %v644 = vpack.c.b16 %v568, %v567
      %v645 = vpack.c.b16 %v570, %v569
      %v646 = vpack.c.b16 %v572, %v571
      %v647 = vpack.c.b16 %v574, %v573
      %v648 = vpack.c.b16 %v576, %v575
      %v649 = vpack.c.b16 %v578, %v577
      %v650 = vpack.c.b16 %v580, %v579
      %v651 = vpack.c.b16 %v582, %v581
      %v652 = vpack.c.b16 %v584, %v583
      %v653 = vpack.c.b16 %v586, %v585
      %v654 = vpack.c.b16 %v588, %v587
      %v655 = vpack.c.b16 %v590, %v589
      %v656 = vpack.c.b16 %v592, %v591
      %v657 = vpack.c.b16 %v594, %v593
      %v658 = vpack.c.b16 %v596, %v595
      %v659 = vpack.c.b16 %v598, %v597
      %v660 = vpack.c.b16 %v600, %v599
      %v661 = vpack.c.b16 %v602, %v601
      %v662 = vpack.c.b16 %v604, %v603
      %v663 = vpack.c.b16 %v606, %v605
      %v664 = vpack.c.b16 %v608, %v607
      %v665 = vpack.c.b16 %v610, %v609
      %v666 = vpack.c.b16 %v612, %v611
      %v667 = vpack.c.b16 %v614, %v613
      %v668 = vpack.c.b16 %v616, %v615
      %v669 = vpack.c.b16 %v618, %v617
      %v670 = vpack.c.b16 %v620, %v619
      %v671 = vpack.c.b16 %v622, %v621
      %v672 = vpack.c.b16 %v624, %v623
      %v673 = vpack.c.b16 %v626, %v625
      %v674 = vpack.c.b16 %v628, %v627
      %v675 = vpack.c.b16 %v630, %v629
      %v676 = vpack.c.b16 %v632, %v631
      %v677 = vpack.c.b16 %v634, %v633
      %v678 = vpack.c.b16 %v636, %v635
      %v679 = vpack.c.b16 %v638, %v637
      %v680 = vpack.c.b16 %v640, %v639
      %721 = vmatprep.subr.bf16.mxu0 0
      %722 = vmatpush1.bf16.msra.mxu0 %v641
      %723 = vmatprep.subr.bf16.mxu0 0
      %724 = vmatpush1.bf16.msra.mxu0 %v642
      %725 = vmatprep.subr.bf16.mxu0 0
      %726 = vmatpush1.bf16.msra.mxu0 %v643
      %727 = vmatprep.subr.bf16.mxu0 0
      %728 = vmatpush1.bf16.msra.mxu0 %v644
      %729 = vmatprep.subr.bf16.mxu0 0
      %730 = vmatpush1.bf16.msra.mxu0 %v645
      %731 = vmatprep.subr.bf16.mxu0 0
      %732 = vmatpush1.bf16.msra.mxu0 %v646
      %733 = vmatprep.subr.bf16.mxu0 0
      %734 = vmatpush1.bf16.msra.mxu0 %v647
      %735 = vmatprep.subr.bf16.mxu0 0
      %736 = vmatpush1.bf16.msra.mxu0 %v648
      %737 = vmatprep.subr.bf16.mxu0 0
      %738 = vmatpush1.bf16.msra.mxu0 %v649
      %739 = vmatprep.subr.bf16.mxu0 0
      %740 = vmatpush1.bf16.msra.mxu0 %v650
      %741 = vmatprep.subr.bf16.mxu0 0
      %742 = vmatpush1.bf16.msra.mxu0 %v651
      %743 = vmatprep.subr.bf16.mxu0 0
      %744 = vmatpush1.bf16.msra.mxu0 %v652
      %745 = vmatprep.subr.bf16.mxu0 0
      %746 = vmatpush1.bf16.msra.mxu0 %v653
      %747 = vmatprep.subr.bf16.mxu0 0
      %748 = vmatpush1.bf16.msra.mxu0 %v654
      %749 = vmatprep.subr.bf16.mxu0 0
      %750 = vmatpush1.bf16.msra.mxu0 %v655
      %751 = vmatprep.subr.bf16.mxu0 0
      %752 = vmatpush1.bf16.msra.mxu0 %v656
      %753 = vmatprep.mubr.bf16.mxu0 %v379
      %754 = vmatmul.mubr.bf16.gmra.mrb[0].mxu0 %v346
      %v755 = vpop.f32.mrb[0].mxu0
      %v756 = vadd.f32 0.0, %v755
      %v757 = vpop.f32.mrb[0].mxu0
      %v758 = vpop.f32.mrb[0].mxu0
      %v759 = vadd.f32 0.0, %v758
      %v760 = vpop.f32.mrb[0].mxu0
      %761 = vmatprep.mubr.bf16.mxu0 %v380
      %762 = vmatmul.mubr.bf16.gmra.mrb[0].mxu0 %v347
      %v763 = vpop.f32.mrb[0].mxu0
      %v764 = vadd.f32 0.0, %v763
      %v765 = vpop.f32.mrb[0].mxu0
      %v766 = vpop.f32.mrb[0].mxu0
      %v767 = vadd.f32 0.0, %v766
      %v768 = vpop.f32.mrb[0].mxu0
      %769 = vmatprep.mubr.bf16.mxu0 %v381
      %770 = vmatmul.mubr.bf16.gmra.mrb[0].mxu0 %v348
      %v771 = vpop.f32.mrb[0].mxu0
      %v772 = vadd.f32 0.0, %v771
      %v773 = vpop.f32.mrb[0].mxu0
      %v774 = vpop.f32.mrb[0].mxu0
      %v775 = vpop.f32.mrb[0].mxu0
      %776 = vdwg.mxu0
      %777 = vmatprep.subr.bf16.mxu0 0
      %778 = vmatpush1.bf16.msra.mxu0 %v657
      %779 = vmatprep.subr.bf16.mxu0 0
      %780 = vmatpush1.bf16.msra.mxu0 %v658
      %781 = vmatprep.subr.bf16.mxu0 0
      %782 = vmatpush1.bf16.msra.mxu0 %v659
      %783 = vmatprep.subr.bf16.mxu0 0
      %784 = vmatpush1.bf16.msra.mxu0 %v660
      %785 = vmatprep.subr.bf16.mxu0 0
      %786 = vmatpush1.bf16.msra.mxu0 %v661
      %787 = vmatprep.subr.bf16.mxu0 0
      %788 = vmatpush1.bf16.msra.mxu0 %v662
      %789 = vmatprep.subr.bf16.mxu0 0
      %790 = vmatpush1.bf16.msra.mxu0 %v663
      %791 = vmatprep.subr.bf16.mxu0 0
      %792 = vmatpush1.bf16.msra.mxu0 %v664
      %793 = vmatprep.subr.bf16.mxu0 0
      %794 = vmatpush1.bf16.msra.mxu0 %v665
      %795 = vmatprep.subr.bf16.mxu0 0
      %796 = vmatpush1.bf16.msra.mxu0 %v666
      %797 = vmatprep.subr.bf16.mxu0 0
      %798 = vmatpush1.bf16.msra.mxu0 %v667
      %799 = vmatprep.subr.bf16.mxu0 0
      %800 = vmatpush1.bf16.msra.mxu0 %v668
      %801 = vmatprep.subr.bf16.mxu0 0
      %802 = vmatpush1.bf16.msra.mxu0 %v669
      %803 = vmatprep.subr.bf16.mxu0 0
      %804 = vmatpush1.bf16.msra.mxu0 %v670
      %805 = vmatprep.subr.bf16.mxu0 0
      %806 = vmatpush1.bf16.msra.mxu0 %v671
      %807 = vmatprep.subr.bf16.mxu0 0
      %808 = vmatpush1.bf16.msra.mxu0 %v672
      %809 = vmatprep.mubr.bf16.mxu0 %v445
      %810 = vmatmul.mubr.bf16.gmra.mrb[0].mxu0 %v412
      %v811 = vpop.f32.mrb[0].mxu0
      %v812 = vadd.f32 %v756, %v811
      %v813 = vpop.f32.mrb[0].mxu0
      %v814 = vpop.f32.mrb[0].mxu0
      %v815 = vadd.f32 %v759, %v814
      %v816 = vpop.f32.mrb[0].mxu0
      %817 = vmatprep.mubr.bf16.mxu0 %v446
      %818 = vmatmul.mubr.bf16.gmra.mrb[0].mxu0 %v413
      %v819 = vpop.f32.mrb[0].mxu0
      %v820 = vadd.f32 %v764, %v819
      %v821 = vpop.f32.mrb[0].mxu0
      %v822 = vpop.f32.mrb[0].mxu0
      %v823 = vadd.f32 %v767, %v822
      %v824 = vpop.f32.mrb[0].mxu0
      %825 = vmatprep.mubr.bf16.mxu0 %v447
      %826 = vmatmul.mubr.bf16.gmra.mrb[0].mxu0 %v414
      %v827 = vpop.f32.mrb[0].mxu0
      %v828 = vadd.f32 %v772, %v827
      %v829 = vpop.f32.mrb[0].mxu0
      %v830 = vpop.f32.mrb[0].mxu0
      %v831 = vpop.f32.mrb[0].mxu0
      %832 = vdwg.mxu0
      %833 = vmatprep.subr.bf16.mxu0 0
      %834 = vmatpush1.bf16.msra.mxu0 %v673
      %835 = vmatprep.subr.bf16.mxu0 0
      %836 = vmatpush1.bf16.msra.mxu0 %v674
      %837 = vmatprep.subr.bf16.mxu0 0
      %838 = vmatpush1.bf16.msra.mxu0 %v675
      %839 = vmatprep.subr.bf16.mxu0 0
      %840 = vmatpush1.bf16.msra.mxu0 %v676
      %841 = vmatprep.subr.bf16.mxu0 0
      %842 = vmatpush1.bf16.msra.mxu0 %v677
      %843 = vmatprep.subr.bf16.mxu0 0
      %844 = vmatpush1.bf16.msra.mxu0 %v678
      %845 = vmatprep.subr.bf16.mxu0 0
      %846 = vmatpush1.bf16.msra.mxu0 %v679
      %847 = vmatprep.subr.bf16.mxu0 0
      %848 = vmatpush1.bf16.msra.mxu0 %v680
      %849 = vmatprep.subr.bf16.mxu0 0
      %850 = vmatpush1.bf16.msra.mxu0 0
      %851 = vmatprep.subr.bf16.mxu0 0
      %852 = vmatpush1.bf16.msra.mxu0 0
      %853 = vmatprep.subr.bf16.mxu0 0
      %854 = vmatpush1.bf16.msra.mxu0 0
      %855 = vmatprep.subr.bf16.mxu0 0
      %856 = vmatpush1.bf16.msra.mxu0 0
      %857 = vmatprep.subr.bf16.mxu0 0
      %858 = vmatpush1.bf16.msra.mxu0 0
      %859 = vmatprep.subr.bf16.mxu0 0
      %860 = vmatpush1.bf16.msra.mxu0 0
      %861 = vmatprep.subr.bf16.mxu0 0
      %862 = vmatpush1.bf16.msra.mxu0 0
      %863 = vmatprep.subr.bf16.mxu0 0
      %864 = vmatpush1.bf16.msra.mxu0 0
      %865 = vmatprep.mubr.bf16.mxu0 0
      %866 = vmatmul.mubr.bf16.gmra.mrb[0].mxu0 %v478
      %v867 = vpop.f32.mrb[0].mxu0
      %v868 = vadd.f32 %v812, %v867
      %v869 = vpop.f32.mrb[0].mxu0
      %v870 = vpop.f32.mrb[0].mxu0
      %v871 = vadd.f32 %v815, %v870
      %v872 = vpop.f32.mrb[0].mxu0
      %873 = vmatprep.mubr.bf16.mxu0 0
      %874 = vmatmul.mubr.bf16.gmra.mrb[0].mxu0 %v479
      %v875 = vpop.f32.mrb[0].mxu0
      %v876 = vadd.f32 %v820, %v875
      %v877 = vpop.f32.mrb[0].mxu0
      %v878 = vpop.f32.mrb[0].mxu0
      %v879 = vadd.f32 %v823, %v878
      %v880 = vpop.f32.mrb[0].mxu0
      %881 = vmatprep.mubr.bf16.mxu0 0
      %882 = vmatmul.mubr.bf16.gmra.mrb[0].mxu0 %v480
      %v883 = vpop.f32.mrb[0].mxu0
      %v884 = vadd.f32 %v828, %v883
      %v885 = vpop.f32.mrb[0].mxu0
      %v886 = vpop.f32.mrb[0].mxu0
      %v887 = vpop.f32.mrb[0].mxu0
      %888 = vdwg.mxu0
      %889 = vset.pattern.permute.xlu0 5
      %890 = vperm.xlu0 %889, %v229
      %v891 = vpop.permute.xlu0 %890
      %892 = vset.pattern.permute.xlu0 5
      %893 = vperm.xlu0 %892, %v230
      %v894 = vpop.permute.xlu0 %893
      %895 = vset.pattern.permute.xlu0 5
      %896 = vperm.xlu0 %895, %v231
      %v897 = vpop.permute.xlu0 %896
      %898 = vset.pattern.permute.xlu0 5
      %899 = vperm.xlu0 %898, %v232
      %v900 = vpop.permute.xlu0 %899
      %901 = vset.pattern.permute.xlu0 5
      %902 = vperm.xlu0 %901, %v233
      %v903 = vpop.permute.xlu0 %902
      %vm904 = vcmp.eq.s32.totalorder %v891, %v235
      %vm905 = vcmp.eq.s32.totalorder %v894, %v235
      %vm906 = vcmp.eq.s32.totalorder %v897, %v235
      %vm907 = vcmp.eq.s32.totalorder %v900, %v235
      %vm908 = vcmp.eq.s32.totalorder %v903, %v235
      %v909 = vsel %vm904, 1, 0
      %v910 = vsel %vm905, 1, 0
      %v911 = vsel %vm906, 1, 0
      %v912 = vsel %vm907, 1, 0
      %v913 = vsel %vm908, 1, 0
      %v914 = vcvt.s32.f32 %v909
      %v915 = vcvt.s32.f32 %v910
      %v916 = vcvt.s32.f32 %v911
      %v917 = vcvt.s32.f32 %v912
      %v918 = vcvt.s32.f32 %v913
      %v919 = vpack.c.bf16 %v915, %v914
      %v920 = vpack.c.bf16 %v917, %v916
      %v921 = vpack.c.bf16 %v918, %v918
      %922 = vmatprep.subr.bf16.mxu0 0
      %923 = vmatpush1.bf16.msra.mxu0 %v641
      %924 = vmatprep.subr.bf16.mxu0 0
      %925 = vmatpush1.bf16.msra.mxu0 %v642
      %926 = vmatprep.subr.bf16.mxu0 0
      %927 = vmatpush1.bf16.msra.mxu0 %v643
      %928 = vmatprep.subr.bf16.mxu0 0
      %929 = vmatpush1.bf16.msra.mxu0 %v644
      %930 = vmatprep.subr.bf16.mxu0 0
      %931 = vmatpush1.bf16.msra.mxu0 %v645
      %932 = vmatprep.subr.bf16.mxu0 0
      %933 = vmatpush1.bf16.msra.mxu0 %v646
      %934 = vmatprep.subr.bf16.mxu0 0
      %935 = vmatpush1.bf16.msra.mxu0 %v647
      %936 = vmatprep.subr.bf16.mxu0 0
      %937 = vmatpush1.bf16.msra.mxu0 %v648
      %938 = vmatprep.subr.bf16.mxu0 0
      %939 = vmatpush1.bf16.msra.mxu0 %v649
      %940 = vmatprep.subr.bf16.mxu0 0
      %941 = vmatpush1.bf16.msra.mxu0 %v650
      %942 = vmatprep.subr.bf16.mxu0 0
      %943 = vmatpush1.bf16.msra.mxu0 %v651
      %944 = vmatprep.subr.bf16.mxu0 0
      %945 = vmatpush1.bf16.msra.mxu0 %v652
      %946 = vmatprep.subr.bf16.mxu0 0
      %947 = vmatpush1.bf16.msra.mxu0 %v653
      %948 = vmatprep.subr.bf16.mxu0 0
      %949 = vmatpush1.bf16.msra.mxu0 %v654
      %950 = vmatprep.subr.bf16.mxu0 0
      %951 = vmatpush1.bf16.msra.mxu0 %v655
      %952 = vmatprep.subr.bf16.mxu0 0
      %953 = vmatpush1.bf16.msra.mxu0 %v656
      %954 = vmatprep.mubr.bf16.mxu0 %v412
      %955 = vmatmul.mubr.bf16.gmra.mrb[0].mxu0 %v379
      %v956 = vpop.f32.mrb[0].mxu0
      %v957 = vadd.f32 0.0, %v956
      %v958 = vpop.f32.mrb[0].mxu0
      %v959 = vpop.f32.mrb[0].mxu0
      %v960 = vadd.f32 0.0, %v959
      %v961 = vpop.f32.mrb[0].mxu0
      %962 = vmatprep.mubr.bf16.mxu0 %v413
      %963 = vmatmul.mubr.bf16.gmra.mrb[0].mxu0 %v380
      %v964 = vpop.f32.mrb[0].mxu0
      %v965 = vadd.f32 0.0, %v964
      %v966 = vpop.f32.mrb[0].mxu0
      %v967 = vpop.f32.mrb[0].mxu0
      %v968 = vadd.f32 0.0, %v967
      %v969 = vpop.f32.mrb[0].mxu0
      %970 = vmatprep.mubr.bf16.mxu0 %v414
      %971 = vmatmul.mubr.bf16.gmra.mrb[0].mxu0 %v381
      %v972 = vpop.f32.mrb[0].mxu0
      %v973 = vadd.f32 0.0, %v972
      %v974 = vpop.f32.mrb[0].mxu0
      %v975 = vpop.f32.mrb[0].mxu0
      %v976 = vpop.f32.mrb[0].mxu0
      %977 = vdwg.mxu0
      %978 = vmatprep.subr.bf16.mxu0 0
      %979 = vmatpush1.bf16.msra.mxu0 %v657
      %980 = vmatprep.subr.bf16.mxu0 0
      %981 = vmatpush1.bf16.msra.mxu0 %v658
      %982 = vmatprep.subr.bf16.mxu0 0
      %983 = vmatpush1.bf16.msra.mxu0 %v659
      %984 = vmatprep.subr.bf16.mxu0 0
      %985 = vmatpush1.bf16.msra.mxu0 %v660
      %986 = vmatprep.subr.bf16.mxu0 0
      %987 = vmatpush1.bf16.msra.mxu0 %v661
      %988 = vmatprep.subr.bf16.mxu0 0
      %989 = vmatpush1.bf16.msra.mxu0 %v662
      %990 = vmatprep.subr.bf16.mxu0 0
      %991 = vmatpush1.bf16.msra.mxu0 %v663
      %992 = vmatprep.subr.bf16.mxu0 0
      %993 = vmatpush1.bf16.msra.mxu0 %v664
      %994 = vmatprep.subr.bf16.mxu0 0
      %995 = vmatpush1.bf16.msra.mxu0 %v665
      %996 = vmatprep.subr.bf16.mxu0 0
      %997 = vmatpush1.bf16.msra.mxu0 %v666
      %998 = vmatprep.subr.bf16.mxu0 0
      %999 = vmatpush1.bf16.msra.mxu0 %v667
      %1000 = vmatprep.subr.bf16.mxu0 0
      %1001 = vmatpush1.bf16.msra.mxu0 %v668
      %1002 = vmatprep.subr.bf16.mxu0 0
      %1003 = vmatpush1.bf16.msra.mxu0 %v669
      %1004 = vmatprep.subr.bf16.mxu0 0
      %1005 = vmatpush1.bf16.msra.mxu0 %v670
      %1006 = vmatprep.subr.bf16.mxu0 0
      %1007 = vmatpush1.bf16.msra.mxu0 %v671
      %1008 = vmatprep.subr.bf16.mxu0 0
      %1009 = vmatpush1.bf16.msra.mxu0 %v672
      %1010 = vmatprep.mubr.bf16.mxu0 %v478
      %1011 = vmatmul.mubr.bf16.gmra.mrb[0].mxu0 %v445
      %v1012 = vpop.f32.mrb[0].mxu0
      %v1013 = vadd.f32 %v957, %v1012
      %v1014 = vpop.f32.mrb[0].mxu0
      %v1015 = vpop.f32.mrb[0].mxu0
      %v1016 = vadd.f32 %v960, %v1015
      %v1017 = vpop.f32.mrb[0].mxu0
      %1018 = vmatprep.mubr.bf16.mxu0 %v479
      %1019 = vmatmul.mubr.bf16.gmra.mrb[0].mxu0 %v446
      %v1020 = vpop.f32.mrb[0].mxu0
      %v1021 = vadd.f32 %v965, %v1020
      %v1022 = vpop.f32.mrb[0].mxu0
      %v1023 = vpop.f32.mrb[0].mxu0
      %v1024 = vadd.f32 %v968, %v1023
      %v1025 = vpop.f32.mrb[0].mxu0
      %1026 = vmatprep.mubr.bf16.mxu0 %v480
      %1027 = vmatmul.mubr.bf16.gmra.mrb[0].mxu0 %v447
      %v1028 = vpop.f32.mrb[0].mxu0
      %v1029 = vadd.f32 %v973, %v1028
      %v1030 = vpop.f32.mrb[0].mxu0
      %v1031 = vpop.f32.mrb[0].mxu0
      %v1032 = vpop.f32.mrb[0].mxu0
      %1033 = vdwg.mxu0
      %1034 = vmatprep.subr.bf16.mxu0 0
      %1035 = vmatpush1.bf16.msra.mxu0 %v673
      %1036 = vmatprep.subr.bf16.mxu0 0
      %1037 = vmatpush1.bf16.msra.mxu0 %v674
      %1038 = vmatprep.subr.bf16.mxu0 0
      %1039 = vmatpush1.bf16.msra.mxu0 %v675
      %1040 = vmatprep.subr.bf16.mxu0 0
      %1041 = vmatpush1.bf16.msra.mxu0 %v676
      %1042 = vmatprep.subr.bf16.mxu0 0
      %1043 = vmatpush1.bf16.msra.mxu0 %v677
      %1044 = vmatprep.subr.bf16.mxu0 0
      %1045 = vmatpush1.bf16.msra.mxu0 %v678
      %1046 = vmatprep.subr.bf16.mxu0 0
      %1047 = vmatpush1.bf16.msra.mxu0 %v679
      %1048 = vmatprep.subr.bf16.mxu0 0
      %1049 = vmatpush1.bf16.msra.mxu0 %v680
      %1050 = vmatprep.subr.bf16.mxu0 0
      %1051 = vmatpush1.bf16.msra.mxu0 0
      %1052 = vmatprep.subr.bf16.mxu0 0
      %1053 = vmatpush1.bf16.msra.mxu0 0
      %1054 = vmatprep.subr.bf16.mxu0 0
      %1055 = vmatpush1.bf16.msra.mxu0 0
      %1056 = vmatprep.subr.bf16.mxu0 0
      %1057 = vmatpush1.bf16.msra.mxu0 0
      %1058 = vmatprep.subr.bf16.mxu0 0
      %1059 = vmatpush1.bf16.msra.mxu0 0
      %1060 = vmatprep.subr.bf16.mxu0 0
      %1061 = vmatpush1.bf16.msra.mxu0 0
      %1062 = vmatprep.subr.bf16.mxu0 0
      %1063 = vmatpush1.bf16.msra.mxu0 0
      %1064 = vmatprep.subr.bf16.mxu0 0
      %1065 = vmatpush1.bf16.msra.mxu0 0
      %1066 = vmatprep.mubr.bf16.mxu0 0
      %1067 = vmatmul.mubr.bf16.gmra.mrb[0].mxu0 %v919
      %v1068 = vpop.f32.mrb[0].mxu0
      %v1069 = vadd.f32 %v1013, %v1068
      %v1070 = vpop.f32.mrb[0].mxu0
      %v1071 = vpop.f32.mrb[0].mxu0
      %v1072 = vadd.f32 %v1016, %v1071
      %v1073 = vpop.f32.mrb[0].mxu0
      %1074 = vmatprep.mubr.bf16.mxu0 0
      %1075 = vmatmul.mubr.bf16.gmra.mrb[0].mxu0 %v920
      %v1076 = vpop.f32.mrb[0].mxu0
      %v1077 = vadd.f32 %v1021, %v1076
      %v1078 = vpop.f32.mrb[0].mxu0
      %v1079 = vpop.f32.mrb[0].mxu0
      %v1080 = vadd.f32 %v1024, %v1079
      %v1081 = vpop.f32.mrb[0].mxu0
      %1082 = vmatprep.mubr.bf16.mxu0 0
      %1083 = vmatmul.mubr.bf16.gmra.mrb[0].mxu0 %v921
      %v1084 = vpop.f32.mrb[0].mxu0
      %v1085 = vadd.f32 %v1029, %v1084
      %v1086 = vpop.f32.mrb[0].mxu0
      %v1087 = vpop.f32.mrb[0].mxu0
      %v1088 = vpop.f32.mrb[0].mxu0
      %1089 = vdwg.mxu0
      %v1090 = vmax.f32 %v868, %v1069
      %v1091 = vmax.f32 %v871, %v1072
      %v1092 = vmax.f32 %v876, %v1077
      %v1093 = vmax.f32 %v879, %v1080
      %v1094 = vmax.f32 %v884, %v1085
      %1095 = vset.pattern.permute.xlu0 6
      %1096 = vperm.xlu0 %1095, %v229
      %v1097 = vpop.permute.xlu0 %1096
      %1098 = vset.pattern.permute.xlu0 6
      %1099 = vperm.xlu0 %1098, %v230
      %v1100 = vpop.permute.xlu0 %1099
      %1101 = vset.pattern.permute.xlu0 6
      %1102 = vperm.xlu0 %1101, %v231
      %v1103 = vpop.permute.xlu0 %1102
      %1104 = vset.pattern.permute.xlu0 6
      %1105 = vperm.xlu0 %1104, %v232
      %v1106 = vpop.permute.xlu0 %1105
      %1107 = vset.pattern.permute.xlu0 6
      %1108 = vperm.xlu0 %1107, %v233
      %v1109 = vpop.permute.xlu0 %1108
      %vm1110 = vcmp.eq.s32.totalorder %v1097, %v235
      %vm1111 = vcmp.eq.s32.totalorder %v1100, %v235
      %vm1112 = vcmp.eq.s32.totalorder %v1103, %v235
      %vm1113 = vcmp.eq.s32.totalorder %v1106, %v235
      %vm1114 = vcmp.eq.s32.totalorder %v1109, %v235
      %v1115 = vsel %vm1110, 1, 0
      %v1116 = vsel %vm1111, 1, 0
      %v1117 = vsel %vm1112, 1, 0
      %v1118 = vsel %vm1113, 1, 0
      %v1119 = vsel %vm1114, 1, 0
      %v1120 = vcvt.s32.f32 %v1115
      %v1121 = vcvt.s32.f32 %v1116
      %v1122 = vcvt.s32.f32 %v1117
      %v1123 = vcvt.s32.f32 %v1118
      %v1124 = vcvt.s32.f32 %v1119
      %v1125 = vpack.c.bf16 %v1121, %v1120
      %v1126 = vpack.c.bf16 %v1123, %v1122
      %v1127 = vpack.c.bf16 %v1124, %v1124
      %1128 = vmatprep.subr.bf16.mxu0 0
      %1129 = vmatpush1.bf16.msra.mxu0 %v641
      %1130 = vmatprep.subr.bf16.mxu0 0
      %1131 = vmatpush1.bf16.msra.mxu0 %v642
      %1132 = vmatprep.subr.bf16.mxu0 0
      %1133 = vmatpush1.bf16.msra.mxu0 %v643
      %1134 = vmatprep.subr.bf16.mxu0 0
      %1135 = vmatpush1.bf16.msra.mxu0 %v644
      %1136 = vmatprep.subr.bf16.mxu0 0
      %1137 = vmatpush1.bf16.msra.mxu0 %v645
      %1138 = vmatprep.subr.bf16.mxu0 0
      %1139 = vmatpush1.bf16.msra.mxu0 %v646
      %1140 = vmatprep.subr.bf16.mxu0 0
      %1141 = vmatpush1.bf16.msra.mxu0 %v647
      %1142 = vmatprep.subr.bf16.mxu0 0
      %1143 = vmatpush1.bf16.msra.mxu0 %v648
      %1144 = vmatprep.subr.bf16.mxu0 0
      %1145 = vmatpush1.bf16.msra.mxu0 %v649
      %1146 = vmatprep.subr.bf16.mxu0 0
      %1147 = vmatpush1.bf16.msra.mxu0 %v650
      %1148 = vmatprep.subr.bf16.mxu0 0
      %1149 = vmatpush1.bf16.msra.mxu0 %v651
      %1150 = vmatprep.subr.bf16.mxu0 0
      %1151 = vmatpush1.bf16.msra.mxu0 %v652
      %1152 = vmatprep.subr.bf16.mxu0 0
      %1153 = vmatpush1.bf16.msra.mxu0 %v653
      %1154 = vmatprep.subr.bf16.mxu0 0
      %1155 = vmatpush1.bf16.msra.mxu0 %v654
      %1156 = vmatprep.subr.bf16.mxu0 0
      %1157 = vmatpush1.bf16.msra.mxu0 %v655
      %1158 = vmatprep.subr.bf16.mxu0 0
      %1159 = vmatpush1.bf16.msra.mxu0 %v656
      %1160 = vmatprep.mubr.bf16.mxu0 %v445
      %1161 = vmatmul.mubr.bf16.gmra.mrb[0].mxu0 %v412
      %v1162 = vpop.f32.mrb[0].mxu0
      %v1163 = vadd.f32 0.0, %v1162
      %v1164 = vpop.f32.mrb[0].mxu0
      %v1165 = vpop.f32.mrb[0].mxu0
      %v1166 = vadd.f32 0.0, %v1165
      %v1167 = vpop.f32.mrb[0].mxu0
      %1168 = vmatprep.mubr.bf16.mxu0 %v446
      %1169 = vmatmul.mubr.bf16.gmra.mrb[0].mxu0 %v413
      %v1170 = vpop.f32.mrb[0].mxu0
      %v1171 = vadd.f32 0.0, %v1170
      %v1172 = vpop.f32.mrb[0].mxu0
      %v1173 = vpop.f32.mrb[0].mxu0
      %v1174 = vadd.f32 0.0, %v1173
      %v1175 = vpop.f32.mrb[0].mxu0
      %1176 = vmatprep.mubr.bf16.mxu0 %v447
      %1177 = vmatmul.mubr.bf16.gmra.mrb[0].mxu0 %v414
      %v1178 = vpop.f32.mrb[0].mxu0
      %v1179 = vadd.f32 0.0, %v1178
      %v1180 = vpop.f32.mrb[0].mxu0
      %v1181 = vpop.f32.mrb[0].mxu0
      %v1182 = vpop.f32.mrb[0].mxu0
      %1183 = vdwg.mxu0
      %1184 = vmatprep.subr.bf16.mxu0 0
      %1185 = vmatpush1.bf16.msra.mxu0 %v657
      %1186 = vmatprep.subr.bf16.mxu0 0
      %1187 = vmatpush1.bf16.msra.mxu0 %v658
      %1188 = vmatprep.subr.bf16.mxu0 0
      %1189 = vmatpush1.bf16.msra.mxu0 %v659
      %1190 = vmatprep.subr.bf16.mxu0 0
      %1191 = vmatpush1.bf16.msra.mxu0 %v660
      %1192 = vmatprep.subr.bf16.mxu0 0
      %1193 = vmatpush1.bf16.msra.mxu0 %v661
      %1194 = vmatprep.subr.bf16.mxu0 0
      %1195 = vmatpush1.bf16.msra.mxu0 %v662
      %1196 = vmatprep.subr.bf16.mxu0 0
      %1197 = vmatpush1.bf16.msra.mxu0 %v663
      %1198 = vmatprep.subr.bf16.mxu0 0
      %1199 = vmatpush1.bf16.msra.mxu0 %v664
      %1200 = vmatprep.subr.bf16.mxu0 0
      %1201 = vmatpush1.bf16.msra.mxu0 %v665
      %1202 = vmatprep.subr.bf16.mxu0 0
      %1203 = vmatpush1.bf16.msra.mxu0 %v666
      %1204 = vmatprep.subr.bf16.mxu0 0
      %1205 = vmatpush1.bf16.msra.mxu0 %v667
      %1206 = vmatprep.subr.bf16.mxu0 0
      %1207 = vmatpush1.bf16.msra.mxu0 %v668
      %1208 = vmatprep.subr.bf16.mxu0 0
      %1209 = vmatpush1.bf16.msra.mxu0 %v669
      %1210 = vmatprep.subr.bf16.mxu0 0
      %1211 = vmatpush1.bf16.msra.mxu0 %v670
      %1212 = vmatprep.subr.bf16.mxu0 0
      %1213 = vmatpush1.bf16.msra.mxu0 %v671
      %1214 = vmatprep.subr.bf16.mxu0 0
      %1215 = vmatpush1.bf16.msra.mxu0 %v672
      %1216 = vmatprep.mubr.bf16.mxu0 %v919
      %1217 = vmatmul.mubr.bf16.gmra.mrb[0].mxu0 %v478
      %v1218 = vpop.f32.mrb[0].mxu0
      %v1219 = vadd.f32 %v1163, %v1218
      %v1220 = vpop.f32.mrb[0].mxu0
      %v1221 = vpop.f32.mrb[0].mxu0
      %v1222 = vadd.f32 %v1166, %v1221
      %v1223 = vpop.f32.mrb[0].mxu0
      %1224 = vmatprep.mubr.bf16.mxu0 %v920
      %1225 = vmatmul.mubr.bf16.gmra.mrb[0].mxu0 %v479
      %v1226 = vpop.f32.mrb[0].mxu0
      %v1227 = vadd.f32 %v1171, %v1226
      %v1228 = vpop.f32.mrb[0].mxu0
      %v1229 = vpop.f32.mrb[0].mxu0
      %v1230 = vadd.f32 %v1174, %v1229
      %v1231 = vpop.f32.mrb[0].mxu0
      %1232 = vmatprep.mubr.bf16.mxu0 %v921
      %1233 = vmatmul.mubr.bf16.gmra.mrb[0].mxu0 %v480
      %v1234 = vpop.f32.mrb[0].mxu0
      %v1235 = vadd.f32 %v1179, %v1234
      %v1236 = vpop.f32.mrb[0].mxu0
      %v1237 = vpop.f32.mrb[0].mxu0
      %v1238 = vpop.f32.mrb[0].mxu0
      %1239 = vdwg.mxu0
      %1240 = vmatprep.subr.bf16.mxu0 0
      %1241 = vmatpush1.bf16.msra.mxu0 %v673
      %1242 = vmatprep.subr.bf16.mxu0 0
      %1243 = vmatpush1.bf16.msra.mxu0 %v674
      %1244 = vmatprep.subr.bf16.mxu0 0
      %1245 = vmatpush1.bf16.msra.mxu0 %v675
      %1246 = vmatprep.subr.bf16.mxu0 0
      %1247 = vmatpush1.bf16.msra.mxu0 %v676
      %1248 = vmatprep.subr.bf16.mxu0 0
      %1249 = vmatpush1.bf16.msra.mxu0 %v677
      %1250 = vmatprep.subr.bf16.mxu0 0
      %1251 = vmatpush1.bf16.msra.mxu0 %v678
      %1252 = vmatprep.subr.bf16.mxu0 0
      %1253 = vmatpush1.bf16.msra.mxu0 %v679
      %1254 = vmatprep.subr.bf16.mxu0 0
      %1255 = vmatpush1.bf16.msra.mxu0 %v680
      %1256 = vmatprep.subr.bf16.mxu0 0
      %1257 = vmatpush1.bf16.msra.mxu0 0
      %1258 = vmatprep.subr.bf16.mxu0 0
      %1259 = vmatpush1.bf16.msra.mxu0 0
      %1260 = vmatprep.subr.bf16.mxu0 0
      %1261 = vmatpush1.bf16.msra.mxu0 0
      %1262 = vmatprep.subr.bf16.mxu0 0
      %1263 = vmatpush1.bf16.msra.mxu0 0
      %1264 = vmatprep.subr.bf16.mxu0 0
      %1265 = vmatpush1.bf16.msra.mxu0 0
      %1266 = vmatprep.subr.bf16.mxu0 0
      %1267 = vmatpush1.bf16.msra.mxu0 0
      %1268 = vmatprep.subr.bf16.mxu0 0
      %1269 = vmatpush1.bf16.msra.mxu0 0
      %1270 = vmatprep.subr.bf16.mxu0 0
      %1271 = vmatpush1.bf16.msra.mxu0 0
      %1272 = vmatprep.mubr.bf16.mxu0 0
      %1273 = vmatmul.mubr.bf16.gmra.mrb[0].mxu0 %v1125
      %v1274 = vpop.f32.mrb[0].mxu0
      %v1275 = vadd.f32 %v1219, %v1274
      %v1276 = vpop.f32.mrb[0].mxu0
      %v1277 = vpop.f32.mrb[0].mxu0
      %v1278 = vadd.f32 %v1222, %v1277
      %v1279 = vpop.f32.mrb[0].mxu0
      %1280 = vmatprep.mubr.bf16.mxu0 0
      %1281 = vmatmul.mubr.bf16.gmra.mrb[0].mxu0 %v1126
      %v1282 = vpop.f32.mrb[0].mxu0
      %v1283 = vadd.f32 %v1227, %v1282
      %v1284 = vpop.f32.mrb[0].mxu0
      %v1285 = vpop.f32.mrb[0].mxu0
      %v1286 = vadd.f32 %v1230, %v1285
      %v1287 = vpop.f32.mrb[0].mxu0
      %1288 = vmatprep.mubr.bf16.mxu0 0
      %1289 = vmatmul.mubr.bf16.gmra.mrb[0].mxu0 %v1127
      %v1290 = vpop.f32.mrb[0].mxu0
      %v1291 = vadd.f32 %v1235, %v1290
      %v1292 = vpop.f32.mrb[0].mxu0
      %v1293 = vpop.f32.mrb[0].mxu0
      %v1294 = vpop.f32.mrb[0].mxu0
      %1295 = vdwg.mxu0
      %v1296 = vmax.f32 %v1090, %v1275
      %v1297 = vmax.f32 %v1091, %v1278
      %v1298 = vmax.f32 %v1092, %v1283
      %v1299 = vmax.f32 %v1093, %v1286
      %v1300 = vmax.f32 %v1094, %v1291
      %1301 = vset.pattern.permute.xlu0 7
      %1302 = vperm.xlu0 %1301, %v229
      %v1303 = vpop.permute.xlu0 %1302
      %1304 = vset.pattern.permute.xlu0 7
      %1305 = vperm.xlu0 %1304, %v230
      %v1306 = vpop.permute.xlu0 %1305
      %1307 = vset.pattern.permute.xlu0 7
      %1308 = vperm.xlu0 %1307, %v231
      %v1309 = vpop.permute.xlu0 %1308
      %1310 = vset.pattern.permute.xlu0 7
      %1311 = vperm.xlu0 %1310, %v232
      %v1312 = vpop.permute.xlu0 %1311
      %1313 = vset.pattern.permute.xlu0 7
      %1314 = vperm.xlu0 %1313, %v233
      %v1315 = vpop.permute.xlu0 %1314
      %vm1316 = vcmp.eq.s32.totalorder %v1303, %v235
      %vm1317 = vcmp.eq.s32.totalorder %v1306, %v235
      %vm1318 = vcmp.eq.s32.totalorder %v1309, %v235
      %vm1319 = vcmp.eq.s32.totalorder %v1312, %v235
      %vm1320 = vcmp.eq.s32.totalorder %v1315, %v235
      %v1321 = vsel %vm1316, 1, 0
      %v1322 = vsel %vm1317, 1, 0
      %v1323 = vsel %vm1318, 1, 0
      %v1324 = vsel %vm1319, 1, 0
      %v1325 = vsel %vm1320, 1, 0
      %v1326 = vcvt.s32.f32 %v1321
      %v1327 = vcvt.s32.f32 %v1322
      %v1328 = vcvt.s32.f32 %v1323
      %v1329 = vcvt.s32.f32 %v1324
      %v1330 = vcvt.s32.f32 %v1325
      %v1331 = vpack.c.bf16 %v1327, %v1326
      %v1332 = vpack.c.bf16 %v1329, %v1328
      %v1333 = vpack.c.bf16 %v1330, %v1330
      %1334 = vmatprep.subr.bf16.mxu0 0
      %1335 = vmatpush1.bf16.msra.mxu0 %v641
      %1336 = vmatprep.subr.bf16.mxu0 0
      %1337 = vmatpush1.bf16.msra.mxu0 %v642
      %1338 = vmatprep.subr.bf16.mxu0 0
      %1339 = vmatpush1.bf16.msra.mxu0 %v643
      %1340 = vmatprep.subr.bf16.mxu0 0
      %1341 = vmatpush1.bf16.msra.mxu0 %v644
      %1342 = vmatprep.subr.bf16.mxu0 0
      %1343 = vmatpush1.bf16.msra.mxu0 %v645
      %1344 = vmatprep.subr.bf16.mxu0 0
      %1345 = vmatpush1.bf16.msra.mxu0 %v646
      %1346 = vmatprep.subr.bf16.mxu0 0
      %1347 = vmatpush1.bf16.msra.mxu0 %v647
      %1348 = vmatprep.subr.bf16.mxu0 0
      %1349 = vmatpush1.bf16.msra.mxu0 %v648
      %1350 = vmatprep.subr.bf16.mxu0 0
      %1351 = vmatpush1.bf16.msra.mxu0 %v649
      %1352 = vmatprep.subr.bf16.mxu0 0
      %1353 = vmatpush1.bf16.msra.mxu0 %v650
      %1354 = vmatprep.subr.bf16.mxu0 0
      %1355 = vmatpush1.bf16.msra.mxu0 %v651
      %1356 = vmatprep.subr.bf16.mxu0 0
      %1357 = vmatpush1.bf16.msra.mxu0 %v652
      %1358 = vmatprep.subr.bf16.mxu0 0
      %1359 = vmatpush1.bf16.msra.mxu0 %v653
      %1360 = vmatprep.subr.bf16.mxu0 0
      %1361 = vmatpush1.bf16.msra.mxu0 %v654
      %1362 = vmatprep.subr.bf16.mxu0 0
      %1363 = vmatpush1.bf16.msra.mxu0 %v655
      %1364 = vmatprep.subr.bf16.mxu0 0
      %1365 = vmatpush1.bf16.msra.mxu0 %v656
      %1366 = vmatprep.mubr.bf16.mxu0 %v478
      %1367 = vmatmul.mubr.bf16.gmra.mrb[0].mxu0 %v445
      %v1368 = vpop.f32.mrb[0].mxu0
      %v1369 = vadd.f32 0.0, %v1368
      %v1370 = vpop.f32.mrb[0].mxu0
      %v1371 = vpop.f32.mrb[0].mxu0
      %v1372 = vadd.f32 0.0, %v1371
      %v1373 = vpop.f32.mrb[0].mxu0
      %1374 = vmatprep.mubr.bf16.mxu0 %v479
      %1375 = vmatmul.mubr.bf16.gmra.mrb[0].mxu0 %v446
      %v1376 = vpop.f32.mrb[0].mxu0
      %v1377 = vadd.f32 0.0, %v1376
      %v1378 = vpop.f32.mrb[0].mxu0
      %v1379 = vpop.f32.mrb[0].mxu0
      %v1380 = vadd.f32 0.0, %v1379
      %v1381 = vpop.f32.mrb[0].mxu0
      %1382 = vmatprep.mubr.bf16.mxu0 %v480
      %1383 = vmatmul.mubr.bf16.gmra.mrb[0].mxu0 %v447
      %v1384 = vpop.f32.mrb[0].mxu0
      %v1385 = vadd.f32 0.0, %v1384
      %v1386 = vpop.f32.mrb[0].mxu0
      %v1387 = vpop.f32.mrb[0].mxu0
      %v1388 = vpop.f32.mrb[0].mxu0
      %1389 = vdwg.mxu0
      %1390 = vmatprep.subr.bf16.mxu0 0
      %1391 = vmatpush1.bf16.msra.mxu0 %v657
      %1392 = vmatprep.subr.bf16.mxu0 0
      %1393 = vmatpush1.bf16.msra.mxu0 %v658
      %1394 = vmatprep.subr.bf16.mxu0 0
      %1395 = vmatpush1.bf16.msra.mxu0 %v659
      %1396 = vmatprep.subr.bf16.mxu0 0
      %1397 = vmatpush1.bf16.msra.mxu0 %v660
      %1398 = vmatprep.subr.bf16.mxu0 0
      %1399 = vmatpush1.bf16.msra.mxu0 %v661
      %1400 = vmatprep.subr.bf16.mxu0 0
      %1401 = vmatpush1.bf16.msra.mxu0 %v662
      %1402 = vmatprep.subr.bf16.mxu0 0
      %1403 = vmatpush1.bf16.msra.mxu0 %v663
      %1404 = vmatprep.subr.bf16.mxu0 0
      %1405 = vmatpush1.bf16.msra.mxu0 %v664
      %1406 = vmatprep.subr.bf16.mxu0 0
      %1407 = vmatpush1.bf16.msra.mxu0 %v665
      %1408 = vmatprep.subr.bf16.mxu0 0
      %1409 = vmatpush1.bf16.msra.mxu0 %v666
      %1410 = vmatprep.subr.bf16.mxu0 0
      %1411 = vmatpush1.bf16.msra.mxu0 %v667
      %1412 = vmatprep.subr.bf16.mxu0 0
      %1413 = vmatpush1.bf16.msra.mxu0 %v668
      %1414 = vmatprep.subr.bf16.mxu0 0
      %1415 = vmatpush1.bf16.msra.mxu0 %v669
      %1416 = vmatprep.subr.bf16.mxu0 0
      %1417 = vmatpush1.bf16.msra.mxu0 %v670
      %1418 = vmatprep.subr.bf16.mxu0 0
      %1419 = vmatpush1.bf16.msra.mxu0 %v671
      %1420 = vmatprep.subr.bf16.mxu0 0
      %1421 = vmatpush1.bf16.msra.mxu0 %v672
      %1422 = vmatprep.mubr.bf16.mxu0 %v1125
      %1423 = vmatmul.mubr.bf16.gmra.mrb[0].mxu0 %v919
      %v1424 = vpop.f32.mrb[0].mxu0
      %v1425 = vadd.f32 %v1369, %v1424
      %v1426 = vpop.f32.mrb[0].mxu0
      %v1427 = vpop.f32.mrb[0].mxu0
      %v1428 = vadd.f32 %v1372, %v1427
      %v1429 = vpop.f32.mrb[0].mxu0
      %1430 = vmatprep.mubr.bf16.mxu0 %v1126
      %1431 = vmatmul.mubr.bf16.gmra.mrb[0].mxu0 %v920
      %v1432 = vpop.f32.mrb[0].mxu0
      %v1433 = vadd.f32 %v1377, %v1432
      %v1434 = vpop.f32.mrb[0].mxu0
      %v1435 = vpop.f32.mrb[0].mxu0
      %v1436 = vadd.f32 %v1380, %v1435
      %v1437 = vpop.f32.mrb[0].mxu0
      %1438 = vmatprep.mubr.bf16.mxu0 %v1127
      %1439 = vmatmul.mubr.bf16.gmra.mrb[0].mxu0 %v921
      %v1440 = vpop.f32.mrb[0].mxu0
      %v1441 = vadd.f32 %v1385, %v1440
      %v1442 = vpop.f32.mrb[0].mxu0
      %v1443 = vpop.f32.mrb[0].mxu0
      %v1444 = vpop.f32.mrb[0].mxu0
      %1445 = vdwg.mxu0
      %1446 = vmatprep.subr.bf16.mxu0 0
      %1447 = vmatpush1.bf16.msra.mxu0 %v673
      %1448 = vmatprep.subr.bf16.mxu0 0
      %1449 = vmatpush1.bf16.msra.mxu0 %v674
      %1450 = vmatprep.subr.bf16.mxu0 0
      %1451 = vmatpush1.bf16.msra.mxu0 %v675
      %1452 = vmatprep.subr.bf16.mxu0 0
      %1453 = vmatpush1.bf16.msra.mxu0 %v676
      %1454 = vmatprep.subr.bf16.mxu0 0
      %1455 = vmatpush1.bf16.msra.mxu0 %v677
      %1456 = vmatprep.subr.bf16.mxu0 0
      %1457 = vmatpush1.bf16.msra.mxu0 %v678
      %1458 = vmatprep.subr.bf16.mxu0 0
      %1459 = vmatpush1.bf16.msra.mxu0 %v679
      %1460 = vmatprep.subr.bf16.mxu0 0
      %1461 = vmatpush1.bf16.msra.mxu0 %v680
      %1462 = vmatprep.subr.bf16.mxu0 0
      %1463 = vmatpush1.bf16.msra.mxu0 0
      %1464 = vmatprep.subr.bf16.mxu0 0
      %1465 = vmatpush1.bf16.msra.mxu0 0
      %1466 = vmatprep.subr.bf16.mxu0 0
      %1467 = vmatpush1.bf16.msra.mxu0 0
      %1468 = vmatprep.subr.bf16.mxu0 0
      %1469 = vmatpush1.bf16.msra.mxu0 0
      %1470 = vmatprep.subr.bf16.mxu0 0
      %1471 = vmatpush1.bf16.msra.mxu0 0
      %1472 = vmatprep.subr.bf16.mxu0 0
      %1473 = vmatpush1.bf16.msra.mxu0 0
      %1474 = vmatprep.subr.bf16.mxu0 0
      %1475 = vmatpush1.bf16.msra.mxu0 0
      %1476 = vmatprep.subr.bf16.mxu0 0
      %1477 = vmatpush1.bf16.msra.mxu0 0
      %1478 = vmatprep.mubr.bf16.mxu0 0
      %1479 = vmatmul.mubr.bf16.gmra.mrb[0].mxu0 %v1331
      %v1480 = vpop.f32.mrb[0].mxu0
      %v1481 = vadd.f32 %v1425, %v1480
      %v1482 = vpop.f32.mrb[0].mxu0
      %v1483 = vpop.f32.mrb[0].mxu0
      %v1484 = vadd.f32 %v1428, %v1483
      %v1485 = vpop.f32.mrb[0].mxu0
      %1486 = vmatprep.mubr.bf16.mxu0 0
      %1487 = vmatmul.mubr.bf16.gmra.mrb[0].mxu0 %v1332
      %v1488 = vpop.f32.mrb[0].mxu0
      %v1489 = vadd.f32 %v1433, %v1488
      %v1490 = vpop.f32.mrb[0].mxu0
      %v1491 = vpop.f32.mrb[0].mxu0
      %v1492 = vadd.f32 %v1436, %v1491
      %v1493 = vpop.f32.mrb[0].mxu0
      %1494 = vmatprep.mubr.bf16.mxu0 0
      %1495 = vmatmul.mubr.bf16.gmra.mrb[0].mxu0 %v1333
      %v1496 = vpop.f32.mrb[0].mxu0
      %v1497 = vadd.f32 %v1441, %v1496
      %v1498 = vpop.f32.mrb[0].mxu0
      %v1499 = vpop.f32.mrb[0].mxu0
      %v1500 = vpop.f32.mrb[0].mxu0
      %1501 = vdwg.mxu0
      %v1502 = vmax.f32 %v1296, %v1481
      %v1503 = vmax.f32 %v1297, %v1484
      %v1504 = vmax.f32 %v1298, %v1489
      %v1505 = vmax.f32 %v1299, %v1492
      %v1506 = vmax.f32 %v1300, %v1497
      %1507 = vset.pattern.permute.xlu0 8
      %1508 = vperm.xlu0 %1507, %v229
      %v1509 = vpop.permute.xlu0 %1508
      %1510 = vset.pattern.permute.xlu0 8
      %1511 = vperm.xlu0 %1510, %v230
      %v1512 = vpop.permute.xlu0 %1511
      %1513 = vset.pattern.permute.xlu0 8
      %1514 = vperm.xlu0 %1513, %v231
      %v1515 = vpop.permute.xlu0 %1514
      %1516 = vset.pattern.permute.xlu0 8
      %1517 = vperm.xlu0 %1516, %v232
      %v1518 = vpop.permute.xlu0 %1517
      %1519 = vset.pattern.permute.xlu0 8
      %1520 = vperm.xlu0 %1519, %v233
      %v1521 = vpop.permute.xlu0 %1520
      %vm1522 = vcmp.eq.s32.totalorder %v1509, %v235
      %vm1523 = vcmp.eq.s32.totalorder %v1512, %v235
      %vm1524 = vcmp.eq.s32.totalorder %v1515, %v235
      %vm1525 = vcmp.eq.s32.totalorder %v1518, %v235
      %vm1526 = vcmp.eq.s32.totalorder %v1521, %v235
      %v1527 = vsel %vm1522, 1, 0
      %v1528 = vsel %vm1523, 1, 0
      %v1529 = vsel %vm1524, 1, 0
      %v1530 = vsel %vm1525, 1, 0
      %v1531 = vsel %vm1526, 1, 0
      %v1532 = vcvt.s32.f32 %v1527
      %v1533 = vcvt.s32.f32 %v1528
      %v1534 = vcvt.s32.f32 %v1529
      %v1535 = vcvt.s32.f32 %v1530
      %v1536 = vcvt.s32.f32 %v1531
      %v1537 = vpack.c.bf16 %v1533, %v1532
      %v1538 = vpack.c.bf16 %v1535, %v1534
      %v1539 = vpack.c.bf16 %v1536, %v1536
      %1540 = vmatprep.subr.bf16.mxu0 0
      %1541 = vmatpush1.bf16.msra.mxu0 %v641
      %1542 = vmatprep.subr.bf16.mxu0 0
      %1543 = vmatpush1.bf16.msra.mxu0 %v642
      %1544 = vmatprep.subr.bf16.mxu0 0
      %1545 = vmatpush1.bf16.msra.mxu0 %v643
      %1546 = vmatprep.subr.bf16.mxu0 0
      %1547 = vmatpush1.bf16.msra.mxu0 %v644
      %1548 = vmatprep.subr.bf16.mxu0 0
      %1549 = vmatpush1.bf16.msra.mxu0 %v645
      %1550 = vmatprep.subr.bf16.mxu0 0
      %1551 = vmatpush1.bf16.msra.mxu0 %v646
      %1552 = vmatprep.subr.bf16.mxu0 0
      %1553 = vmatpush1.bf16.msra.mxu0 %v647
      %1554 = vmatprep.subr.bf16.mxu0 0
      %1555 = vmatpush1.bf16.msra.mxu0 %v648
      %1556 = vmatprep.subr.bf16.mxu0 0
      %1557 = vmatpush1.bf16.msra.mxu0 %v649
      %1558 = vmatprep.subr.bf16.mxu0 0
      %1559 = vmatpush1.bf16.msra.mxu0 %v650
      %1560 = vmatprep.subr.bf16.mxu0 0
      %1561 = vmatpush1.bf16.msra.mxu0 %v651
      %1562 = vmatprep.subr.bf16.mxu0 0
      %1563 = vmatpush1.bf16.msra.mxu0 %v652
      %1564 = vmatprep.subr.bf16.mxu0 0
      %1565 = vmatpush1.bf16.msra.mxu0 %v653
      %1566 = vmatprep.subr.bf16.mxu0 0
      %1567 = vmatpush1.bf16.msra.mxu0 %v654
      %1568 = vmatprep.subr.bf16.mxu0 0
      %1569 = vmatpush1.bf16.msra.mxu0 %v655
      %1570 = vmatprep.subr.bf16.mxu0 0
      %1571 = vmatpush1.bf16.msra.mxu0 %v656
      %1572 = vmatprep.mubr.bf16.mxu0 %v919
      %1573 = vmatmul.mubr.bf16.gmra.mrb[0].mxu0 %v478
      %v1574 = vpop.f32.mrb[0].mxu0
      %v1575 = vadd.f32 0.0, %v1574
      %v1576 = vpop.f32.mrb[0].mxu0
      %v1577 = vpop.f32.mrb[0].mxu0
      %v1578 = vadd.f32 0.0, %v1577
      %v1579 = vpop.f32.mrb[0].mxu0
      %1580 = vmatprep.mubr.bf16.mxu0 %v920
      %1581 = vmatmul.mubr.bf16.gmra.mrb[0].mxu0 %v479
      %v1582 = vpop.f32.mrb[0].mxu0
      %v1583 = vadd.f32 0.0, %v1582
      %v1584 = vpop.f32.mrb[0].mxu0
      %v1585 = vpop.f32.mrb[0].mxu0
      %v1586 = vadd.f32 0.0, %v1585
      %v1587 = vpop.f32.mrb[0].mxu0
      %1588 = vmatprep.mubr.bf16.mxu0 %v921
      %1589 = vmatmul.mubr.bf16.gmra.mrb[0].mxu0 %v480
      %v1590 = vpop.f32.mrb[0].mxu0
      %v1591 = vadd.f32 0.0, %v1590
      %v1592 = vpop.f32.mrb[0].mxu0
      %v1593 = vpop.f32.mrb[0].mxu0
      %v1594 = vpop.f32.mrb[0].mxu0
      %1595 = vdwg.mxu0
      %1596 = vmatprep.subr.bf16.mxu0 0
      %1597 = vmatpush1.bf16.msra.mxu0 %v657
      %1598 = vmatprep.subr.bf16.mxu0 0
      %1599 = vmatpush1.bf16.msra.mxu0 %v658
      %1600 = vmatprep.subr.bf16.mxu0 0
      %1601 = vmatpush1.bf16.msra.mxu0 %v659
      %1602 = vmatprep.subr.bf16.mxu0 0
      %1603 = vmatpush1.bf16.msra.mxu0 %v660
      %1604 = vmatprep.subr.bf16.mxu0 0
      %1605 = vmatpush1.bf16.msra.mxu0 %v661
      %1606 = vmatprep.subr.bf16.mxu0 0
      %1607 = vmatpush1.bf16.msra.mxu0 %v662
      %1608 = vmatprep.subr.bf16.mxu0 0
      %1609 = vmatpush1.bf16.msra.mxu0 %v663
      %1610 = vmatprep.subr.bf16.mxu0 0
      %1611 = vmatpush1.bf16.msra.mxu0 %v664
      %1612 = vmatprep.subr.bf16.mxu0 0
      %1613 = vmatpush1.bf16.msra.mxu0 %v665
      %1614 = vmatprep.subr.bf16.mxu0 0
      %1615 = vmatpush1.bf16.msra.mxu0 %v666
      %1616 = vmatprep.subr.bf16.mxu0 0
      %1617 = vmatpush1.bf16.msra.mxu0 %v667
      %1618 = vmatprep.subr.bf16.mxu0 0
      %1619 = vmatpush1.bf16.msra.mxu0 %v668
      %1620 = vmatprep.subr.bf16.mxu0 0
      %1621 = vmatpush1.bf16.msra.mxu0 %v669
      %1622 = vmatprep.subr.bf16.mxu0 0
      %1623 = vmatpush1.bf16.msra.mxu0 %v670
      %1624 = vmatprep.subr.bf16.mxu0 0
      %1625 = vmatpush1.bf16.msra.mxu0 %v671
      %1626 = vmatprep.subr.bf16.mxu0 0
      %1627 = vmatpush1.bf16.msra.mxu0 %v672
      %1628 = vmatprep.mubr.bf16.mxu0 %v1331
      %1629 = vmatmul.mubr.bf16.gmra.mrb[0].mxu0 %v1125
      %v1630 = vpop.f32.mrb[0].mxu0
      %v1631 = vadd.f32 %v1575, %v1630
      %v1632 = vpop.f32.mrb[0].mxu0
      %v1633 = vpop.f32.mrb[0].mxu0
      %v1634 = vadd.f32 %v1578, %v1633
      %v1635 = vpop.f32.mrb[0].mxu0
      %1636 = vmatprep.mubr.bf16.mxu0 %v1332
      %1637 = vmatmul.mubr.bf16.gmra.mrb[0].mxu0 %v1126
      %v1638 = vpop.f32.mrb[0].mxu0
      %v1639 = vadd.f32 %v1583, %v1638
      %v1640 = vpop.f32.mrb[0].mxu0
      %v1641 = vpop.f32.mrb[0].mxu0
      %v1642 = vadd.f32 %v1586, %v1641
      %v1643 = vpop.f32.mrb[0].mxu0
      %1644 = vmatprep.mubr.bf16.mxu0 %v1333
      %1645 = vmatmul.mubr.bf16.gmra.mrb[0].mxu0 %v1127
      %v1646 = vpop.f32.mrb[0].mxu0
      %v1647 = vadd.f32 %v1591, %v1646
      %v1648 = vpop.f32.mrb[0].mxu0
      %v1649 = vpop.f32.mrb[0].mxu0
      %v1650 = vpop.f32.mrb[0].mxu0
      %1651 = vdwg.mxu0
      %1652 = vmatprep.subr.bf16.mxu0 0
      %1653 = vmatpush1.bf16.msra.mxu0 %v673
      %1654 = vmatprep.subr.bf16.mxu0 0
      %1655 = vmatpush1.bf16.msra.mxu0 %v674
      %1656 = vmatprep.subr.bf16.mxu0 0
      %1657 = vmatpush1.bf16.msra.mxu0 %v675
      %1658 = vmatprep.subr.bf16.mxu0 0
      %1659 = vmatpush1.bf16.msra.mxu0 %v676
      %1660 = vmatprep.subr.bf16.mxu0 0
      %1661 = vmatpush1.bf16.msra.mxu0 %v677
      %1662 = vmatprep.subr.bf16.mxu0 0
      %1663 = vmatpush1.bf16.msra.mxu0 %v678
      %1664 = vmatprep.subr.bf16.mxu0 0
      %1665 = vmatpush1.bf16.msra.mxu0 %v679
      %1666 = vmatprep.subr.bf16.mxu0 0
      %1667 = vmatpush1.bf16.msra.mxu0 %v680
      %1668 = vmatprep.subr.bf16.mxu0 0
      %1669 = vmatpush1.bf16.msra.mxu0 0
      %1670 = vmatprep.subr.bf16.mxu0 0
      %1671 = vmatpush1.bf16.msra.mxu0 0
      %1672 = vmatprep.subr.bf16.mxu0 0
      %1673 = vmatpush1.bf16.msra.mxu0 0
      %1674 = vmatprep.subr.bf16.mxu0 0
      %1675 = vmatpush1.bf16.msra.mxu0 0
      %1676 = vmatprep.subr.bf16.mxu0 0
      %1677 = vmatpush1.bf16.msra.mxu0 0
      %1678 = vmatprep.subr.bf16.mxu0 0
      %1679 = vmatpush1.bf16.msra.mxu0 0
      %1680 = vmatprep.subr.bf16.mxu0 0
      %1681 = vmatpush1.bf16.msra.mxu0 0
      %1682 = vmatprep.subr.bf16.mxu0 0
      %1683 = vmatpush1.bf16.msra.mxu0 0
      %1684 = vmatprep.mubr.bf16.mxu0 0
      %1685 = vmatmul.mubr.bf16.gmra.mrb[0].mxu0 %v1537
      %v1686 = vpop.f32.mrb[0].mxu0
      %v1687 = vadd.f32 %v1631, %v1686
      %v1688 = vpop.f32.mrb[0].mxu0
      %v1689 = vpop.f32.mrb[0].mxu0
      %v1690 = vadd.f32 %v1634, %v1689
      %v1691 = vpop.f32.mrb[0].mxu0
      %1692 = vmatprep.mubr.bf16.mxu0 0
      %1693 = vmatmul.mubr.bf16.gmra.mrb[0].mxu0 %v1538
      %v1694 = vpop.f32.mrb[0].mxu0
      %v1695 = vadd.f32 %v1639, %v1694
      %v1696 = vpop.f32.mrb[0].mxu0
      %v1697 = vpop.f32.mrb[0].mxu0
      %v1698 = vadd.f32 %v1642, %v1697
      %v1699 = vpop.f32.mrb[0].mxu0
      %1700 = vmatprep.mubr.bf16.mxu0 0
      %1701 = vmatmul.mubr.bf16.gmra.mrb[0].mxu0 %v1539
      %v1702 = vpop.f32.mrb[0].mxu0
      %v1703 = vadd.f32 %v1647, %v1702
      %v1704 = vpop.f32.mrb[0].mxu0
      %v1705 = vpop.f32.mrb[0].mxu0
      %v1706 = vpop.f32.mrb[0].mxu0
      %1707 = vdwg.mxu0
      %v1708 = vmax.f32 %v1502, %v1687
      %v1709 = vmax.f32 %v1503, %v1690
      %v1710 = vmax.f32 %v1504, %v1695
      %v1711 = vmax.f32 %v1505, %v1698
      %v1712 = vmax.f32 %v1506, %v1703
      %1713 = vset.pattern.permute.xlu0 9
      %1714 = vperm.xlu0 %1713, %v229
      %v1715 = vpop.permute.xlu0 %1714
      %1716 = vset.pattern.permute.xlu0 9
      %1717 = vperm.xlu0 %1716, %v230
      %v1718 = vpop.permute.xlu0 %1717
      %1719 = vset.pattern.permute.xlu0 9
      %1720 = vperm.xlu0 %1719, %v231
      %v1721 = vpop.permute.xlu0 %1720
      %1722 = vset.pattern.permute.xlu0 9
      %1723 = vperm.xlu0 %1722, %v232
      %v1724 = vpop.permute.xlu0 %1723
      %1725 = vset.pattern.permute.xlu0 9
      %1726 = vperm.xlu0 %1725, %v233
      %v1727 = vpop.permute.xlu0 %1726
      %vm1728 = vcmp.eq.s32.totalorder %v1715, %v235
      %vm1729 = vcmp.eq.s32.totalorder %v1718, %v235
      %vm1730 = vcmp.eq.s32.totalorder %v1721, %v235
      %vm1731 = vcmp.eq.s32.totalorder %v1724, %v235
      %vm1732 = vcmp.eq.s32.totalorder %v1727, %v235
      %v1733 = vsel %vm1728, 1, 0
      %v1734 = vsel %vm1729, 1, 0
      %v1735 = vsel %vm1730, 1, 0
      %v1736 = vsel %vm1731, 1, 0
      %v1737 = vsel %vm1732, 1, 0
      %v1738 = vcvt.s32.f32 %v1733
      %v1739 = vcvt.s32.f32 %v1734
      %v1740 = vcvt.s32.f32 %v1735
      %v1741 = vcvt.s32.f32 %v1736
      %v1742 = vcvt.s32.f32 %v1737
      %v1743 = vpack.c.bf16 %v1739, %v1738
      %v1744 = vpack.c.bf16 %v1741, %v1740
      %v1745 = vpack.c.bf16 %v1742, %v1742
      %1746 = vmatprep.subr.bf16.mxu0 0
      %1747 = vmatpush1.bf16.msra.mxu0 %v641
      %1748 = vmatprep.subr.bf16.mxu0 0
      %1749 = vmatpush1.bf16.msra.mxu0 %v642
      %1750 = vmatprep.subr.bf16.mxu0 0
      %1751 = vmatpush1.bf16.msra.mxu0 %v643
      %1752 = vmatprep.subr.bf16.mxu0 0
      %1753 = vmatpush1.bf16.msra.mxu0 %v644
      %1754 = vmatprep.subr.bf16.mxu0 0
      %1755 = vmatpush1.bf16.msra.mxu0 %v645
      %1756 = vmatprep.subr.bf16.mxu0 0
      %1757 = vmatpush1.bf16.msra.mxu0 %v646
      %1758 = vmatprep.subr.bf16.mxu0 0
      %1759 = vmatpush1.bf16.msra.mxu0 %v647
      %1760 = vmatprep.subr.bf16.mxu0 0
      %1761 = vmatpush1.bf16.msra.mxu0 %v648
      %1762 = vmatprep.subr.bf16.mxu0 0
      %1763 = vmatpush1.bf16.msra.mxu0 %v649
      %1764 = vmatprep.subr.bf16.mxu0 0
      %1765 = vmatpush1.bf16.msra.mxu0 %v650
      %1766 = vmatprep.subr.bf16.mxu0 0
      %1767 = vmatpush1.bf16.msra.mxu0 %v651
      %1768 = vmatprep.subr.bf16.mxu0 0
      %1769 = vmatpush1.bf16.msra.mxu0 %v652
      %1770 = vmatprep.subr.bf16.mxu0 0
      %1771 = vmatpush1.bf16.msra.mxu0 %v653
      %1772 = vmatprep.subr.bf16.mxu0 0
      %1773 = vmatpush1.bf16.msra.mxu0 %v654
      %1774 = vmatprep.subr.bf16.mxu0 0
      %1775 = vmatpush1.bf16.msra.mxu0 %v655
      %1776 = vmatprep.subr.bf16.mxu0 0
      %1777 = vmatpush1.bf16.msra.mxu0 %v656
      %1778 = vmatprep.mubr.bf16.mxu0 %v1125
      %1779 = vmatmul.mubr.bf16.gmra.mrb[0].mxu0 %v919
      %v1780 = vpop.f32.mrb[0].mxu0
      %v1781 = vadd.f32 0.0, %v1780
      %v1782 = vpop.f32.mrb[0].mxu0
      %v1783 = vpop.f32.mrb[0].mxu0
      %v1784 = vadd.f32 0.0, %v1783
      %v1785 = vpop.f32.mrb[0].mxu0
      %1786 = vmatprep.mubr.bf16.mxu0 %v1126
      %1787 = vmatmul.mubr.bf16.gmra.mrb[0].mxu0 %v920
      %v1788 = vpop.f32.mrb[0].mxu0
      %v1789 = vadd.f32 0.0, %v1788
      %v1790 = vpop.f32.mrb[0].mxu0
      %v1791 = vpop.f32.mrb[0].mxu0
      %v1792 = vadd.f32 0.0, %v1791
      %v1793 = vpop.f32.mrb[0].mxu0
      %1794 = vmatprep.mubr.bf16.mxu0 %v1127
      %1795 = vmatmul.mubr.bf16.gmra.mrb[0].mxu0 %v921
      %v1796 = vpop.f32.mrb[0].mxu0
      %v1797 = vadd.f32 0.0, %v1796
      %v1798 = vpop.f32.mrb[0].mxu0
      %v1799 = vpop.f32.mrb[0].mxu0
      %v1800 = vpop.f32.mrb[0].mxu0
      %1801 = vdwg.mxu0
      %1802 = vmatprep.subr.bf16.mxu0 0
      %1803 = vmatpush1.bf16.msra.mxu0 %v657
      %1804 = vmatprep.subr.bf16.mxu0 0
      %1805 = vmatpush1.bf16.msra.mxu0 %v658
      %1806 = vmatprep.subr.bf16.mxu0 0
      %1807 = vmatpush1.bf16.msra.mxu0 %v659
      %1808 = vmatprep.subr.bf16.mxu0 0
      %1809 = vmatpush1.bf16.msra.mxu0 %v660
      %1810 = vmatprep.subr.bf16.mxu0 0
      %1811 = vmatpush1.bf16.msra.mxu0 %v661
      %1812 = vmatprep.subr.bf16.mxu0 0
      %1813 = vmatpush1.bf16.msra.mxu0 %v662
      %1814 = vmatprep.subr.bf16.mxu0 0
      %1815 = vmatpush1.bf16.msra.mxu0 %v663
      %1816 = vmatprep.subr.bf16.mxu0 0
      %1817 = vmatpush1.bf16.msra.mxu0 %v664
      %1818 = vmatprep.subr.bf16.mxu0 0
      %1819 = vmatpush1.bf16.msra.mxu0 %v665
      %1820 = vmatprep.subr.bf16.mxu0 0
      %1821 = vmatpush1.bf16.msra.mxu0 %v666
      %1822 = vmatprep.subr.bf16.mxu0 0
      %1823 = vmatpush1.bf16.msra.mxu0 %v667
      %1824 = vmatprep.subr.bf16.mxu0 0
      %1825 = vmatpush1.bf16.msra.mxu0 %v668
      %1826 = vmatprep.subr.bf16.mxu0 0
      %1827 = vmatpush1.bf16.msra.mxu0 %v669
      %1828 = vmatprep.subr.bf16.mxu0 0
      %1829 = vmatpush1.bf16.msra.mxu0 %v670
      %1830 = vmatprep.subr.bf16.mxu0 0
      %1831 = vmatpush1.bf16.msra.mxu0 %v671
      %1832 = vmatprep.subr.bf16.mxu0 0
      %1833 = vmatpush1.bf16.msra.mxu0 %v672
      %1834 = vmatprep.mubr.bf16.mxu0 %v1537
      %1835 = vmatmul.mubr.bf16.gmra.mrb[0].mxu0 %v1331
      %v1836 = vpop.f32.mrb[0].mxu0
      %v1837 = vadd.f32 %v1781, %v1836
      %v1838 = vpop.f32.mrb[0].mxu0
      %v1839 = vpop.f32.mrb[0].mxu0
      %v1840 = vadd.f32 %v1784, %v1839
      %v1841 = vpop.f32.mrb[0].mxu0
      %1842 = vmatprep.mubr.bf16.mxu0 %v1538
      %1843 = vmatmul.mubr.bf16.gmra.mrb[0].mxu0 %v1332
      %v1844 = vpop.f32.mrb[0].mxu0
      %v1845 = vadd.f32 %v1789, %v1844
      %v1846 = vpop.f32.mrb[0].mxu0
      %v1847 = vpop.f32.mrb[0].mxu0
      %v1848 = vadd.f32 %v1792, %v1847
      %v1849 = vpop.f32.mrb[0].mxu0
      %1850 = vmatprep.mubr.bf16.mxu0 %v1539
      %1851 = vmatmul.mubr.bf16.gmra.mrb[0].mxu0 %v1333
      %v1852 = vpop.f32.mrb[0].mxu0
      %v1853 = vadd.f32 %v1797, %v1852
      %v1854 = vpop.f32.mrb[0].mxu0
      %v1855 = vpop.f32.mrb[0].mxu0
      %v1856 = vpop.f32.mrb[0].mxu0
      %1857 = vdwg.mxu0
      %1858 = vmatprep.subr.bf16.mxu0 0
      %1859 = vmatpush1.bf16.msra.mxu0 %v673
      %1860 = vmatprep.subr.bf16.mxu0 0
      %1861 = vmatpush1.bf16.msra.mxu0 %v674
      %1862 = vmatprep.subr.bf16.mxu0 0
      %1863 = vmatpush1.bf16.msra.mxu0 %v675
      %1864 = vmatprep.subr.bf16.mxu0 0
      %1865 = vmatpush1.bf16.msra.mxu0 %v676
      %1866 = vmatprep.subr.bf16.mxu0 0
      %1867 = vmatpush1.bf16.msra.mxu0 %v677
      %1868 = vmatprep.subr.bf16.mxu0 0
      %1869 = vmatpush1.bf16.msra.mxu0 %v678
      %1870 = vmatprep.subr.bf16.mxu0 0
      %1871 = vmatpush1.bf16.msra.mxu0 %v679
      %1872 = vmatprep.subr.bf16.mxu0 0
      %1873 = vmatpush1.bf16.msra.mxu0 %v680
      %1874 = vmatprep.subr.bf16.mxu0 0
      %1875 = vmatpush1.bf16.msra.mxu0 0
      %1876 = vmatprep.subr.bf16.mxu0 0
      %1877 = vmatpush1.bf16.msra.mxu0 0
      %1878 = vmatprep.subr.bf16.mxu0 0
      %1879 = vmatpush1.bf16.msra.mxu0 0
      %1880 = vmatprep.subr.bf16.mxu0 0
      %1881 = vmatpush1.bf16.msra.mxu0 0
      %1882 = vmatprep.subr.bf16.mxu0 0
      %1883 = vmatpush1.bf16.msra.mxu0 0
      %1884 = vmatprep.subr.bf16.mxu0 0
      %1885 = vmatpush1.bf16.msra.mxu0 0
      %1886 = vmatprep.subr.bf16.mxu0 0
      %1887 = vmatpush1.bf16.msra.mxu0 0
      %1888 = vmatprep.subr.bf16.mxu0 0
      %1889 = vmatpush1.bf16.msra.mxu0 0
      %1890 = vmatprep.mubr.bf16.mxu0 0
      %1891 = vmatmul.mubr.bf16.gmra.mrb[0].mxu0 %v1743
      %v1892 = vpop.f32.mrb[0].mxu0
      %v1893 = vadd.f32 %v1837, %v1892
      %v1894 = vpop.f32.mrb[0].mxu0
      %v1895 = vpop.f32.mrb[0].mxu0
      %v1896 = vadd.f32 %v1840, %v1895
      %v1897 = vpop.f32.mrb[0].mxu0
      %1898 = vmatprep.mubr.bf16.mxu0 0
      %1899 = vmatmul.mubr.bf16.gmra.mrb[0].mxu0 %v1744
      %v1900 = vpop.f32.mrb[0].mxu0
      %v1901 = vadd.f32 %v1845, %v1900
      %v1902 = vpop.f32.mrb[0].mxu0
      %v1903 = vpop.f32.mrb[0].mxu0
      %v1904 = vadd.f32 %v1848, %v1903
      %v1905 = vpop.f32.mrb[0].mxu0
      %1906 = vmatprep.mubr.bf16.mxu0 0
      %1907 = vmatmul.mubr.bf16.gmra.mrb[0].mxu0 %v1745
      %v1908 = vpop.f32.mrb[0].mxu0
      %v1909 = vadd.f32 %v1853, %v1908
      %v1910 = vpop.f32.mrb[0].mxu0
      %v1911 = vpop.f32.mrb[0].mxu0
      %v1912 = vpop.f32.mrb[0].mxu0
      %1913 = vdwg.mxu0
      %v1914 = vmax.f32 %v1708, %v1893
      %v1915 = vmax.f32 %v1709, %v1896
      %v1916 = vmax.f32 %v1710, %v1901
      %v1917 = vmax.f32 %v1711, %v1904
      %v1918 = vmax.f32 %v1712, %v1909
      %1919 = vset.pattern.permute.xlu0 10
      %1920 = vperm.xlu0 %1919, %v229
      %v1921 = vpop.permute.xlu0 %1920
      %1922 = vset.pattern.permute.xlu0 10
      %1923 = vperm.xlu0 %1922, %v230
      %v1924 = vpop.permute.xlu0 %1923
      %1925 = vset.pattern.permute.xlu0 10
      %1926 = vperm.xlu0 %1925, %v231
      %v1927 = vpop.permute.xlu0 %1926
      %1928 = vset.pattern.permute.xlu0 10
      %1929 = vperm.xlu0 %1928, %v232
      %v1930 = vpop.permute.xlu0 %1929
      %1931 = vset.pattern.permute.xlu0 10
      %1932 = vperm.xlu0 %1931, %v233
      %v1933 = vpop.permute.xlu0 %1932
      %vm1934 = vcmp.eq.s32.totalorder %v1921, %v235
      %vm1935 = vcmp.eq.s32.totalorder %v1924, %v235
      %vm1936 = vcmp.eq.s32.totalorder %v1927, %v235
      %vm1937 = vcmp.eq.s32.totalorder %v1930, %v235
      %vm1938 = vcmp.eq.s32.totalorder %v1933, %v235
      %v1939 = vsel %vm1934, 1, 0
      %v1940 = vsel %vm1935, 1, 0
      %v1941 = vsel %vm1936, 1, 0
      %v1942 = vsel %vm1937, 1, 0
      %v1943 = vsel %vm1938, 1, 0
      %v1944 = vcvt.s32.f32 %v1939
      %v1945 = vcvt.s32.f32 %v1940
      %v1946 = vcvt.s32.f32 %v1941
      %v1947 = vcvt.s32.f32 %v1942
      %v1948 = vcvt.s32.f32 %v1943
      %v1949 = vpack.c.bf16 %v1945, %v1944
      %v1950 = vpack.c.bf16 %v1947, %v1946
      %v1951 = vpack.c.bf16 %v1948, %v1948
      %1952 = vmatprep.subr.bf16.mxu0 0
      %1953 = vmatpush1.bf16.msra.mxu0 %v641
      %1954 = vmatprep.subr.bf16.mxu0 0
      %1955 = vmatpush1.bf16.msra.mxu0 %v642
      %1956 = vmatprep.subr.bf16.mxu0 0
      %1957 = vmatpush1.bf16.msra.mxu0 %v643
      %1958 = vmatprep.subr.bf16.mxu0 0
      %1959 = vmatpush1.bf16.msra.mxu0 %v644
      %1960 = vmatprep.subr.bf16.mxu0 0
      %1961 = vmatpush1.bf16.msra.mxu0 %v645
      %1962 = vmatprep.subr.bf16.mxu0 0
      %1963 = vmatpush1.bf16.msra.mxu0 %v646
      %1964 = vmatprep.subr.bf16.mxu0 0
      %1965 = vmatpush1.bf16.msra.mxu0 %v647
      %1966 = vmatprep.subr.bf16.mxu0 0
      %1967 = vmatpush1.bf16.msra.mxu0 %v648
      %1968 = vmatprep.subr.bf16.mxu0 0
      %1969 = vmatpush1.bf16.msra.mxu0 %v649
      %1970 = vmatprep.subr.bf16.mxu0 0
      %1971 = vmatpush1.bf16.msra.mxu0 %v650
      %1972 = vmatprep.subr.bf16.mxu0 0
      %1973 = vmatpush1.bf16.msra.mxu0 %v651
      %1974 = vmatprep.subr.bf16.mxu0 0
      %1975 = vmatpush1.bf16.msra.mxu0 %v652
      %1976 = vmatprep.subr.bf16.mxu0 0
      %1977 = vmatpush1.bf16.msra.mxu0 %v653
      %1978 = vmatprep.subr.bf16.mxu0 0
      %1979 = vmatpush1.bf16.msra.mxu0 %v654
      %1980 = vmatprep.subr.bf16.mxu0 0
      %1981 = vmatpush1.bf16.msra.mxu0 %v655
      %1982 = vmatprep.subr.bf16.mxu0 0
      %1983 = vmatpush1.bf16.msra.mxu0 %v656
      %1984 = vmatprep.mubr.bf16.mxu0 %v1331
      %1985 = vmatmul.mubr.bf16.gmra.mrb[0].mxu0 %v1125
      %v1986 = vpop.f32.mrb[0].mxu0
      %v1987 = vadd.f32 0.0, %v1986
      %v1988 = vpop.f32.mrb[0].mxu0
      %v1989 = vpop.f32.mrb[0].mxu0
      %v1990 = vadd.f32 0.0, %v1989
      %v1991 = vpop.f32.mrb[0].mxu0
      %1992 = vmatprep.mubr.bf16.mxu0 %v1332
      %1993 = vmatmul.mubr.bf16.gmra.mrb[0].mxu0 %v1126
      %v1994 = vpop.f32.mrb[0].mxu0
      %v1995 = vadd.f32 0.0, %v1994
      %v1996 = vpop.f32.mrb[0].mxu0
      %v1997 = vpop.f32.mrb[0].mxu0
      %v1998 = vadd.f32 0.0, %v1997
      %v1999 = vpop.f32.mrb[0].mxu0
      %2000 = vmatprep.mubr.bf16.mxu0 %v1333
      %2001 = vmatmul.mubr.bf16.gmra.mrb[0].mxu0 %v1127
      %v2002 = vpop.f32.mrb[0].mxu0
      %v2003 = vadd.f32 0.0, %v2002
      %v2004 = vpop.f32.mrb[0].mxu0
      %v2005 = vpop.f32.mrb[0].mxu0
      %v2006 = vpop.f32.mrb[0].mxu0
      %2007 = vdwg.mxu0
      %2008 = vmatprep.subr.bf16.mxu0 0
      %2009 = vmatpush1.bf16.msra.mxu0 %v657
      %2010 = vmatprep.subr.bf16.mxu0 0
      %2011 = vmatpush1.bf16.msra.mxu0 %v658
      %2012 = vmatprep.subr.bf16.mxu0 0
      %2013 = vmatpush1.bf16.msra.mxu0 %v659
      %2014 = vmatprep.subr.bf16.mxu0 0
      %2015 = vmatpush1.bf16.msra.mxu0 %v660
      %2016 = vmatprep.subr.bf16.mxu0 0
      %2017 = vmatpush1.bf16.msra.mxu0 %v661
      %2018 = vmatprep.subr.bf16.mxu0 0
      %2019 = vmatpush1.bf16.msra.mxu0 %v662
      %2020 = vmatprep.subr.bf16.mxu0 0
      %2021 = vmatpush1.bf16.msra.mxu0 %v663
      %2022 = vmatprep.subr.bf16.mxu0 0
      %2023 = vmatpush1.bf16.msra.mxu0 %v664
      %2024 = vmatprep.subr.bf16.mxu0 0
      %2025 = vmatpush1.bf16.msra.mxu0 %v665
      %2026 = vmatprep.subr.bf16.mxu0 0
      %2027 = vmatpush1.bf16.msra.mxu0 %v666
      %2028 = vmatprep.subr.bf16.mxu0 0
      %2029 = vmatpush1.bf16.msra.mxu0 %v667
      %2030 = vmatprep.subr.bf16.mxu0 0
      %2031 = vmatpush1.bf16.msra.mxu0 %v668
      %2032 = vmatprep.subr.bf16.mxu0 0
      %2033 = vmatpush1.bf16.msra.mxu0 %v669
      %2034 = vmatprep.subr.bf16.mxu0 0
      %2035 = vmatpush1.bf16.msra.mxu0 %v670
      %2036 = vmatprep.subr.bf16.mxu0 0
      %2037 = vmatpush1.bf16.msra.mxu0 %v671
      %2038 = vmatprep.subr.bf16.mxu0 0
      %2039 = vmatpush1.bf16.msra.mxu0 %v672
      %2040 = vmatprep.mubr.bf16.mxu0 %v1743
      %2041 = vmatmul.mubr.bf16.gmra.mrb[0].mxu0 %v1537
      %v2042 = vpop.f32.mrb[0].mxu0
      %v2043 = vadd.f32 %v1987, %v2042
      %v2044 = vpop.f32.mrb[0].mxu0
      %v2045 = vpop.f32.mrb[0].mxu0
      %v2046 = vadd.f32 %v1990, %v2045
      %v2047 = vpop.f32.mrb[0].mxu0
      %2048 = vmatprep.mubr.bf16.mxu0 %v1744
      %2049 = vmatmul.mubr.bf16.gmra.mrb[0].mxu0 %v1538
      %v2050 = vpop.f32.mrb[0].mxu0
      %v2051 = vadd.f32 %v1995, %v2050
      %v2052 = vpop.f32.mrb[0].mxu0
      %v2053 = vpop.f32.mrb[0].mxu0
      %v2054 = vadd.f32 %v1998, %v2053
      %v2055 = vpop.f32.mrb[0].mxu0
      %2056 = vmatprep.mubr.bf16.mxu0 %v1745
      %2057 = vmatmul.mubr.bf16.gmra.mrb[0].mxu0 %v1539
      %v2058 = vpop.f32.mrb[0].mxu0
      %v2059 = vadd.f32 %v2003, %v2058
      %v2060 = vpop.f32.mrb[0].mxu0
      %v2061 = vpop.f32.mrb[0].mxu0
      %v2062 = vpop.f32.mrb[0].mxu0
      %2063 = vdwg.mxu0
      %2064 = vmatprep.subr.bf16.mxu0 0
      %2065 = vmatpush1.bf16.msra.mxu0 %v673
      %2066 = vmatprep.subr.bf16.mxu0 0
      %2067 = vmatpush1.bf16.msra.mxu0 %v674
      %2068 = vmatprep.subr.bf16.mxu0 0
      %2069 = vmatpush1.bf16.msra.mxu0 %v675
      %2070 = vmatprep.subr.bf16.mxu0 0
      %2071 = vmatpush1.bf16.msra.mxu0 %v676
      %2072 = vmatprep.subr.bf16.mxu0 0
      %2073 = vmatpush1.bf16.msra.mxu0 %v677
      %2074 = vmatprep.subr.bf16.mxu0 0
      %2075 = vmatpush1.bf16.msra.mxu0 %v678
      %2076 = vmatprep.subr.bf16.mxu0 0
      %2077 = vmatpush1.bf16.msra.mxu0 %v679
      %2078 = vmatprep.subr.bf16.mxu0 0
      %2079 = vmatpush1.bf16.msra.mxu0 %v680
      %2080 = vmatprep.subr.bf16.mxu0 0
      %2081 = vmatpush1.bf16.msra.mxu0 0
      %2082 = vmatprep.subr.bf16.mxu0 0
      %2083 = vmatpush1.bf16.msra.mxu0 0
      %2084 = vmatprep.subr.bf16.mxu0 0
      %2085 = vmatpush1.bf16.msra.mxu0 0
      %2086 = vmatprep.subr.bf16.mxu0 0
      %2087 = vmatpush1.bf16.msra.mxu0 0
      %2088 = vmatprep.subr.bf16.mxu0 0
      %2089 = vmatpush1.bf16.msra.mxu0 0
      %2090 = vmatprep.subr.bf16.mxu0 0
      %2091 = vmatpush1.bf16.msra.mxu0 0
      %2092 = vmatprep.subr.bf16.mxu0 0
      %2093 = vmatpush1.bf16.msra.mxu0 0
      %2094 = vmatprep.subr.bf16.mxu0 0
      %2095 = vmatpush1.bf16.msra.mxu0 0
      %2096 = vmatprep.mubr.bf16.mxu0 0
      %2097 = vmatmul.mubr.bf16.gmra.mrb[0].mxu0 %v1949
      %v2098 = vpop.f32.mrb[0].mxu0
      %v2099 = vadd.f32 %v2043, %v2098
      %v2100 = vpop.f32.mrb[0].mxu0
      %v2101 = vpop.f32.mrb[0].mxu0
      %v2102 = vadd.f32 %v2046, %v2101
      %v2103 = vpop.f32.mrb[0].mxu0
      %2104 = vmatprep.mubr.bf16.mxu0 0
      %2105 = vmatmul.mubr.bf16.gmra.mrb[0].mxu0 %v1950
      %v2106 = vpop.f32.mrb[0].mxu0
      %v2107 = vadd.f32 %v2051, %v2106
      %v2108 = vpop.f32.mrb[0].mxu0
      %v2109 = vpop.f32.mrb[0].mxu0
      %v2110 = vadd.f32 %v2054, %v2109
      %v2111 = vpop.f32.mrb[0].mxu0
      %2112 = vmatprep.mubr.bf16.mxu0 0
      %2113 = vmatmul.mubr.bf16.gmra.mrb[0].mxu0 %v1951
      %v2114 = vpop.f32.mrb[0].mxu0
      %v2115 = vadd.f32 %v2059, %v2114
      %v2116 = vpop.f32.mrb[0].mxu0
      %v2117 = vpop.f32.mrb[0].mxu0
      %v2118 = vpop.f32.mrb[0].mxu0
      %2119 = vdwg.mxu0
      %v2120 = vmax.f32 %v1914, %v2099
      %v2121 = vmax.f32 %v1915, %v2102
      %v2122 = vmax.f32 %v1916, %v2107
      %v2123 = vmax.f32 %v1917, %v2110
      %v2124 = vmax.f32 %v1918, %v2115
      %2125 = vset.pattern.permute.xlu0 11
      %2126 = vperm.xlu0 %2125, %v229
      %v2127 = vpop.permute.xlu0 %2126
      %2128 = vset.pattern.permute.xlu0 11
      %2129 = vperm.xlu0 %2128, %v230
      %v2130 = vpop.permute.xlu0 %2129
      %2131 = vset.pattern.permute.xlu0 11
      %2132 = vperm.xlu0 %2131, %v231
      %v2133 = vpop.permute.xlu0 %2132
      %2134 = vset.pattern.permute.xlu0 11
      %2135 = vperm.xlu0 %2134, %v232
      %v2136 = vpop.permute.xlu0 %2135
      %2137 = vset.pattern.permute.xlu0 11
      %2138 = vperm.xlu0 %2137, %v233
      %v2139 = vpop.permute.xlu0 %2138
      %vm2140 = vcmp.eq.s32.totalorder %v2127, %v235
      %vm2141 = vcmp.eq.s32.totalorder %v2130, %v235
      %vm2142 = vcmp.eq.s32.totalorder %v2133, %v235
      %vm2143 = vcmp.eq.s32.totalorder %v2136, %v235
      %vm2144 = vcmp.eq.s32.totalorder %v2139, %v235
      %v2145 = vsel %vm2140, 1, 0
      %v2146 = vsel %vm2141, 1, 0
      %v2147 = vsel %vm2142, 1, 0
      %v2148 = vsel %vm2143, 1, 0
      %v2149 = vsel %vm2144, 1, 0
      %v2150 = vcvt.s32.f32 %v2145
      %v2151 = vcvt.s32.f32 %v2146
      %v2152 = vcvt.s32.f32 %v2147
      %v2153 = vcvt.s32.f32 %v2148
      %v2154 = vcvt.s32.f32 %v2149
      %v2155 = vpack.c.bf16 %v2151, %v2150
      %v2156 = vpack.c.bf16 %v2153, %v2152
      %v2157 = vpack.c.bf16 %v2154, %v2154
      %2158 = vmatprep.subr.bf16.mxu0 0
      %2159 = vmatpush1.bf16.msra.mxu0 %v641
      %2160 = vmatprep.subr.bf16.mxu0 0
      %2161 = vmatpush1.bf16.msra.mxu0 %v642
      %2162 = vmatprep.subr.bf16.mxu0 0
      %2163 = vmatpush1.bf16.msra.mxu0 %v643
      %2164 = vmatprep.subr.bf16.mxu0 0
      %2165 = vmatpush1.bf16.msra.mxu0 %v644
      %2166 = vmatprep.subr.bf16.mxu0 0
      %2167 = vmatpush1.bf16.msra.mxu0 %v645
      %2168 = vmatprep.subr.bf16.mxu0 0
      %2169 = vmatpush1.bf16.msra.mxu0 %v646
      %2170 = vmatprep.subr.bf16.mxu0 0
      %2171 = vmatpush1.bf16.msra.mxu0 %v647
      %2172 = vmatprep.subr.bf16.mxu0 0
      %2173 = vmatpush1.bf16.msra.mxu0 %v648
      %2174 = vmatprep.subr.bf16.mxu0 0
      %2175 = vmatpush1.bf16.msra.mxu0 %v649
      %2176 = vmatprep.subr.bf16.mxu0 0
      %2177 = vmatpush1.bf16.msra.mxu0 %v650
      %2178 = vmatprep.subr.bf16.mxu0 0
      %2179 = vmatpush1.bf16.msra.mxu0 %v651
      %2180 = vmatprep.subr.bf16.mxu0 0
      %2181 = vmatpush1.bf16.msra.mxu0 %v652
      %2182 = vmatprep.subr.bf16.mxu0 0
      %2183 = vmatpush1.bf16.msra.mxu0 %v653
      %2184 = vmatprep.subr.bf16.mxu0 0
      %2185 = vmatpush1.bf16.msra.mxu0 %v654
      %2186 = vmatprep.subr.bf16.mxu0 0
      %2187 = vmatpush1.bf16.msra.mxu0 %v655
      %2188 = vmatprep.subr.bf16.mxu0 0
      %2189 = vmatpush1.bf16.msra.mxu0 %v656
      %2190 = vmatprep.mubr.bf16.mxu0 %v1537
      %2191 = vmatmul.mubr.bf16.gmra.mrb[0].mxu0 %v1331
      %v2192 = vpop.f32.mrb[0].mxu0
      %v2193 = vadd.f32 0.0, %v2192
      %v2194 = vpop.f32.mrb[0].mxu0
      %v2195 = vpop.f32.mrb[0].mxu0
      %v2196 = vadd.f32 0.0, %v2195
      %v2197 = vpop.f32.mrb[0].mxu0
      %2198 = vmatprep.mubr.bf16.mxu0 %v1538
      %2199 = vmatmul.mubr.bf16.gmra.mrb[0].mxu0 %v1332
      %v2200 = vpop.f32.mrb[0].mxu0
      %v2201 = vadd.f32 0.0, %v2200
      %v2202 = vpop.f32.mrb[0].mxu0
      %v2203 = vpop.f32.mrb[0].mxu0
      %v2204 = vadd.f32 0.0, %v2203
      %v2205 = vpop.f32.mrb[0].mxu0
      %2206 = vmatprep.mubr.bf16.mxu0 %v1539
      %2207 = vmatmul.mubr.bf16.gmra.mrb[0].mxu0 %v1333
      %v2208 = vpop.f32.mrb[0].mxu0
      %v2209 = vadd.f32 0.0, %v2208
      %v2210 = vpop.f32.mrb[0].mxu0
      %v2211 = vpop.f32.mrb[0].mxu0
      %v2212 = vpop.f32.mrb[0].mxu0
      %2213 = vdwg.mxu0
      %2214 = vmatprep.subr.bf16.mxu0 0
      %2215 = vmatpush1.bf16.msra.mxu0 %v657
      %2216 = vmatprep.subr.bf16.mxu0 0
      %2217 = vmatpush1.bf16.msra.mxu0 %v658
      %2218 = vmatprep.subr.bf16.mxu0 0
      %2219 = vmatpush1.bf16.msra.mxu0 %v659
      %2220 = vmatprep.subr.bf16.mxu0 0
      %2221 = vmatpush1.bf16.msra.mxu0 %v660
      %2222 = vmatprep.subr.bf16.mxu0 0
      %2223 = vmatpush1.bf16.msra.mxu0 %v661
      %2224 = vmatprep.subr.bf16.mxu0 0
      %2225 = vmatpush1.bf16.msra.mxu0 %v662
      %2226 = vmatprep.subr.bf16.mxu0 0
      %2227 = vmatpush1.bf16.msra.mxu0 %v663
      %2228 = vmatprep.subr.bf16.mxu0 0
      %2229 = vmatpush1.bf16.msra.mxu0 %v664
      %2230 = vmatprep.subr.bf16.mxu0 0
      %2231 = vmatpush1.bf16.msra.mxu0 %v665
      %2232 = vmatprep.subr.bf16.mxu0 0
      %2233 = vmatpush1.bf16.msra.mxu0 %v666
      %2234 = vmatprep.subr.bf16.mxu0 0
      %2235 = vmatpush1.bf16.msra.mxu0 %v667
      %2236 = vmatprep.subr.bf16.mxu0 0
      %2237 = vmatpush1.bf16.msra.mxu0 %v668
      %2238 = vmatprep.subr.bf16.mxu0 0
      %2239 = vmatpush1.bf16.msra.mxu0 %v669
      %2240 = vmatprep.subr.bf16.mxu0 0
      %2241 = vmatpush1.bf16.msra.mxu0 %v670
      %2242 = vmatprep.subr.bf16.mxu0 0
      %2243 = vmatpush1.bf16.msra.mxu0 %v671
      %2244 = vmatprep.subr.bf16.mxu0 0
      %2245 = vmatpush1.bf16.msra.mxu0 %v672
      %2246 = vmatprep.mubr.bf16.mxu0 %v1949
      %2247 = vmatmul.mubr.bf16.gmra.mrb[0].mxu0 %v1743
      %v2248 = vpop.f32.mrb[0].mxu0
      %v2249 = vadd.f32 %v2193, %v2248
      %v2250 = vpop.f32.mrb[0].mxu0
      %v2251 = vpop.f32.mrb[0].mxu0
      %v2252 = vadd.f32 %v2196, %v2251
      %v2253 = vpop.f32.mrb[0].mxu0
      %2254 = vmatprep.mubr.bf16.mxu0 %v1950
      %2255 = vmatmul.mubr.bf16.gmra.mrb[0].mxu0 %v1744
      %v2256 = vpop.f32.mrb[0].mxu0
      %v2257 = vadd.f32 %v2201, %v2256
      %v2258 = vpop.f32.mrb[0].mxu0
      %v2259 = vpop.f32.mrb[0].mxu0
      %v2260 = vadd.f32 %v2204, %v2259
      %v2261 = vpop.f32.mrb[0].mxu0
      %2262 = vmatprep.mubr.bf16.mxu0 %v1951
      %2263 = vmatmul.mubr.bf16.gmra.mrb[0].mxu0 %v1745
      %v2264 = vpop.f32.mrb[0].mxu0
      %v2265 = vadd.f32 %v2209, %v2264
      %v2266 = vpop.f32.mrb[0].mxu0
      %v2267 = vpop.f32.mrb[0].mxu0
      %v2268 = vpop.f32.mrb[0].mxu0
      %2269 = vdwg.mxu0
      %2270 = vmatprep.subr.bf16.mxu0 0
      %2271 = vmatpush1.bf16.msra.mxu0 %v673
      %2272 = vmatprep.subr.bf16.mxu0 0
      %2273 = vmatpush1.bf16.msra.mxu0 %v674
      %2274 = vmatprep.subr.bf16.mxu0 0
      %2275 = vmatpush1.bf16.msra.mxu0 %v675
      %2276 = vmatprep.subr.bf16.mxu0 0
      %2277 = vmatpush1.bf16.msra.mxu0 %v676
      %2278 = vmatprep.subr.bf16.mxu0 0
      %2279 = vmatpush1.bf16.msra.mxu0 %v677
      %2280 = vmatprep.subr.bf16.mxu0 0
      %2281 = vmatpush1.bf16.msra.mxu0 %v678
      %2282 = vmatprep.subr.bf16.mxu0 0
      %2283 = vmatpush1.bf16.msra.mxu0 %v679
      %2284 = vmatprep.subr.bf16.mxu0 0
      %2285 = vmatpush1.bf16.msra.mxu0 %v680
      %2286 = vmatprep.subr.bf16.mxu0 0
      %2287 = vmatpush1.bf16.msra.mxu0 0
      %2288 = vmatprep.subr.bf16.mxu0 0
      %2289 = vmatpush1.bf16.msra.mxu0 0
      %2290 = vmatprep.subr.bf16.mxu0 0
      %2291 = vmatpush1.bf16.msra.mxu0 0
      %2292 = vmatprep.subr.bf16.mxu0 0
      %2293 = vmatpush1.bf16.msra.mxu0 0
      %2294 = vmatprep.subr.bf16.mxu0 0
      %2295 = vmatpush1.bf16.msra.mxu0 0
      %2296 = vmatprep.subr.bf16.mxu0 0
      %2297 = vmatpush1.bf16.msra.mxu0 0
      %2298 = vmatprep.subr.bf16.mxu0 0
      %2299 = vmatpush1.bf16.msra.mxu0 0
      %2300 = vmatprep.subr.bf16.mxu0 0
      %2301 = vmatpush1.bf16.msra.mxu0 0
      %2302 = vmatprep.mubr.bf16.mxu0 0
      %2303 = vmatmul.mubr.bf16.gmra.mrb[0].mxu0 %v2155
      %v2304 = vpop.f32.mrb[0].mxu0
      %v2305 = vadd.f32 %v2249, %v2304
      %v2306 = vpop.f32.mrb[0].mxu0
      %v2307 = vpop.f32.mrb[0].mxu0
      %v2308 = vadd.f32 %v2252, %v2307
      %v2309 = vpop.f32.mrb[0].mxu0
      %2310 = vmatprep.mubr.bf16.mxu0 0
      %2311 = vmatmul.mubr.bf16.gmra.mrb[0].mxu0 %v2156
      %v2312 = vpop.f32.mrb[0].mxu0
      %v2313 = vadd.f32 %v2257, %v2312
      %v2314 = vpop.f32.mrb[0].mxu0
      %v2315 = vpop.f32.mrb[0].mxu0
      %v2316 = vadd.f32 %v2260, %v2315
      %v2317 = vpop.f32.mrb[0].mxu0
      %2318 = vmatprep.mubr.bf16.mxu0 0
      %2319 = vmatmul.mubr.bf16.gmra.mrb[0].mxu0 %v2157
      %v2320 = vpop.f32.mrb[0].mxu0
      %v2321 = vadd.f32 %v2265, %v2320
      %v2322 = vpop.f32.mrb[0].mxu0
      %v2323 = vpop.f32.mrb[0].mxu0
      %v2324 = vpop.f32.mrb[0].mxu0
      %2325 = vdwg.mxu0
      %v2326 = vmax.f32 %v2120, %v2305
      %v2327 = vmax.f32 %v2121, %v2308
      %v2328 = vmax.f32 %v2122, %v2313
      %v2329 = vmax.f32 %v2123, %v2316
      %v2330 = vmax.f32 %v2124, %v2321
      %2331 = vset.pattern.permute.xlu0 12
      %2332 = vperm.xlu0 %2331, %v229
      %v2333 = vpop.permute.xlu0 %2332
      %2334 = vset.pattern.permute.xlu0 12
      %2335 = vperm.xlu0 %2334, %v230
      %v2336 = vpop.permute.xlu0 %2335
      %2337 = vset.pattern.permute.xlu0 12
      %2338 = vperm.xlu0 %2337, %v231
      %v2339 = vpop.permute.xlu0 %2338
      %2340 = vset.pattern.permute.xlu0 12
      %2341 = vperm.xlu0 %2340, %v232
      %v2342 = vpop.permute.xlu0 %2341
      %2343 = vset.pattern.permute.xlu0 12
      %2344 = vperm.xlu0 %2343, %v233
      %v2345 = vpop.permute.xlu0 %2344
      %vm2346 = vcmp.eq.s32.totalorder %v2333, %v235
      %vm2347 = vcmp.eq.s32.totalorder %v2336, %v235
      %vm2348 = vcmp.eq.s32.totalorder %v2339, %v235
      %vm2349 = vcmp.eq.s32.totalorder %v2342, %v235
      %vm2350 = vcmp.eq.s32.totalorder %v2345, %v235
      %v2351 = vsel %vm2346, 1, 0
      %v2352 = vsel %vm2347, 1, 0
      %v2353 = vsel %vm2348, 1, 0
      %v2354 = vsel %vm2349, 1, 0
      %v2355 = vsel %vm2350, 1, 0
      %v2356 = vcvt.s32.f32 %v2351
      %v2357 = vcvt.s32.f32 %v2352
      %v2358 = vcvt.s32.f32 %v2353
      %v2359 = vcvt.s32.f32 %v2354
      %v2360 = vcvt.s32.f32 %v2355
      %v2361 = vpack.c.bf16 %v2357, %v2356
      %v2362 = vpack.c.bf16 %v2359, %v2358
      %v2363 = vpack.c.bf16 %v2360, %v2360
      %2364 = vmatprep.subr.bf16.mxu0 0
      %2365 = vmatpush1.bf16.msra.mxu0 %v641
      %2366 = vmatprep.subr.bf16.mxu0 0
      %2367 = vmatpush1.bf16.msra.mxu0 %v642
      %2368 = vmatprep.subr.bf16.mxu0 0
      %2369 = vmatpush1.bf16.msra.mxu0 %v643
      %2370 = vmatprep.subr.bf16.mxu0 0
      %2371 = vmatpush1.bf16.msra.mxu0 %v644
      %2372 = vmatprep.subr.bf16.mxu0 0
      %2373 = vmatpush1.bf16.msra.mxu0 %v645
      %2374 = vmatprep.subr.bf16.mxu0 0
      %2375 = vmatpush1.bf16.msra.mxu0 %v646
      %2376 = vmatprep.subr.bf16.mxu0 0
      %2377 = vmatpush1.bf16.msra.mxu0 %v647
      %2378 = vmatprep.subr.bf16.mxu0 0
      %2379 = vmatpush1.bf16.msra.mxu0 %v648
      %2380 = vmatprep.subr.bf16.mxu0 0
      %2381 = vmatpush1.bf16.msra.mxu0 %v649
      %2382 = vmatprep.subr.bf16.mxu0 0
      %2383 = vmatpush1.bf16.msra.mxu0 %v650
      %2384 = vmatprep.subr.bf16.mxu0 0
      %2385 = vmatpush1.bf16.msra.mxu0 %v651
      %2386 = vmatprep.subr.bf16.mxu0 0
      %2387 = vmatpush1.bf16.msra.mxu0 %v652
      %2388 = vmatprep.subr.bf16.mxu0 0
      %2389 = vmatpush1.bf16.msra.mxu0 %v653
      %2390 = vmatprep.subr.bf16.mxu0 0
      %2391 = vmatpush1.bf16.msra.mxu0 %v654
      %2392 = vmatprep.subr.bf16.mxu0 0
      %2393 = vmatpush1.bf16.msra.mxu0 %v655
      %2394 = vmatprep.subr.bf16.mxu0 0
      %2395 = vmatpush1.bf16.msra.mxu0 %v656
      %2396 = vmatprep.mubr.bf16.mxu0 %v1743
      %2397 = vmatmul.mubr.bf16.gmra.mrb[0].mxu0 %v1537
      %v2398 = vpop.f32.mrb[0].mxu0
      %v2399 = vadd.f32 0.0, %v2398
      %v2400 = vpop.f32.mrb[0].mxu0
      %v2401 = vpop.f32.mrb[0].mxu0
      %v2402 = vadd.f32 0.0, %v2401
      %v2403 = vpop.f32.mrb[0].mxu0
      %2404 = vmatprep.mubr.bf16.mxu0 %v1744
      %2405 = vmatmul.mubr.bf16.gmra.mrb[0].mxu0 %v1538
      %v2406 = vpop.f32.mrb[0].mxu0
      %v2407 = vadd.f32 0.0, %v2406
      %v2408 = vpop.f32.mrb[0].mxu0
      %v2409 = vpop.f32.mrb[0].mxu0
      %v2410 = vadd.f32 0.0, %v2409
      %v2411 = vpop.f32.mrb[0].mxu0
      %2412 = vmatprep.mubr.bf16.mxu0 %v1745
      %2413 = vmatmul.mubr.bf16.gmra.mrb[0].mxu0 %v1539
      %v2414 = vpop.f32.mrb[0].mxu0
      %v2415 = vadd.f32 0.0, %v2414
      %v2416 = vpop.f32.mrb[0].mxu0
      %v2417 = vpop.f32.mrb[0].mxu0
      %v2418 = vpop.f32.mrb[0].mxu0
      %2419 = vdwg.mxu0
      %2420 = vmatprep.subr.bf16.mxu0 0
      %2421 = vmatpush1.bf16.msra.mxu0 %v657
      %2422 = vmatprep.subr.bf16.mxu0 0
      %2423 = vmatpush1.bf16.msra.mxu0 %v658
      %2424 = vmatprep.subr.bf16.mxu0 0
      %2425 = vmatpush1.bf16.msra.mxu0 %v659
      %2426 = vmatprep.subr.bf16.mxu0 0
      %2427 = vmatpush1.bf16.msra.mxu0 %v660
      %2428 = vmatprep.subr.bf16.mxu0 0
      %2429 = vmatpush1.bf16.msra.mxu0 %v661
      %2430 = vmatprep.subr.bf16.mxu0 0
      %2431 = vmatpush1.bf16.msra.mxu0 %v662
      %2432 = vmatprep.subr.bf16.mxu0 0
      %2433 = vmatpush1.bf16.msra.mxu0 %v663
      %2434 = vmatprep.subr.bf16.mxu0 0
      %2435 = vmatpush1.bf16.msra.mxu0 %v664
      %2436 = vmatprep.subr.bf16.mxu0 0
      %2437 = vmatpush1.bf16.msra.mxu0 %v665
      %2438 = vmatprep.subr.bf16.mxu0 0
      %2439 = vmatpush1.bf16.msra.mxu0 %v666
      %2440 = vmatprep.subr.bf16.mxu0 0
      %2441 = vmatpush1.bf16.msra.mxu0 %v667
      %2442 = vmatprep.subr.bf16.mxu0 0
      %2443 = vmatpush1.bf16.msra.mxu0 %v668
      %2444 = vmatprep.subr.bf16.mxu0 0
      %2445 = vmatpush1.bf16.msra.mxu0 %v669
      %2446 = vmatprep.subr.bf16.mxu0 0
      %2447 = vmatpush1.bf16.msra.mxu0 %v670
      %2448 = vmatprep.subr.bf16.mxu0 0
      %2449 = vmatpush1.bf16.msra.mxu0 %v671
      %2450 = vmatprep.subr.bf16.mxu0 0
      %2451 = vmatpush1.bf16.msra.mxu0 %v672
      %2452 = vmatprep.mubr.bf16.mxu0 %v2155
      %2453 = vmatmul.mubr.bf16.gmra.mrb[0].mxu0 %v1949
      %v2454 = vpop.f32.mrb[0].mxu0
      %v2455 = vadd.f32 %v2399, %v2454
      %v2456 = vpop.f32.mrb[0].mxu0
      %v2457 = vpop.f32.mrb[0].mxu0
      %v2458 = vadd.f32 %v2402, %v2457
      %v2459 = vpop.f32.mrb[0].mxu0
      %2460 = vmatprep.mubr.bf16.mxu0 %v2156
      %2461 = vmatmul.mubr.bf16.gmra.mrb[0].mxu0 %v1950
      %v2462 = vpop.f32.mrb[0].mxu0
      %v2463 = vadd.f32 %v2407, %v2462
      %v2464 = vpop.f32.mrb[0].mxu0
      %v2465 = vpop.f32.mrb[0].mxu0
      %v2466 = vadd.f32 %v2410, %v2465
      %v2467 = vpop.f32.mrb[0].mxu0
      %2468 = vmatprep.mubr.bf16.mxu0 %v2157
      %2469 = vmatmul.mubr.bf16.gmra.mrb[0].mxu0 %v1951
      %v2470 = vpop.f32.mrb[0].mxu0
      %v2471 = vadd.f32 %v2415, %v2470
      %v2472 = vpop.f32.mrb[0].mxu0
      %v2473 = vpop.f32.mrb[0].mxu0
      %v2474 = vpop.f32.mrb[0].mxu0
      %2475 = vdwg.mxu0
      %2476 = vmatprep.subr.bf16.mxu0 0
      %2477 = vmatpush1.bf16.msra.mxu0 %v673
      %2478 = vmatprep.subr.bf16.mxu0 0
      %2479 = vmatpush1.bf16.msra.mxu0 %v674
      %2480 = vmatprep.subr.bf16.mxu0 0
      %2481 = vmatpush1.bf16.msra.mxu0 %v675
      %2482 = vmatprep.subr.bf16.mxu0 0
      %2483 = vmatpush1.bf16.msra.mxu0 %v676
      %2484 = vmatprep.subr.bf16.mxu0 0
      %2485 = vmatpush1.bf16.msra.mxu0 %v677
      %2486 = vmatprep.subr.bf16.mxu0 0
      %2487 = vmatpush1.bf16.msra.mxu0 %v678
      %2488 = vmatprep.subr.bf16.mxu0 0
      %2489 = vmatpush1.bf16.msra.mxu0 %v679
      %2490 = vmatprep.subr.bf16.mxu0 0
      %2491 = vmatpush1.bf16.msra.mxu0 %v680
      %2492 = vmatprep.subr.bf16.mxu0 0
      %2493 = vmatpush1.bf16.msra.mxu0 0
      %2494 = vmatprep.subr.bf16.mxu0 0
      %2495 = vmatpush1.bf16.msra.mxu0 0
      %2496 = vmatprep.subr.bf16.mxu0 0
      %2497 = vmatpush1.bf16.msra.mxu0 0
      %2498 = vmatprep.subr.bf16.mxu0 0
      %2499 = vmatpush1.bf16.msra.mxu0 0
      %2500 = vmatprep.subr.bf16.mxu0 0
      %2501 = vmatpush1.bf16.msra.mxu0 0
      %2502 = vmatprep.subr.bf16.mxu0 0
      %2503 = vmatpush1.bf16.msra.mxu0 0
      %2504 = vmatprep.subr.bf16.mxu0 0
      %2505 = vmatpush1.bf16.msra.mxu0 0
      %2506 = vmatprep.subr.bf16.mxu0 0
      %2507 = vmatpush1.bf16.msra.mxu0 0
      %2508 = vmatprep.mubr.bf16.mxu0 0
      %2509 = vmatmul.mubr.bf16.gmra.mrb[0].mxu0 %v2361
      %v2510 = vpop.f32.mrb[0].mxu0
      %v2511 = vadd.f32 %v2455, %v2510
      %v2512 = vpop.f32.mrb[0].mxu0
      %v2513 = vpop.f32.mrb[0].mxu0
      %v2514 = vadd.f32 %v2458, %v2513
      %v2515 = vpop.f32.mrb[0].mxu0
      %2516 = vmatprep.mubr.bf16.mxu0 0
      %2517 = vmatmul.mubr.bf16.gmra.mrb[0].mxu0 %v2362
      %v2518 = vpop.f32.mrb[0].mxu0
      %v2519 = vadd.f32 %v2463, %v2518
      %v2520 = vpop.f32.mrb[0].mxu0
      %v2521 = vpop.f32.mrb[0].mxu0
      %v2522 = vadd.f32 %v2466, %v2521
      %v2523 = vpop.f32.mrb[0].mxu0
      %2524 = vmatprep.mubr.bf16.mxu0 0
      %2525 = vmatmul.mubr.bf16.gmra.mrb[0].mxu0 %v2363
      %v2526 = vpop.f32.mrb[0].mxu0
      %v2527 = vadd.f32 %v2471, %v2526
      %v2528 = vpop.f32.mrb[0].mxu0
      %v2529 = vpop.f32.mrb[0].mxu0
      %v2530 = vpop.f32.mrb[0].mxu0
      %2531 = vdwg.mxu0
      %v2532 = vmax.f32 %v2326, %v2511
      %v2533 = vmax.f32 %v2327, %v2514
      %v2534 = vmax.f32 %v2328, %v2519
      %v2535 = vmax.f32 %v2329, %v2522
      %v2536 = vmax.f32 %v2330, %v2527
      %2537 = vset.pattern.permute.xlu0 13
      %2538 = vperm.xlu0 %2537, %v229
      %v2539 = vpop.permute.xlu0 %2538
      %2540 = vset.pattern.permute.xlu0 13
      %2541 = vperm.xlu0 %2540, %v230
      %v2542 = vpop.permute.xlu0 %2541
      %2543 = vset.pattern.permute.xlu0 13
      %2544 = vperm.xlu0 %2543, %v231
      %v2545 = vpop.permute.xlu0 %2544
      %2546 = vset.pattern.permute.xlu0 13
      %2547 = vperm.xlu0 %2546, %v232
      %v2548 = vpop.permute.xlu0 %2547
      %2549 = vset.pattern.permute.xlu0 13
      %2550 = vperm.xlu0 %2549, %v233
      %v2551 = vpop.permute.xlu0 %2550
      %vm2552 = vcmp.eq.s32.totalorder %v2539, %v235
      %vm2553 = vcmp.eq.s32.totalorder %v2542, %v235
      %vm2554 = vcmp.eq.s32.totalorder %v2545, %v235
      %vm2555 = vcmp.eq.s32.totalorder %v2548, %v235
      %vm2556 = vcmp.eq.s32.totalorder %v2551, %v235
      %v2557 = vsel %vm2552, 1, 0
      %v2558 = vsel %vm2553, 1, 0
      %v2559 = vsel %vm2554, 1, 0
      %v2560 = vsel %vm2555, 1, 0
      %v2561 = vsel %vm2556, 1, 0
      %v2562 = vcvt.s32.f32 %v2557
      %v2563 = vcvt.s32.f32 %v2558
      %v2564 = vcvt.s32.f32 %v2559
      %v2565 = vcvt.s32.f32 %v2560
      %v2566 = vcvt.s32.f32 %v2561
      %v2567 = vpack.c.bf16 %v2563, %v2562
      %v2568 = vpack.c.bf16 %v2565, %v2564
      %v2569 = vpack.c.bf16 %v2566, %v2566
      %2570 = vmatprep.subr.bf16.mxu0 0
      %2571 = vmatpush1.bf16.msra.mxu0 %v641
      %2572 = vmatprep.subr.bf16.mxu0 0
      %2573 = vmatpush1.bf16.msra.mxu0 %v642
      %2574 = vmatprep.subr.bf16.mxu0 0
      %2575 = vmatpush1.bf16.msra.mxu0 %v643
      %2576 = vmatprep.subr.bf16.mxu0 0
      %2577 = vmatpush1.bf16.msra.mxu0 %v644
      %2578 = vmatprep.subr.bf16.mxu0 0
      %2579 = vmatpush1.bf16.msra.mxu0 %v645
      %2580 = vmatprep.subr.bf16.mxu0 0
      %2581 = vmatpush1.bf16.msra.mxu0 %v646
      %2582 = vmatprep.subr.bf16.mxu0 0
      %2583 = vmatpush1.bf16.msra.mxu0 %v647
      %2584 = vmatprep.subr.bf16.mxu0 0
      %2585 = vmatpush1.bf16.msra.mxu0 %v648
      %2586 = vmatprep.subr.bf16.mxu0 0
      %2587 = vmatpush1.bf16.msra.mxu0 %v649
      %2588 = vmatprep.subr.bf16.mxu0 0
      %2589 = vmatpush1.bf16.msra.mxu0 %v650
      %2590 = vmatprep.subr.bf16.mxu0 0
      %2591 = vmatpush1.bf16.msra.mxu0 %v651
      %2592 = vmatprep.subr.bf16.mxu0 0
      %2593 = vmatpush1.bf16.msra.mxu0 %v652
      %2594 = vmatprep.subr.bf16.mxu0 0
      %2595 = vmatpush1.bf16.msra.mxu0 %v653
      %2596 = vmatprep.subr.bf16.mxu0 0
      %2597 = vmatpush1.bf16.msra.mxu0 %v654
      %2598 = vmatprep.subr.bf16.mxu0 0
      %2599 = vmatpush1.bf16.msra.mxu0 %v655
      %2600 = vmatprep.subr.bf16.mxu0 0
      %2601 = vmatpush1.bf16.msra.mxu0 %v656
      %2602 = vmatprep.mubr.bf16.mxu0 %v1949
      %2603 = vmatmul.mubr.bf16.gmra.mrb[0].mxu0 %v1743
      %v2604 = vpop.f32.mrb[0].mxu0
      %v2605 = vadd.f32 0.0, %v2604
      %v2606 = vpop.f32.mrb[0].mxu0
      %v2607 = vpop.f32.mrb[0].mxu0
      %v2608 = vadd.f32 0.0, %v2607
      %v2609 = vpop.f32.mrb[0].mxu0
      %2610 = vmatprep.mubr.bf16.mxu0 %v1950
      %2611 = vmatmul.mubr.bf16.gmra.mrb[0].mxu0 %v1744
      %v2612 = vpop.f32.mrb[0].mxu0
      %v2613 = vadd.f32 0.0, %v2612
      %v2614 = vpop.f32.mrb[0].mxu0
      %v2615 = vpop.f32.mrb[0].mxu0
      %v2616 = vadd.f32 0.0, %v2615
      %v2617 = vpop.f32.mrb[0].mxu0
      %2618 = vmatprep.mubr.bf16.mxu0 %v1951
      %2619 = vmatmul.mubr.bf16.gmra.mrb[0].mxu0 %v1745
      %v2620 = vpop.f32.mrb[0].mxu0
      %v2621 = vadd.f32 0.0, %v2620
      %v2622 = vpop.f32.mrb[0].mxu0
      %v2623 = vpop.f32.mrb[0].mxu0
      %v2624 = vpop.f32.mrb[0].mxu0
      %2625 = vdwg.mxu0
      %2626 = vmatprep.subr.bf16.mxu0 0
      %2627 = vmatpush1.bf16.msra.mxu0 %v657
      %2628 = vmatprep.subr.bf16.mxu0 0
      %2629 = vmatpush1.bf16.msra.mxu0 %v658
      %2630 = vmatprep.subr.bf16.mxu0 0
      %2631 = vmatpush1.bf16.msra.mxu0 %v659
      %2632 = vmatprep.subr.bf16.mxu0 0
      %2633 = vmatpush1.bf16.msra.mxu0 %v660
      %2634 = vmatprep.subr.bf16.mxu0 0
      %2635 = vmatpush1.bf16.msra.mxu0 %v661
      %2636 = vmatprep.subr.bf16.mxu0 0
      %2637 = vmatpush1.bf16.msra.mxu0 %v662
      %2638 = vmatprep.subr.bf16.mxu0 0
      %2639 = vmatpush1.bf16.msra.mxu0 %v663
      %2640 = vmatprep.subr.bf16.mxu0 0
      %2641 = vmatpush1.bf16.msra.mxu0 %v664
      %2642 = vmatprep.subr.bf16.mxu0 0
      %2643 = vmatpush1.bf16.msra.mxu0 %v665
      %2644 = vmatprep.subr.bf16.mxu0 0
      %2645 = vmatpush1.bf16.msra.mxu0 %v666
      %2646 = vmatprep.subr.bf16.mxu0 0
      %2647 = vmatpush1.bf16.msra.mxu0 %v667
      %2648 = vmatprep.subr.bf16.mxu0 0
      %2649 = vmatpush1.bf16.msra.mxu0 %v668
      %2650 = vmatprep.subr.bf16.mxu0 0
      %2651 = vmatpush1.bf16.msra.mxu0 %v669
      %2652 = vmatprep.subr.bf16.mxu0 0
      %2653 = vmatpush1.bf16.msra.mxu0 %v670
      %2654 = vmatprep.subr.bf16.mxu0 0
      %2655 = vmatpush1.bf16.msra.mxu0 %v671
      %2656 = vmatprep.subr.bf16.mxu0 0
      %2657 = vmatpush1.bf16.msra.mxu0 %v672
      %2658 = vmatprep.mubr.bf16.mxu0 %v2361
      %2659 = vmatmul.mubr.bf16.gmra.mrb[0].mxu0 %v2155
      %v2660 = vpop.f32.mrb[0].mxu0
      %v2661 = vadd.f32 %v2605, %v2660
      %v2662 = vpop.f32.mrb[0].mxu0
      %v2663 = vpop.f32.mrb[0].mxu0
      %v2664 = vadd.f32 %v2608, %v2663
      %v2665 = vpop.f32.mrb[0].mxu0
      %2666 = vmatprep.mubr.bf16.mxu0 %v2362
      %2667 = vmatmul.mubr.bf16.gmra.mrb[0].mxu0 %v2156
      %v2668 = vpop.f32.mrb[0].mxu0
      %v2669 = vadd.f32 %v2613, %v2668
      %v2670 = vpop.f32.mrb[0].mxu0
      %v2671 = vpop.f32.mrb[0].mxu0
      %v2672 = vadd.f32 %v2616, %v2671
      %v2673 = vpop.f32.mrb[0].mxu0
      %2674 = vmatprep.mubr.bf16.mxu0 %v2363
      %2675 = vmatmul.mubr.bf16.gmra.mrb[0].mxu0 %v2157
      %v2676 = vpop.f32.mrb[0].mxu0
      %v2677 = vadd.f32 %v2621, %v2676
      %v2678 = vpop.f32.mrb[0].mxu0
      %v2679 = vpop.f32.mrb[0].mxu0
      %v2680 = vpop.f32.mrb[0].mxu0
      %2681 = vdwg.mxu0
      %2682 = vmatprep.subr.bf16.mxu0 0
      %2683 = vmatpush1.bf16.msra.mxu0 %v673
      %2684 = vmatprep.subr.bf16.mxu0 0
      %2685 = vmatpush1.bf16.msra.mxu0 %v674
      %2686 = vmatprep.subr.bf16.mxu0 0
      %2687 = vmatpush1.bf16.msra.mxu0 %v675
      %2688 = vmatprep.subr.bf16.mxu0 0
      %2689 = vmatpush1.bf16.msra.mxu0 %v676
      %2690 = vmatprep.subr.bf16.mxu0 0
      %2691 = vmatpush1.bf16.msra.mxu0 %v677
      %2692 = vmatprep.subr.bf16.mxu0 0
      %2693 = vmatpush1.bf16.msra.mxu0 %v678
      %2694 = vmatprep.subr.bf16.mxu0 0
      %2695 = vmatpush1.bf16.msra.mxu0 %v679
      %2696 = vmatprep.subr.bf16.mxu0 0
      %2697 = vmatpush1.bf16.msra.mxu0 %v680
      %2698 = vmatprep.subr.bf16.mxu0 0
      %2699 = vmatpush1.bf16.msra.mxu0 0
      %2700 = vmatprep.subr.bf16.mxu0 0
      %2701 = vmatpush1.bf16.msra.mxu0 0
      %2702 = vmatprep.subr.bf16.mxu0 0
      %2703 = vmatpush1.bf16.msra.mxu0 0
      %2704 = vmatprep.subr.bf16.mxu0 0
      %2705 = vmatpush1.bf16.msra.mxu0 0
      %2706 = vmatprep.subr.bf16.mxu0 0
      %2707 = vmatpush1.bf16.msra.mxu0 0
      %2708 = vmatprep.subr.bf16.mxu0 0
      %2709 = vmatpush1.bf16.msra.mxu0 0
      %2710 = vmatprep.subr.bf16.mxu0 0
      %2711 = vmatpush1.bf16.msra.mxu0 0
      %2712 = vmatprep.subr.bf16.mxu0 0
      %2713 = vmatpush1.bf16.msra.mxu0 0
      %2714 = vmatprep.mubr.bf16.mxu0 0
      %2715 = vmatmul.mubr.bf16.gmra.mrb[0].mxu0 %v2567
      %v2716 = vpop.f32.mrb[0].mxu0
      %v2717 = vadd.f32 %v2661, %v2716
      %v2718 = vpop.f32.mrb[0].mxu0
      %v2719 = vpop.f32.mrb[0].mxu0
      %v2720 = vadd.f32 %v2664, %v2719
      %v2721 = vpop.f32.mrb[0].mxu0
      %2722 = vmatprep.mubr.bf16.mxu0 0
      %2723 = vmatmul.mubr.bf16.gmra.mrb[0].mxu0 %v2568
      %v2724 = vpop.f32.mrb[0].mxu0
      %v2725 = vadd.f32 %v2669, %v2724
      %v2726 = vpop.f32.mrb[0].mxu0
      %v2727 = vpop.f32.mrb[0].mxu0
      %v2728 = vadd.f32 %v2672, %v2727
      %v2729 = vpop.f32.mrb[0].mxu0
      %2730 = vmatprep.mubr.bf16.mxu0 0
      %2731 = vmatmul.mubr.bf16.gmra.mrb[0].mxu0 %v2569
      %v2732 = vpop.f32.mrb[0].mxu0
      %v2733 = vadd.f32 %v2677, %v2732
      %v2734 = vpop.f32.mrb[0].mxu0
      %v2735 = vpop.f32.mrb[0].mxu0
      %v2736 = vpop.f32.mrb[0].mxu0
      %2737 = vdwg.mxu0
      %v2738 = vmax.f32 %v2532, %v2717
      %v2739 = vmax.f32 %v2533, %v2720
      %v2740 = vmax.f32 %v2534, %v2725
      %v2741 = vmax.f32 %v2535, %v2728
      %v2742 = vmax.f32 %v2536, %v2733
      %2743 = vset.pattern.permute.xlu0 14
      %2744 = vperm.xlu0 %2743, %v229
      %v2745 = vpop.permute.xlu0 %2744
      %2746 = vset.pattern.permute.xlu0 14
      %2747 = vperm.xlu0 %2746, %v230
      %v2748 = vpop.permute.xlu0 %2747
      %2749 = vset.pattern.permute.xlu0 14
      %2750 = vperm.xlu0 %2749, %v231
      %v2751 = vpop.permute.xlu0 %2750
      %2752 = vset.pattern.permute.xlu0 14
      %2753 = vperm.xlu0 %2752, %v232
      %v2754 = vpop.permute.xlu0 %2753
      %2755 = vset.pattern.permute.xlu0 14
      %2756 = vperm.xlu0 %2755, %v233
      %v2757 = vpop.permute.xlu0 %2756
      %vm2758 = vcmp.eq.s32.totalorder %v2745, %v235
      %vm2759 = vcmp.eq.s32.totalorder %v2748, %v235
      %vm2760 = vcmp.eq.s32.totalorder %v2751, %v235
      %vm2761 = vcmp.eq.s32.totalorder %v2754, %v235
      %vm2762 = vcmp.eq.s32.totalorder %v2757, %v235
      %v2763 = vsel %vm2758, 1, 0
      %v2764 = vsel %vm2759, 1, 0
      %v2765 = vsel %vm2760, 1, 0
      %v2766 = vsel %vm2761, 1, 0
      %v2767 = vsel %vm2762, 1, 0
      %v2768 = vcvt.s32.f32 %v2763
      %v2769 = vcvt.s32.f32 %v2764
      %v2770 = vcvt.s32.f32 %v2765
      %v2771 = vcvt.s32.f32 %v2766
      %v2772 = vcvt.s32.f32 %v2767
      %v2773 = vpack.c.bf16 %v2769, %v2768
      %v2774 = vpack.c.bf16 %v2771, %v2770
      %v2775 = vpack.c.bf16 %v2772, %v2772
      %2776 = vmatprep.subr.bf16.mxu0 0
      %2777 = vmatpush1.bf16.msra.mxu0 %v641
      %2778 = vmatprep.subr.bf16.mxu0 0
      %2779 = vmatpush1.bf16.msra.mxu0 %v642
      %2780 = vmatprep.subr.bf16.mxu0 0
      %2781 = vmatpush1.bf16.msra.mxu0 %v643
      %2782 = vmatprep.subr.bf16.mxu0 0
      %2783 = vmatpush1.bf16.msra.mxu0 %v644
      %2784 = vmatprep.subr.bf16.mxu0 0
      %2785 = vmatpush1.bf16.msra.mxu0 %v645
      %2786 = vmatprep.subr.bf16.mxu0 0
      %2787 = vmatpush1.bf16.msra.mxu0 %v646
      %2788 = vmatprep.subr.bf16.mxu0 0
      %2789 = vmatpush1.bf16.msra.mxu0 %v647
      %2790 = vmatprep.subr.bf16.mxu0 0
      %2791 = vmatpush1.bf16.msra.mxu0 %v648
      %2792 = vmatprep.subr.bf16.mxu0 0
      %2793 = vmatpush1.bf16.msra.mxu0 %v649
      %2794 = vmatprep.subr.bf16.mxu0 0
      %2795 = vmatpush1.bf16.msra.mxu0 %v650
      %2796 = vmatprep.subr.bf16.mxu0 0
      %2797 = vmatpush1.bf16.msra.mxu0 %v651
      %2798 = vmatprep.subr.bf16.mxu0 0
      %2799 = vmatpush1.bf16.msra.mxu0 %v652
      %2800 = vmatprep.subr.bf16.mxu0 0
      %2801 = vmatpush1.bf16.msra.mxu0 %v653
      %2802 = vmatprep.subr.bf16.mxu0 0
      %2803 = vmatpush1.bf16.msra.mxu0 %v654
      %2804 = vmatprep.subr.bf16.mxu0 0
      %2805 = vmatpush1.bf16.msra.mxu0 %v655
      %2806 = vmatprep.subr.bf16.mxu0 0
      %2807 = vmatpush1.bf16.msra.mxu0 %v656
      %2808 = vmatprep.mubr.bf16.mxu0 %v2155
      %2809 = vmatmul.mubr.bf16.gmra.mrb[0].mxu0 %v1949
      %v2810 = vpop.f32.mrb[0].mxu0
      %v2811 = vadd.f32 0.0, %v2810
      %v2812 = vpop.f32.mrb[0].mxu0
      %v2813 = vpop.f32.mrb[0].mxu0
      %v2814 = vadd.f32 0.0, %v2813
      %v2815 = vpop.f32.mrb[0].mxu0
      %2816 = vmatprep.mubr.bf16.mxu0 %v2156
      %2817 = vmatmul.mubr.bf16.gmra.mrb[0].mxu0 %v1950
      %v2818 = vpop.f32.mrb[0].mxu0
      %v2819 = vadd.f32 0.0, %v2818
      %v2820 = vpop.f32.mrb[0].mxu0
      %v2821 = vpop.f32.mrb[0].mxu0
      %v2822 = vadd.f32 0.0, %v2821
      %v2823 = vpop.f32.mrb[0].mxu0
      %2824 = vmatprep.mubr.bf16.mxu0 %v2157
      %2825 = vmatmul.mubr.bf16.gmra.mrb[0].mxu0 %v1951
      %v2826 = vpop.f32.mrb[0].mxu0
      %v2827 = vadd.f32 0.0, %v2826
      %v2828 = vpop.f32.mrb[0].mxu0
      %v2829 = vpop.f32.mrb[0].mxu0
      %v2830 = vpop.f32.mrb[0].mxu0
      %2831 = vdwg.mxu0
      %2832 = vmatprep.subr.bf16.mxu0 0
      %2833 = vmatpush1.bf16.msra.mxu0 %v657
      %2834 = vmatprep.subr.bf16.mxu0 0
      %2835 = vmatpush1.bf16.msra.mxu0 %v658
      %2836 = vmatprep.subr.bf16.mxu0 0
      %2837 = vmatpush1.bf16.msra.mxu0 %v659
      %2838 = vmatprep.subr.bf16.mxu0 0
      %2839 = vmatpush1.bf16.msra.mxu0 %v660
      %2840 = vmatprep.subr.bf16.mxu0 0
      %2841 = vmatpush1.bf16.msra.mxu0 %v661
      %2842 = vmatprep.subr.bf16.mxu0 0
      %2843 = vmatpush1.bf16.msra.mxu0 %v662
      %2844 = vmatprep.subr.bf16.mxu0 0
      %2845 = vmatpush1.bf16.msra.mxu0 %v663
      %2846 = vmatprep.subr.bf16.mxu0 0
      %2847 = vmatpush1.bf16.msra.mxu0 %v664
      %2848 = vmatprep.subr.bf16.mxu0 0
      %2849 = vmatpush1.bf16.msra.mxu0 %v665
      %2850 = vmatprep.subr.bf16.mxu0 0
      %2851 = vmatpush1.bf16.msra.mxu0 %v666
      %2852 = vmatprep.subr.bf16.mxu0 0
      %2853 = vmatpush1.bf16.msra.mxu0 %v667
      %2854 = vmatprep.subr.bf16.mxu0 0
      %2855 = vmatpush1.bf16.msra.mxu0 %v668
      %2856 = vmatprep.subr.bf16.mxu0 0
      %2857 = vmatpush1.bf16.msra.mxu0 %v669
      %2858 = vmatprep.subr.bf16.mxu0 0
      %2859 = vmatpush1.bf16.msra.mxu0 %v670
      %2860 = vmatprep.subr.bf16.mxu0 0
      %2861 = vmatpush1.bf16.msra.mxu0 %v671
      %2862 = vmatprep.subr.bf16.mxu0 0
      %2863 = vmatpush1.bf16.msra.mxu0 %v672
      %2864 = vmatprep.mubr.bf16.mxu0 %v2567
      %2865 = vmatmul.mubr.bf16.gmra.mrb[0].mxu0 %v2361
      %v2866 = vpop.f32.mrb[0].mxu0
      %v2867 = vadd.f32 %v2811, %v2866
      %v2868 = vpop.f32.mrb[0].mxu0
      %v2869 = vpop.f32.mrb[0].mxu0
      %v2870 = vadd.f32 %v2814, %v2869
      %v2871 = vpop.f32.mrb[0].mxu0
      %2872 = vmatprep.mubr.bf16.mxu0 %v2568
      %2873 = vmatmul.mubr.bf16.gmra.mrb[0].mxu0 %v2362
      %v2874 = vpop.f32.mrb[0].mxu0
      %v2875 = vadd.f32 %v2819, %v2874
      %v2876 = vpop.f32.mrb[0].mxu0
      %v2877 = vpop.f32.mrb[0].mxu0
      %v2878 = vadd.f32 %v2822, %v2877
      %v2879 = vpop.f32.mrb[0].mxu0
      %2880 = vmatprep.mubr.bf16.mxu0 %v2569
      %2881 = vmatmul.mubr.bf16.gmra.mrb[0].mxu0 %v2363
      %v2882 = vpop.f32.mrb[0].mxu0
      %v2883 = vadd.f32 %v2827, %v2882
      %v2884 = vpop.f32.mrb[0].mxu0
      %v2885 = vpop.f32.mrb[0].mxu0
      %v2886 = vpop.f32.mrb[0].mxu0
      %2887 = vdwg.mxu0
      %2888 = vmatprep.subr.bf16.mxu0 0
      %2889 = vmatpush1.bf16.msra.mxu0 %v673
      %2890 = vmatprep.subr.bf16.mxu0 0
      %2891 = vmatpush1.bf16.msra.mxu0 %v674
      %2892 = vmatprep.subr.bf16.mxu0 0
      %2893 = vmatpush1.bf16.msra.mxu0 %v675
      %2894 = vmatprep.subr.bf16.mxu0 0
      %2895 = vmatpush1.bf16.msra.mxu0 %v676
      %2896 = vmatprep.subr.bf16.mxu0 0
      %2897 = vmatpush1.bf16.msra.mxu0 %v677
      %2898 = vmatprep.subr.bf16.mxu0 0
      %2899 = vmatpush1.bf16.msra.mxu0 %v678
      %2900 = vmatprep.subr.bf16.mxu0 0
      %2901 = vmatpush1.bf16.msra.mxu0 %v679
      %2902 = vmatprep.subr.bf16.mxu0 0
      %2903 = vmatpush1.bf16.msra.mxu0 %v680
      %2904 = vmatprep.subr.bf16.mxu0 0
      %2905 = vmatpush1.bf16.msra.mxu0 0
      %2906 = vmatprep.subr.bf16.mxu0 0
      %2907 = vmatpush1.bf16.msra.mxu0 0
      %2908 = vmatprep.subr.bf16.mxu0 0
      %2909 = vmatpush1.bf16.msra.mxu0 0
      %2910 = vmatprep.subr.bf16.mxu0 0
      %2911 = vmatpush1.bf16.msra.mxu0 0
      %2912 = vmatprep.subr.bf16.mxu0 0
      %2913 = vmatpush1.bf16.msra.mxu0 0
      %2914 = vmatprep.subr.bf16.mxu0 0
      %2915 = vmatpush1.bf16.msra.mxu0 0
      %2916 = vmatprep.subr.bf16.mxu0 0
      %2917 = vmatpush1.bf16.msra.mxu0 0
      %2918 = vmatprep.subr.bf16.mxu0 0
      %2919 = vmatpush1.bf16.msra.mxu0 0
      %2920 = vmatprep.mubr.bf16.mxu0 0
      %2921 = vmatmul.mubr.bf16.gmra.mrb[0].mxu0 %v2773
      %v2922 = vpop.f32.mrb[0].mxu0
      %v2923 = vadd.f32 %v2867, %v2922
      %v2924 = vpop.f32.mrb[0].mxu0
      %v2925 = vpop.f32.mrb[0].mxu0
      %v2926 = vadd.f32 %v2870, %v2925
      %v2927 = vpop.f32.mrb[0].mxu0
      %2928 = vmatprep.mubr.bf16.mxu0 0
      %2929 = vmatmul.mubr.bf16.gmra.mrb[0].mxu0 %v2774
      %v2930 = vpop.f32.mrb[0].mxu0
      %v2931 = vadd.f32 %v2875, %v2930
      %v2932 = vpop.f32.mrb[0].mxu0
      %v2933 = vpop.f32.mrb[0].mxu0
      %v2934 = vadd.f32 %v2878, %v2933
      %v2935 = vpop.f32.mrb[0].mxu0
      %2936 = vmatprep.mubr.bf16.mxu0 0
      %2937 = vmatmul.mubr.bf16.gmra.mrb[0].mxu0 %v2775
      %v2938 = vpop.f32.mrb[0].mxu0
      %v2939 = vadd.f32 %v2883, %v2938
      %v2940 = vpop.f32.mrb[0].mxu0
      %v2941 = vpop.f32.mrb[0].mxu0
      %v2942 = vpop.f32.mrb[0].mxu0
      %2943 = vdwg.mxu0
      %v2944 = vmax.f32 %v2738, %v2923
      %v2945 = vmax.f32 %v2739, %v2926
      %v2946 = vmax.f32 %v2740, %v2931
      %v2947 = vmax.f32 %v2741, %v2934
      %v2948 = vmax.f32 %v2742, %v2939
      %2949 = vset.pattern.permute.xlu0 15
      %2950 = vperm.xlu0 %2949, %v229
      %v2951 = vpop.permute.xlu0 %2950
      %2952 = vset.pattern.permute.xlu0 15
      %2953 = vperm.xlu0 %2952, %v230
      %v2954 = vpop.permute.xlu0 %2953
      %2955 = vset.pattern.permute.xlu0 15
      %2956 = vperm.xlu0 %2955, %v231
      %v2957 = vpop.permute.xlu0 %2956
      %2958 = vset.pattern.permute.xlu0 15
      %2959 = vperm.xlu0 %2958, %v232
      %v2960 = vpop.permute.xlu0 %2959
      %2961 = vset.pattern.permute.xlu0 15
      %2962 = vperm.xlu0 %2961, %v233
      %v2963 = vpop.permute.xlu0 %2962
      %vm2964 = vcmp.eq.s32.totalorder %v2951, %v235
      %vm2965 = vcmp.eq.s32.totalorder %v2954, %v235
      %vm2966 = vcmp.eq.s32.totalorder %v2957, %v235
      %vm2967 = vcmp.eq.s32.totalorder %v2960, %v235
      %vm2968 = vcmp.eq.s32.totalorder %v2963, %v235
      %v2969 = vsel %vm2964, 1, 0
      %v2970 = vsel %vm2965, 1, 0
      %v2971 = vsel %vm2966, 1, 0
      %v2972 = vsel %vm2967, 1, 0
      %v2973 = vsel %vm2968, 1, 0
      %v2974 = vcvt.s32.f32 %v2969
      %v2975 = vcvt.s32.f32 %v2970
      %v2976 = vcvt.s32.f32 %v2971
      %v2977 = vcvt.s32.f32 %v2972
      %v2978 = vcvt.s32.f32 %v2973
      %v2979 = vpack.c.bf16 %v2975, %v2974
      %v2980 = vpack.c.bf16 %v2977, %v2976
      %v2981 = vpack.c.bf16 %v2978, %v2978
      %2982 = vmatprep.subr.bf16.mxu0 0
      %2983 = vmatpush1.bf16.msra.mxu0 %v641
      %2984 = vmatprep.subr.bf16.mxu0 0
      %2985 = vmatpush1.bf16.msra.mxu0 %v642
      %2986 = vmatprep.subr.bf16.mxu0 0
      %2987 = vmatpush1.bf16.msra.mxu0 %v643
      %2988 = vmatprep.subr.bf16.mxu0 0
      %2989 = vmatpush1.bf16.msra.mxu0 %v644
      %2990 = vmatprep.subr.bf16.mxu0 0
      %2991 = vmatpush1.bf16.msra.mxu0 %v645
      %2992 = vmatprep.subr.bf16.mxu0 0
      %2993 = vmatpush1.bf16.msra.mxu0 %v646
      %2994 = vmatprep.subr.bf16.mxu0 0
      %2995 = vmatpush1.bf16.msra.mxu0 %v647
      %2996 = vmatprep.subr.bf16.mxu0 0
      %2997 = vmatpush1.bf16.msra.mxu0 %v648
      %2998 = vmatprep.subr.bf16.mxu0 0
      %2999 = vmatpush1.bf16.msra.mxu0 %v649
      %3000 = vmatprep.subr.bf16.mxu0 0
      %3001 = vmatpush1.bf16.msra.mxu0 %v650
      %3002 = vmatprep.subr.bf16.mxu0 0
      %3003 = vmatpush1.bf16.msra.mxu0 %v651
      %3004 = vmatprep.subr.bf16.mxu0 0
      %3005 = vmatpush1.bf16.msra.mxu0 %v652
      %3006 = vmatprep.subr.bf16.mxu0 0
      %3007 = vmatpush1.bf16.msra.mxu0 %v653
      %3008 = vmatprep.subr.bf16.mxu0 0
      %3009 = vmatpush1.bf16.msra.mxu0 %v654
      %3010 = vmatprep.subr.bf16.mxu0 0
      %3011 = vmatpush1.bf16.msra.mxu0 %v655
      %3012 = vmatprep.subr.bf16.mxu0 0
      %3013 = vmatpush1.bf16.msra.mxu0 %v656
      %3014 = vmatprep.mubr.bf16.mxu0 %v2361
      %3015 = vmatmul.mubr.bf16.gmra.mrb[0].mxu0 %v2155
      %v3016 = vpop.f32.mrb[0].mxu0
      %v3017 = vadd.f32 0.0, %v3016
      %v3018 = vpop.f32.mrb[0].mxu0
      %v3019 = vpop.f32.mrb[0].mxu0
      %v3020 = vadd.f32 0.0, %v3019
      %v3021 = vpop.f32.mrb[0].mxu0
      %3022 = vmatprep.mubr.bf16.mxu0 %v2362
      %3023 = vmatmul.mubr.bf16.gmra.mrb[0].mxu0 %v2156
      %v3024 = vpop.f32.mrb[0].mxu0
      %v3025 = vadd.f32 0.0, %v3024
      %v3026 = vpop.f32.mrb[0].mxu0
      %v3027 = vpop.f32.mrb[0].mxu0
      %v3028 = vadd.f32 0.0, %v3027
      %v3029 = vpop.f32.mrb[0].mxu0
      %3030 = vmatprep.mubr.bf16.mxu0 %v2363
      %3031 = vmatmul.mubr.bf16.gmra.mrb[0].mxu0 %v2157
      %v3032 = vpop.f32.mrb[0].mxu0
      %v3033 = vadd.f32 0.0, %v3032
      %v3034 = vpop.f32.mrb[0].mxu0
      %v3035 = vpop.f32.mrb[0].mxu0
      %v3036 = vpop.f32.mrb[0].mxu0
      %3037 = vdwg.mxu0
      %3038 = vmatprep.subr.bf16.mxu0 0
      %3039 = vmatpush1.bf16.msra.mxu0 %v657
      %3040 = vmatprep.subr.bf16.mxu0 0
      %3041 = vmatpush1.bf16.msra.mxu0 %v658
      %3042 = vmatprep.subr.bf16.mxu0 0
      %3043 = vmatpush1.bf16.msra.mxu0 %v659
      %3044 = vmatprep.subr.bf16.mxu0 0
      %3045 = vmatpush1.bf16.msra.mxu0 %v660
      %3046 = vmatprep.subr.bf16.mxu0 0
      %3047 = vmatpush1.bf16.msra.mxu0 %v661
      %3048 = vmatprep.subr.bf16.mxu0 0
      %3049 = vmatpush1.bf16.msra.mxu0 %v662
      %3050 = vmatprep.subr.bf16.mxu0 0
      %3051 = vmatpush1.bf16.msra.mxu0 %v663
      %3052 = vmatprep.subr.bf16.mxu0 0
      %3053 = vmatpush1.bf16.msra.mxu0 %v664
      %3054 = vmatprep.subr.bf16.mxu0 0
      %3055 = vmatpush1.bf16.msra.mxu0 %v665
      %3056 = vmatprep.subr.bf16.mxu0 0
      %3057 = vmatpush1.bf16.msra.mxu0 %v666
      %3058 = vmatprep.subr.bf16.mxu0 0
      %3059 = vmatpush1.bf16.msra.mxu0 %v667
      %3060 = vmatprep.subr.bf16.mxu0 0
      %3061 = vmatpush1.bf16.msra.mxu0 %v668
      %3062 = vmatprep.subr.bf16.mxu0 0
      %3063 = vmatpush1.bf16.msra.mxu0 %v669
      %3064 = vmatprep.subr.bf16.mxu0 0
      %3065 = vmatpush1.bf16.msra.mxu0 %v670
      %3066 = vmatprep.subr.bf16.mxu0 0
      %3067 = vmatpush1.bf16.msra.mxu0 %v671
      %3068 = vmatprep.subr.bf16.mxu0 0
      %3069 = vmatpush1.bf16.msra.mxu0 %v672
      %3070 = vmatprep.mubr.bf16.mxu0 %v2773
      %3071 = vmatmul.mubr.bf16.gmra.mrb[0].mxu0 %v2567
      %v3072 = vpop.f32.mrb[0].mxu0
      %v3073 = vadd.f32 %v3017, %v3072
      %v3074 = vpop.f32.mrb[0].mxu0
      %v3075 = vpop.f32.mrb[0].mxu0
      %v3076 = vadd.f32 %v3020, %v3075
      %v3077 = vpop.f32.mrb[0].mxu0
      %3078 = vmatprep.mubr.bf16.mxu0 %v2774
      %3079 = vmatmul.mubr.bf16.gmra.mrb[0].mxu0 %v2568
      %v3080 = vpop.f32.mrb[0].mxu0
      %v3081 = vadd.f32 %v3025, %v3080
      %v3082 = vpop.f32.mrb[0].mxu0
      %v3083 = vpop.f32.mrb[0].mxu0
      %v3084 = vadd.f32 %v3028, %v3083
      %v3085 = vpop.f32.mrb[0].mxu0
      %3086 = vmatprep.mubr.bf16.mxu0 %v2775
      %3087 = vmatmul.mubr.bf16.gmra.mrb[0].mxu0 %v2569
      %v3088 = vpop.f32.mrb[0].mxu0
      %v3089 = vadd.f32 %v3033, %v3088
      %v3090 = vpop.f32.mrb[0].mxu0
      %v3091 = vpop.f32.mrb[0].mxu0
      %v3092 = vpop.f32.mrb[0].mxu0
      %3093 = vdwg.mxu0
      %3094 = vmatprep.subr.bf16.mxu0 0
      %3095 = vmatpush1.bf16.msra.mxu0 %v673
      %3096 = vmatprep.subr.bf16.mxu0 0
      %3097 = vmatpush1.bf16.msra.mxu0 %v674
      %3098 = vmatprep.subr.bf16.mxu0 0
      %3099 = vmatpush1.bf16.msra.mxu0 %v675
      %3100 = vmatprep.subr.bf16.mxu0 0
      %3101 = vmatpush1.bf16.msra.mxu0 %v676
      %3102 = vmatprep.subr.bf16.mxu0 0
      %3103 = vmatpush1.bf16.msra.mxu0 %v677
      %3104 = vmatprep.subr.bf16.mxu0 0
      %3105 = vmatpush1.bf16.msra.mxu0 %v678
      %3106 = vmatprep.subr.bf16.mxu0 0
      %3107 = vmatpush1.bf16.msra.mxu0 %v679
      %3108 = vmatprep.subr.bf16.mxu0 0
      %3109 = vmatpush1.bf16.msra.mxu0 %v680
      %3110 = vmatprep.subr.bf16.mxu0 0
      %3111 = vmatpush1.bf16.msra.mxu0 0
      %3112 = vmatprep.subr.bf16.mxu0 0
      %3113 = vmatpush1.bf16.msra.mxu0 0
      %3114 = vmatprep.subr.bf16.mxu0 0
      %3115 = vmatpush1.bf16.msra.mxu0 0
      %3116 = vmatprep.subr.bf16.mxu0 0
      %3117 = vmatpush1.bf16.msra.mxu0 0
      %3118 = vmatprep.subr.bf16.mxu0 0
      %3119 = vmatpush1.bf16.msra.mxu0 0
      %3120 = vmatprep.subr.bf16.mxu0 0
      %3121 = vmatpush1.bf16.msra.mxu0 0
      %3122 = vmatprep.subr.bf16.mxu0 0
      %3123 = vmatpush1.bf16.msra.mxu0 0
      %3124 = vmatprep.subr.bf16.mxu0 0
      %3125 = vmatpush1.bf16.msra.mxu0 0
      %3126 = vmatprep.mubr.bf16.mxu0 0
      %3127 = vmatmul.mubr.bf16.gmra.mrb[0].mxu0 %v2979
      %v3128 = vpop.f32.mrb[0].mxu0
      %v3129 = vadd.f32 %v3073, %v3128
      %v3130 = vpop.f32.mrb[0].mxu0
      %v3131 = vpop.f32.mrb[0].mxu0
      %v3132 = vadd.f32 %v3076, %v3131
      %v3133 = vpop.f32.mrb[0].mxu0
      %3134 = vmatprep.mubr.bf16.mxu0 0
      %3135 = vmatmul.mubr.bf16.gmra.mrb[0].mxu0 %v2980
      %v3136 = vpop.f32.mrb[0].mxu0
      %v3137 = vadd.f32 %v3081, %v3136
      %v3138 = vpop.f32.mrb[0].mxu0
      %v3139 = vpop.f32.mrb[0].mxu0
      %v3140 = vadd.f32 %v3084, %v3139
      %v3141 = vpop.f32.mrb[0].mxu0
      %3142 = vmatprep.mubr.bf16.mxu0 0
      %3143 = vmatmul.mubr.bf16.gmra.mrb[0].mxu0 %v2981
      %v3144 = vpop.f32.mrb[0].mxu0
      %v3145 = vadd.f32 %v3089, %v3144
      %v3146 = vpop.f32.mrb[0].mxu0
      %v3147 = vpop.f32.mrb[0].mxu0
      %v3148 = vpop.f32.mrb[0].mxu0
      %3149 = vdwg.mxu0
      %v3150 = vmax.f32 %v2944, %v3129
      %v3151 = vmax.f32 %v2945, %v3132
      %v3152 = vmax.f32 %v2946, %v3137
      %v3153 = vmax.f32 %v2947, %v3140
      %v3154 = vmax.f32 %v2948, %v3145
      %3155 = vset.pattern.permute.xlu0 16
      %3156 = vperm.xlu0 %3155, %v229
      %v3157 = vpop.permute.xlu0 %3156
      %3158 = vset.pattern.permute.xlu0 16
      %3159 = vperm.xlu0 %3158, %v230
      %v3160 = vpop.permute.xlu0 %3159
      %3161 = vset.pattern.permute.xlu0 16
      %3162 = vperm.xlu0 %3161, %v231
      %v3163 = vpop.permute.xlu0 %3162
      %3164 = vset.pattern.permute.xlu0 16
      %3165 = vperm.xlu0 %3164, %v232
      %v3166 = vpop.permute.xlu0 %3165
      %3167 = vset.pattern.permute.xlu0 16
      %3168 = vperm.xlu0 %3167, %v233
      %v3169 = vpop.permute.xlu0 %3168
      %vm3170 = vcmp.eq.s32.totalorder %v3157, %v235
      %vm3171 = vcmp.eq.s32.totalorder %v3160, %v235
      %vm3172 = vcmp.eq.s32.totalorder %v3163, %v235
      %vm3173 = vcmp.eq.s32.totalorder %v3166, %v235
      %vm3174 = vcmp.eq.s32.totalorder %v3169, %v235
      %v3175 = vsel %vm3170, 1, 0
      %v3176 = vsel %vm3171, 1, 0
      %v3177 = vsel %vm3172, 1, 0
      %v3178 = vsel %vm3173, 1, 0
      %v3179 = vsel %vm3174, 1, 0
      %v3180 = vcvt.s32.f32 %v3175
      %v3181 = vcvt.s32.f32 %v3176
      %v3182 = vcvt.s32.f32 %v3177
      %v3183 = vcvt.s32.f32 %v3178
      %v3184 = vcvt.s32.f32 %v3179
      %v3185 = vpack.c.bf16 %v3181, %v3180
      %v3186 = vpack.c.bf16 %v3183, %v3182
      %v3187 = vpack.c.bf16 %v3184, %v3184
      %3188 = vmatprep.subr.bf16.mxu0 0
      %3189 = vmatpush1.bf16.msra.mxu0 %v641
      %3190 = vmatprep.subr.bf16.mxu0 0
      %3191 = vmatpush1.bf16.msra.mxu0 %v642
      %3192 = vmatprep.subr.bf16.mxu0 0
      %3193 = vmatpush1.bf16.msra.mxu0 %v643
      %3194 = vmatprep.subr.bf16.mxu0 0
      %3195 = vmatpush1.bf16.msra.mxu0 %v644
      %3196 = vmatprep.subr.bf16.mxu0 0
      %3197 = vmatpush1.bf16.msra.mxu0 %v645
      %3198 = vmatprep.subr.bf16.mxu0 0
      %3199 = vmatpush1.bf16.msra.mxu0 %v646
      %3200 = vmatprep.subr.bf16.mxu0 0
      %3201 = vmatpush1.bf16.msra.mxu0 %v647
      %3202 = vmatprep.subr.bf16.mxu0 0
      %3203 = vmatpush1.bf16.msra.mxu0 %v648
      %3204 = vmatprep.subr.bf16.mxu0 0
      %3205 = vmatpush1.bf16.msra.mxu0 %v649
      %3206 = vmatprep.subr.bf16.mxu0 0
      %3207 = vmatpush1.bf16.msra.mxu0 %v650
      %3208 = vmatprep.subr.bf16.mxu0 0
      %3209 = vmatpush1.bf16.msra.mxu0 %v651
      %3210 = vmatprep.subr.bf16.mxu0 0
      %3211 = vmatpush1.bf16.msra.mxu0 %v652
      %3212 = vmatprep.subr.bf16.mxu0 0
      %3213 = vmatpush1.bf16.msra.mxu0 %v653
      %3214 = vmatprep.subr.bf16.mxu0 0
      %3215 = vmatpush1.bf16.msra.mxu0 %v654
      %3216 = vmatprep.subr.bf16.mxu0 0
      %3217 = vmatpush1.bf16.msra.mxu0 %v655
      %3218 = vmatprep.subr.bf16.mxu0 0
      %3219 = vmatpush1.bf16.msra.mxu0 %v656
      %3220 = vmatprep.mubr.bf16.mxu0 %v2567
      %3221 = vmatmul.mubr.bf16.gmra.mrb[0].mxu0 %v2361
      %v3222 = vpop.f32.mrb[0].mxu0
      %v3223 = vadd.f32 0.0, %v3222
      %v3224 = vpop.f32.mrb[0].mxu0
      %v3225 = vpop.f32.mrb[0].mxu0
      %v3226 = vadd.f32 0.0, %v3225
      %v3227 = vpop.f32.mrb[0].mxu0
      %3228 = vmatprep.mubr.bf16.mxu0 %v2568
      %3229 = vmatmul.mubr.bf16.gmra.mrb[0].mxu0 %v2362
      %v3230 = vpop.f32.mrb[0].mxu0
      %v3231 = vadd.f32 0.0, %v3230
      %v3232 = vpop.f32.mrb[0].mxu0
      %v3233 = vpop.f32.mrb[0].mxu0
      %v3234 = vadd.f32 0.0, %v3233
      %v3235 = vpop.f32.mrb[0].mxu0
      %3236 = vmatprep.mubr.bf16.mxu0 %v2569
      %3237 = vmatmul.mubr.bf16.gmra.mrb[0].mxu0 %v2363
      %v3238 = vpop.f32.mrb[0].mxu0
      %v3239 = vadd.f32 0.0, %v3238
      %v3240 = vpop.f32.mrb[0].mxu0
      %v3241 = vpop.f32.mrb[0].mxu0
      %v3242 = vpop.f32.mrb[0].mxu0
      %3243 = vdwg.mxu0
      %3244 = vmatprep.subr.bf16.mxu0 0
      %3245 = vmatpush1.bf16.msra.mxu0 %v657
      %3246 = vmatprep.subr.bf16.mxu0 0
      %3247 = vmatpush1.bf16.msra.mxu0 %v658
      %3248 = vmatprep.subr.bf16.mxu0 0
      %3249 = vmatpush1.bf16.msra.mxu0 %v659
      %3250 = vmatprep.subr.bf16.mxu0 0
      %3251 = vmatpush1.bf16.msra.mxu0 %v660
      %3252 = vmatprep.subr.bf16.mxu0 0
      %3253 = vmatpush1.bf16.msra.mxu0 %v661
      %3254 = vmatprep.subr.bf16.mxu0 0
      %3255 = vmatpush1.bf16.msra.mxu0 %v662
      %3256 = vmatprep.subr.bf16.mxu0 0
      %3257 = vmatpush1.bf16.msra.mxu0 %v663
      %3258 = vmatprep.subr.bf16.mxu0 0
      %3259 = vmatpush1.bf16.msra.mxu0 %v664
      %3260 = vmatprep.subr.bf16.mxu0 0
      %3261 = vmatpush1.bf16.msra.mxu0 %v665
      %3262 = vmatprep.subr.bf16.mxu0 0
      %3263 = vmatpush1.bf16.msra.mxu0 %v666
      %3264 = vmatprep.subr.bf16.mxu0 0
      %3265 = vmatpush1.bf16.msra.mxu0 %v667
      %3266 = vmatprep.subr.bf16.mxu0 0
      %3267 = vmatpush1.bf16.msra.mxu0 %v668
      %3268 = vmatprep.subr.bf16.mxu0 0
      %3269 = vmatpush1.bf16.msra.mxu0 %v669
      %3270 = vmatprep.subr.bf16.mxu0 0
      %3271 = vmatpush1.bf16.msra.mxu0 %v670
      %3272 = vmatprep.subr.bf16.mxu0 0
      %3273 = vmatpush1.bf16.msra.mxu0 %v671
      %3274 = vmatprep.subr.bf16.mxu0 0
      %3275 = vmatpush1.bf16.msra.mxu0 %v672
      %3276 = vmatprep.mubr.bf16.mxu0 %v2979
      %3277 = vmatmul.mubr.bf16.gmra.mrb[0].mxu0 %v2773
      %v3278 = vpop.f32.mrb[0].mxu0
      %v3279 = vadd.f32 %v3223, %v3278
      %v3280 = vpop.f32.mrb[0].mxu0
      %v3281 = vpop.f32.mrb[0].mxu0
      %v3282 = vadd.f32 %v3226, %v3281
      %v3283 = vpop.f32.mrb[0].mxu0
      %3284 = vmatprep.mubr.bf16.mxu0 %v2980
      %3285 = vmatmul.mubr.bf16.gmra.mrb[0].mxu0 %v2774
      %v3286 = vpop.f32.mrb[0].mxu0
      %v3287 = vadd.f32 %v3231, %v3286
      %v3288 = vpop.f32.mrb[0].mxu0
      %v3289 = vpop.f32.mrb[0].mxu0
      %v3290 = vadd.f32 %v3234, %v3289
      %v3291 = vpop.f32.mrb[0].mxu0
      %3292 = vmatprep.mubr.bf16.mxu0 %v2981
      %3293 = vmatmul.mubr.bf16.gmra.mrb[0].mxu0 %v2775
      %v3294 = vpop.f32.mrb[0].mxu0
      %v3295 = vadd.f32 %v3239, %v3294
      %v3296 = vpop.f32.mrb[0].mxu0
      %v3297 = vpop.f32.mrb[0].mxu0
      %v3298 = vpop.f32.mrb[0].mxu0
      %3299 = vdwg.mxu0
      %3300 = vmatprep.subr.bf16.mxu0 0
      %3301 = vmatpush1.bf16.msra.mxu0 %v673
      %3302 = vmatprep.subr.bf16.mxu0 0
      %3303 = vmatpush1.bf16.msra.mxu0 %v674
      %3304 = vmatprep.subr.bf16.mxu0 0
      %3305 = vmatpush1.bf16.msra.mxu0 %v675
      %3306 = vmatprep.subr.bf16.mxu0 0
      %3307 = vmatpush1.bf16.msra.mxu0 %v676
      %3308 = vmatprep.subr.bf16.mxu0 0
      %3309 = vmatpush1.bf16.msra.mxu0 %v677
      %3310 = vmatprep.subr.bf16.mxu0 0
      %3311 = vmatpush1.bf16.msra.mxu0 %v678
      %3312 = vmatprep.subr.bf16.mxu0 0
      %3313 = vmatpush1.bf16.msra.mxu0 %v679
      %3314 = vmatprep.subr.bf16.mxu0 0
      %3315 = vmatpush1.bf16.msra.mxu0 %v680
      %3316 = vmatprep.subr.bf16.mxu0 0
      %3317 = vmatpush1.bf16.msra.mxu0 0
      %3318 = vmatprep.subr.bf16.mxu0 0
      %3319 = vmatpush1.bf16.msra.mxu0 0
      %3320 = vmatprep.subr.bf16.mxu0 0
      %3321 = vmatpush1.bf16.msra.mxu0 0
      %3322 = vmatprep.subr.bf16.mxu0 0
      %3323 = vmatpush1.bf16.msra.mxu0 0
      %3324 = vmatprep.subr.bf16.mxu0 0
      %3325 = vmatpush1.bf16.msra.mxu0 0
      %3326 = vmatprep.subr.bf16.mxu0 0
      %3327 = vmatpush1.bf16.msra.mxu0 0
      %3328 = vmatprep.subr.bf16.mxu0 0
      %3329 = vmatpush1.bf16.msra.mxu0 0
      %3330 = vmatprep.subr.bf16.mxu0 0
      %3331 = vmatpush1.bf16.msra.mxu0 0
      %3332 = vmatprep.mubr.bf16.mxu0 0
      %3333 = vmatmul.mubr.bf16.gmra.mrb[0].mxu0 %v3185
      %v3334 = vpop.f32.mrb[0].mxu0
      %v3335 = vadd.f32 %v3279, %v3334
      %v3336 = vpop.f32.mrb[0].mxu0
      %v3337 = vpop.f32.mrb[0].mxu0
      %v3338 = vadd.f32 %v3282, %v3337
      %v3339 = vpop.f32.mrb[0].mxu0
      %3340 = vmatprep.mubr.bf16.mxu0 0
      %3341 = vmatmul.mubr.bf16.gmra.mrb[0].mxu0 %v3186
      %v3342 = vpop.f32.mrb[0].mxu0
      %v3343 = vadd.f32 %v3287, %v3342
      %v3344 = vpop.f32.mrb[0].mxu0
      %v3345 = vpop.f32.mrb[0].mxu0
      %v3346 = vadd.f32 %v3290, %v3345
      %v3347 = vpop.f32.mrb[0].mxu0
      %3348 = vmatprep.mubr.bf16.mxu0 0
      %3349 = vmatmul.mubr.bf16.gmra.mrb[0].mxu0 %v3187
      %v3350 = vpop.f32.mrb[0].mxu0
      %v3351 = vadd.f32 %v3295, %v3350
      %v3352 = vpop.f32.mrb[0].mxu0
      %v3353 = vpop.f32.mrb[0].mxu0
      %v3354 = vpop.f32.mrb[0].mxu0
      %3355 = vdwg.mxu0
      %v3356 = vmax.f32 %v3150, %v3335
      %v3357 = vmax.f32 %v3151, %v3338
      %v3358 = vmax.f32 %v3152, %v3343
      %v3359 = vmax.f32 %v3153, %v3346
      %v3360 = vmax.f32 %v3154, %v3351
      %3361 = vset.pattern.permute.xlu0 17
      %3362 = vperm.xlu0 %3361, %v229
      %v3363 = vpop.permute.xlu0 %3362
      %3364 = vset.pattern.permute.xlu0 17
      %3365 = vperm.xlu0 %3364, %v230
      %v3366 = vpop.permute.xlu0 %3365
      %3367 = vset.pattern.permute.xlu0 17
      %3368 = vperm.xlu0 %3367, %v231
      %v3369 = vpop.permute.xlu0 %3368
      %3370 = vset.pattern.permute.xlu0 17
      %3371 = vperm.xlu0 %3370, %v232
      %v3372 = vpop.permute.xlu0 %3371
      %3373 = vset.pattern.permute.xlu0 17
      %3374 = vperm.xlu0 %3373, %v233
      %v3375 = vpop.permute.xlu0 %3374
      %vm3376 = vcmp.eq.s32.totalorder %v3363, %v235
      %vm3377 = vcmp.eq.s32.totalorder %v3366, %v235
      %vm3378 = vcmp.eq.s32.totalorder %v3369, %v235
      %vm3379 = vcmp.eq.s32.totalorder %v3372, %v235
      %vm3380 = vcmp.eq.s32.totalorder %v3375, %v235
      %v3381 = vsel %vm3376, 1, 0
      %v3382 = vsel %vm3377, 1, 0
      %v3383 = vsel %vm3378, 1, 0
      %v3384 = vsel %vm3379, 1, 0
      %v3385 = vsel %vm3380, 1, 0
      %v3386 = vcvt.s32.f32 %v3381
      %v3387 = vcvt.s32.f32 %v3382
      %v3388 = vcvt.s32.f32 %v3383
      %v3389 = vcvt.s32.f32 %v3384
      %v3390 = vcvt.s32.f32 %v3385
      %v3391 = vpack.c.bf16 %v3387, %v3386
      %v3392 = vpack.c.bf16 %v3389, %v3388
      %v3393 = vpack.c.bf16 %v3390, %v3390
      %3394 = vmatprep.subr.bf16.mxu0 0
      %3395 = vmatpush1.bf16.msra.mxu0 %v641
      %3396 = vmatprep.subr.bf16.mxu0 0
      %3397 = vmatpush1.bf16.msra.mxu0 %v642
      %3398 = vmatprep.subr.bf16.mxu0 0
      %3399 = vmatpush1.bf16.msra.mxu0 %v643
      %3400 = vmatprep.subr.bf16.mxu0 0
      %3401 = vmatpush1.bf16.msra.mxu0 %v644
      %3402 = vmatprep.subr.bf16.mxu0 0
      %3403 = vmatpush1.bf16.msra.mxu0 %v645
      %3404 = vmatprep.subr.bf16.mxu0 0
      %3405 = vmatpush1.bf16.msra.mxu0 %v646
      %3406 = vmatprep.subr.bf16.mxu0 0
      %3407 = vmatpush1.bf16.msra.mxu0 %v647
      %3408 = vmatprep.subr.bf16.mxu0 0
      %3409 = vmatpush1.bf16.msra.mxu0 %v648
      %3410 = vmatprep.subr.bf16.mxu0 0
      %3411 = vmatpush1.bf16.msra.mxu0 %v649
      %3412 = vmatprep.subr.bf16.mxu0 0
      %3413 = vmatpush1.bf16.msra.mxu0 %v650
      %3414 = vmatprep.subr.bf16.mxu0 0
      %3415 = vmatpush1.bf16.msra.mxu0 %v651
      %3416 = vmatprep.subr.bf16.mxu0 0
      %3417 = vmatpush1.bf16.msra.mxu0 %v652
      %3418 = vmatprep.subr.bf16.mxu0 0
      %3419 = vmatpush1.bf16.msra.mxu0 %v653
      %3420 = vmatprep.subr.bf16.mxu0 0
      %3421 = vmatpush1.bf16.msra.mxu0 %v654
      %3422 = vmatprep.subr.bf16.mxu0 0
      %3423 = vmatpush1.bf16.msra.mxu0 %v655
      %3424 = vmatprep.subr.bf16.mxu0 0
      %3425 = vmatpush1.bf16.msra.mxu0 %v656
      %3426 = vmatprep.mubr.bf16.mxu0 %v2773
      %3427 = vmatmul.mubr.bf16.gmra.mrb[0].mxu0 %v2567
      %v3428 = vpop.f32.mrb[0].mxu0
      %v3429 = vadd.f32 0.0, %v3428
      %v3430 = vpop.f32.mrb[0].mxu0
      %v3431 = vpop.f32.mrb[0].mxu0
      %v3432 = vadd.f32 0.0, %v3431
      %v3433 = vpop.f32.mrb[0].mxu0
      %3434 = vmatprep.mubr.bf16.mxu0 %v2774
      %3435 = vmatmul.mubr.bf16.gmra.mrb[0].mxu0 %v2568
      %v3436 = vpop.f32.mrb[0].mxu0
      %v3437 = vadd.f32 0.0, %v3436
      %v3438 = vpop.f32.mrb[0].mxu0
      %v3439 = vpop.f32.mrb[0].mxu0
      %v3440 = vadd.f32 0.0, %v3439
      %v3441 = vpop.f32.mrb[0].mxu0
      %3442 = vmatprep.mubr.bf16.mxu0 %v2775
      %3443 = vmatmul.mubr.bf16.gmra.mrb[0].mxu0 %v2569
      %v3444 = vpop.f32.mrb[0].mxu0
      %v3445 = vadd.f32 0.0, %v3444
      %v3446 = vpop.f32.mrb[0].mxu0
      %v3447 = vpop.f32.mrb[0].mxu0
      %v3448 = vpop.f32.mrb[0].mxu0
      %3449 = vdwg.mxu0
      %3450 = vmatprep.subr.bf16.mxu0 0
      %3451 = vmatpush1.bf16.msra.mxu0 %v657
      %3452 = vmatprep.subr.bf16.mxu0 0
      %3453 = vmatpush1.bf16.msra.mxu0 %v658
      %3454 = vmatprep.subr.bf16.mxu0 0
      %3455 = vmatpush1.bf16.msra.mxu0 %v659
      %3456 = vmatprep.subr.bf16.mxu0 0
      %3457 = vmatpush1.bf16.msra.mxu0 %v660
      %3458 = vmatprep.subr.bf16.mxu0 0
      %3459 = vmatpush1.bf16.msra.mxu0 %v661
      %3460 = vmatprep.subr.bf16.mxu0 0
      %3461 = vmatpush1.bf16.msra.mxu0 %v662
      %3462 = vmatprep.subr.bf16.mxu0 0
      %3463 = vmatpush1.bf16.msra.mxu0 %v663
      %3464 = vmatprep.subr.bf16.mxu0 0
      %3465 = vmatpush1.bf16.msra.mxu0 %v664
      %3466 = vmatprep.subr.bf16.mxu0 0
      %3467 = vmatpush1.bf16.msra.mxu0 %v665
      %3468 = vmatprep.subr.bf16.mxu0 0
      %3469 = vmatpush1.bf16.msra.mxu0 %v666
      %3470 = vmatprep.subr.bf16.mxu0 0
      %3471 = vmatpush1.bf16.msra.mxu0 %v667
      %3472 = vmatprep.subr.bf16.mxu0 0
      %3473 = vmatpush1.bf16.msra.mxu0 %v668
      %3474 = vmatprep.subr.bf16.mxu0 0
      %3475 = vmatpush1.bf16.msra.mxu0 %v669
      %3476 = vmatprep.subr.bf16.mxu0 0
      %3477 = vmatpush1.bf16.msra.mxu0 %v670
      %3478 = vmatprep.subr.bf16.mxu0 0
      %3479 = vmatpush1.bf16.msra.mxu0 %v671
      %3480 = vmatprep.subr.bf16.mxu0 0
      %3481 = vmatpush1.bf16.msra.mxu0 %v672
      %3482 = vmatprep.mubr.bf16.mxu0 %v3185
      %3483 = vmatmul.mubr.bf16.gmra.mrb[0].mxu0 %v2979
      %v3484 = vpop.f32.mrb[0].mxu0
      %v3485 = vadd.f32 %v3429, %v3484
      %v3486 = vpop.f32.mrb[0].mxu0
      %v3487 = vpop.f32.mrb[0].mxu0
      %v3488 = vadd.f32 %v3432, %v3487
      %v3489 = vpop.f32.mrb[0].mxu0
      %3490 = vmatprep.mubr.bf16.mxu0 %v3186
      %3491 = vmatmul.mubr.bf16.gmra.mrb[0].mxu0 %v2980
      %v3492 = vpop.f32.mrb[0].mxu0
      %v3493 = vadd.f32 %v3437, %v3492
      %v3494 = vpop.f32.mrb[0].mxu0
      %v3495 = vpop.f32.mrb[0].mxu0
      %v3496 = vadd.f32 %v3440, %v3495
      %v3497 = vpop.f32.mrb[0].mxu0
      %3498 = vmatprep.mubr.bf16.mxu0 %v3187
      %3499 = vmatmul.mubr.bf16.gmra.mrb[0].mxu0 %v2981
      %v3500 = vpop.f32.mrb[0].mxu0
      %v3501 = vadd.f32 %v3445, %v3500
      %v3502 = vpop.f32.mrb[0].mxu0
      %v3503 = vpop.f32.mrb[0].mxu0
      %v3504 = vpop.f32.mrb[0].mxu0
      %3505 = vdwg.mxu0
      %3506 = vmatprep.subr.bf16.mxu0 0
      %3507 = vmatpush1.bf16.msra.mxu0 %v673
      %3508 = vmatprep.subr.bf16.mxu0 0
      %3509 = vmatpush1.bf16.msra.mxu0 %v674
      %3510 = vmatprep.subr.bf16.mxu0 0
      %3511 = vmatpush1.bf16.msra.mxu0 %v675
      %3512 = vmatprep.subr.bf16.mxu0 0
      %3513 = vmatpush1.bf16.msra.mxu0 %v676
      %3514 = vmatprep.subr.bf16.mxu0 0
      %3515 = vmatpush1.bf16.msra.mxu0 %v677
      %3516 = vmatprep.subr.bf16.mxu0 0
      %3517 = vmatpush1.bf16.msra.mxu0 %v678
      %3518 = vmatprep.subr.bf16.mxu0 0
      %3519 = vmatpush1.bf16.msra.mxu0 %v679
      %3520 = vmatprep.subr.bf16.mxu0 0
      %3521 = vmatpush1.bf16.msra.mxu0 %v680
      %3522 = vmatprep.subr.bf16.mxu0 0
      %3523 = vmatpush1.bf16.msra.mxu0 0
      %3524 = vmatprep.subr.bf16.mxu0 0
      %3525 = vmatpush1.bf16.msra.mxu0 0
      %3526 = vmatprep.subr.bf16.mxu0 0
      %3527 = vmatpush1.bf16.msra.mxu0 0
      %3528 = vmatprep.subr.bf16.mxu0 0
      %3529 = vmatpush1.bf16.msra.mxu0 0
      %3530 = vmatprep.subr.bf16.mxu0 0
      %3531 = vmatpush1.bf16.msra.mxu0 0
      %3532 = vmatprep.subr.bf16.mxu0 0
      %3533 = vmatpush1.bf16.msra.mxu0 0
      %3534 = vmatprep.subr.bf16.mxu0 0
      %3535 = vmatpush1.bf16.msra.mxu0 0
      %3536 = vmatprep.subr.bf16.mxu0 0
      %3537 = vmatpush1.bf16.msra.mxu0 0
      %3538 = vmatprep.mubr.bf16.mxu0 0
      %3539 = vmatmul.mubr.bf16.gmra.mrb[0].mxu0 %v3391
      %v3540 = vpop.f32.mrb[0].mxu0
      %v3541 = vadd.f32 %v3485, %v3540
      %v3542 = vpop.f32.mrb[0].mxu0
      %v3543 = vpop.f32.mrb[0].mxu0
      %v3544 = vadd.f32 %v3488, %v3543
      %v3545 = vpop.f32.mrb[0].mxu0
      %3546 = vmatprep.mubr.bf16.mxu0 0
      %3547 = vmatmul.mubr.bf16.gmra.mrb[0].mxu0 %v3392
      %v3548 = vpop.f32.mrb[0].mxu0
      %v3549 = vadd.f32 %v3493, %v3548
      %v3550 = vpop.f32.mrb[0].mxu0
      %v3551 = vpop.f32.mrb[0].mxu0
      %v3552 = vadd.f32 %v3496, %v3551
      %v3553 = vpop.f32.mrb[0].mxu0
      %3554 = vmatprep.mubr.bf16.mxu0 0
      %3555 = vmatmul.mubr.bf16.gmra.mrb[0].mxu0 %v3393
      %v3556 = vpop.f32.mrb[0].mxu0
      %v3557 = vadd.f32 %v3501, %v3556
      %v3558 = vpop.f32.mrb[0].mxu0
      %v3559 = vpop.f32.mrb[0].mxu0
      %v3560 = vpop.f32.mrb[0].mxu0
      %3561 = vdwg.mxu0
      %v3562 = vmax.f32 %v3356, %v3541
      %v3563 = vmax.f32 %v3357, %v3544
      %v3564 = vmax.f32 %v3358, %v3549
      %v3565 = vmax.f32 %v3359, %v3552
      %v3566 = vmax.f32 %v3360, %v3557
      %3567 = vset.pattern.permute.xlu0 18
      %3568 = vperm.xlu0 %3567, %v229
      %v3569 = vpop.permute.xlu0 %3568
      %3570 = vset.pattern.permute.xlu0 18
      %3571 = vperm.xlu0 %3570, %v230
      %v3572 = vpop.permute.xlu0 %3571
      %3573 = vset.pattern.permute.xlu0 18
      %3574 = vperm.xlu0 %3573, %v231
      %v3575 = vpop.permute.xlu0 %3574
      %3576 = vset.pattern.permute.xlu0 18
      %3577 = vperm.xlu0 %3576, %v232
      %v3578 = vpop.permute.xlu0 %3577
      %3579 = vset.pattern.permute.xlu0 18
      %3580 = vperm.xlu0 %3579, %v233
      %v3581 = vpop.permute.xlu0 %3580
      %vm3582 = vcmp.eq.s32.totalorder %v3569, %v235
      %vm3583 = vcmp.eq.s32.totalorder %v3572, %v235
      %vm3584 = vcmp.eq.s32.totalorder %v3575, %v235
      %vm3585 = vcmp.eq.s32.totalorder %v3578, %v235
      %vm3586 = vcmp.eq.s32.totalorder %v3581, %v235
      %v3587 = vsel %vm3582, 1, 0
      %v3588 = vsel %vm3583, 1, 0
      %v3589 = vsel %vm3584, 1, 0
      %v3590 = vsel %vm3585, 1, 0
      %v3591 = vsel %vm3586, 1, 0
      %v3592 = vcvt.s32.f32 %v3587
      %v3593 = vcvt.s32.f32 %v3588
      %v3594 = vcvt.s32.f32 %v3589
      %v3595 = vcvt.s32.f32 %v3590
      %v3596 = vcvt.s32.f32 %v3591
      %v3597 = vpack.c.bf16 %v3593, %v3592
      %v3598 = vpack.c.bf16 %v3595, %v3594
      %v3599 = vpack.c.bf16 %v3596, %v3596
      %3600 = vmatprep.subr.bf16.mxu0 0
      %3601 = vmatpush1.bf16.msra.mxu0 %v641
      %3602 = vmatprep.subr.bf16.mxu0 0
      %3603 = vmatpush1.bf16.msra.mxu0 %v642
      %3604 = vmatprep.subr.bf16.mxu0 0
      %3605 = vmatpush1.bf16.msra.mxu0 %v643
      %3606 = vmatprep.subr.bf16.mxu0 0
      %3607 = vmatpush1.bf16.msra.mxu0 %v644
      %3608 = vmatprep.subr.bf16.mxu0 0
      %3609 = vmatpush1.bf16.msra.mxu0 %v645
      %3610 = vmatprep.subr.bf16.mxu0 0
      %3611 = vmatpush1.bf16.msra.mxu0 %v646
      %3612 = vmatprep.subr.bf16.mxu0 0
      %3613 = vmatpush1.bf16.msra.mxu0 %v647
      %3614 = vmatprep.subr.bf16.mxu0 0
      %3615 = vmatpush1.bf16.msra.mxu0 %v648
      %3616 = vmatprep.subr.bf16.mxu0 0
      %3617 = vmatpush1.bf16.msra.mxu0 %v649
      %3618 = vmatprep.subr.bf16.mxu0 0
      %3619 = vmatpush1.bf16.msra.mxu0 %v650
      %3620 = vmatprep.subr.bf16.mxu0 0
      %3621 = vmatpush1.bf16.msra.mxu0 %v651
      %3622 = vmatprep.subr.bf16.mxu0 0
      %3623 = vmatpush1.bf16.msra.mxu0 %v652
      %3624 = vmatprep.subr.bf16.mxu0 0
      %3625 = vmatpush1.bf16.msra.mxu0 %v653
      %3626 = vmatprep.subr.bf16.mxu0 0
      %3627 = vmatpush1.bf16.msra.mxu0 %v654
      %3628 = vmatprep.subr.bf16.mxu0 0
      %3629 = vmatpush1.bf16.msra.mxu0 %v655
      %3630 = vmatprep.subr.bf16.mxu0 0
      %3631 = vmatpush1.bf16.msra.mxu0 %v656
      %3632 = vmatprep.mubr.bf16.mxu0 %v2979
      %3633 = vmatmul.mubr.bf16.gmra.mrb[0].mxu0 %v2773
      %v3634 = vpop.f32.mrb[0].mxu0
      %v3635 = vadd.f32 0.0, %v3634
      %v3636 = vpop.f32.mrb[0].mxu0
      %v3637 = vpop.f32.mrb[0].mxu0
      %v3638 = vadd.f32 0.0, %v3637
      %v3639 = vpop.f32.mrb[0].mxu0
      %3640 = vmatprep.mubr.bf16.mxu0 %v2980
      %3641 = vmatmul.mubr.bf16.gmra.mrb[0].mxu0 %v2774
      %v3642 = vpop.f32.mrb[0].mxu0
      %v3643 = vadd.f32 0.0, %v3642
      %v3644 = vpop.f32.mrb[0].mxu0
      %v3645 = vpop.f32.mrb[0].mxu0
      %v3646 = vadd.f32 0.0, %v3645
      %v3647 = vpop.f32.mrb[0].mxu0
      %3648 = vmatprep.mubr.bf16.mxu0 %v2981
      %3649 = vmatmul.mubr.bf16.gmra.mrb[0].mxu0 %v2775
      %v3650 = vpop.f32.mrb[0].mxu0
      %v3651 = vadd.f32 0.0, %v3650
      %v3652 = vpop.f32.mrb[0].mxu0
      %v3653 = vpop.f32.mrb[0].mxu0
      %v3654 = vpop.f32.mrb[0].mxu0
      %3655 = vdwg.mxu0
      %3656 = vmatprep.subr.bf16.mxu0 0
      %3657 = vmatpush1.bf16.msra.mxu0 %v657
      %3658 = vmatprep.subr.bf16.mxu0 0
      %3659 = vmatpush1.bf16.msra.mxu0 %v658
      %3660 = vmatprep.subr.bf16.mxu0 0
      %3661 = vmatpush1.bf16.msra.mxu0 %v659
      %3662 = vmatprep.subr.bf16.mxu0 0
      %3663 = vmatpush1.bf16.msra.mxu0 %v660
      %3664 = vmatprep.subr.bf16.mxu0 0
      %3665 = vmatpush1.bf16.msra.mxu0 %v661
      %3666 = vmatprep.subr.bf16.mxu0 0
      %3667 = vmatpush1.bf16.msra.mxu0 %v662
      %3668 = vmatprep.subr.bf16.mxu0 0
      %3669 = vmatpush1.bf16.msra.mxu0 %v663
      %3670 = vmatprep.subr.bf16.mxu0 0
      %3671 = vmatpush1.bf16.msra.mxu0 %v664
      %3672 = vmatprep.subr.bf16.mxu0 0
      %3673 = vmatpush1.bf16.msra.mxu0 %v665
      %3674 = vmatprep.subr.bf16.mxu0 0
      %3675 = vmatpush1.bf16.msra.mxu0 %v666
      %3676 = vmatprep.subr.bf16.mxu0 0
      %3677 = vmatpush1.bf16.msra.mxu0 %v667
      %3678 = vmatprep.subr.bf16.mxu0 0
      %3679 = vmatpush1.bf16.msra.mxu0 %v668
      %3680 = vmatprep.subr.bf16.mxu0 0
      %3681 = vmatpush1.bf16.msra.mxu0 %v669
      %3682 = vmatprep.subr.bf16.mxu0 0
      %3683 = vmatpush1.bf16.msra.mxu0 %v670
      %3684 = vmatprep.subr.bf16.mxu0 0
      %3685 = vmatpush1.bf16.msra.mxu0 %v671
      %3686 = vmatprep.subr.bf16.mxu0 0
      %3687 = vmatpush1.bf16.msra.mxu0 %v672
      %3688 = vmatprep.mubr.bf16.mxu0 %v3391
      %3689 = vmatmul.mubr.bf16.gmra.mrb[0].mxu0 %v3185
      %v3690 = vpop.f32.mrb[0].mxu0
      %v3691 = vadd.f32 %v3635, %v3690
      %v3692 = vpop.f32.mrb[0].mxu0
      %v3693 = vpop.f32.mrb[0].mxu0
      %v3694 = vadd.f32 %v3638, %v3693
      %v3695 = vpop.f32.mrb[0].mxu0
      %3696 = vmatprep.mubr.bf16.mxu0 %v3392
      %3697 = vmatmul.mubr.bf16.gmra.mrb[0].mxu0 %v3186
      %v3698 = vpop.f32.mrb[0].mxu0
      %v3699 = vadd.f32 %v3643, %v3698
      %v3700 = vpop.f32.mrb[0].mxu0
      %v3701 = vpop.f32.mrb[0].mxu0
      %v3702 = vadd.f32 %v3646, %v3701
      %v3703 = vpop.f32.mrb[0].mxu0
      %3704 = vmatprep.mubr.bf16.mxu0 %v3393
      %3705 = vmatmul.mubr.bf16.gmra.mrb[0].mxu0 %v3187
      %v3706 = vpop.f32.mrb[0].mxu0
      %v3707 = vadd.f32 %v3651, %v3706
      %v3708 = vpop.f32.mrb[0].mxu0
      %v3709 = vpop.f32.mrb[0].mxu0
      %v3710 = vpop.f32.mrb[0].mxu0
      %3711 = vdwg.mxu0
      %3712 = vmatprep.subr.bf16.mxu0 0
      %3713 = vmatpush1.bf16.msra.mxu0 %v673
      %3714 = vmatprep.subr.bf16.mxu0 0
      %3715 = vmatpush1.bf16.msra.mxu0 %v674
      %3716 = vmatprep.subr.bf16.mxu0 0
      %3717 = vmatpush1.bf16.msra.mxu0 %v675
      %3718 = vmatprep.subr.bf16.mxu0 0
      %3719 = vmatpush1.bf16.msra.mxu0 %v676
      %3720 = vmatprep.subr.bf16.mxu0 0
      %3721 = vmatpush1.bf16.msra.mxu0 %v677
      %3722 = vmatprep.subr.bf16.mxu0 0
      %3723 = vmatpush1.bf16.msra.mxu0 %v678
      %3724 = vmatprep.subr.bf16.mxu0 0
      %3725 = vmatpush1.bf16.msra.mxu0 %v679
      %3726 = vmatprep.subr.bf16.mxu0 0
      %3727 = vmatpush1.bf16.msra.mxu0 %v680
      %3728 = vmatprep.subr.bf16.mxu0 0
      %3729 = vmatpush1.bf16.msra.mxu0 0
      %3730 = vmatprep.subr.bf16.mxu0 0
      %3731 = vmatpush1.bf16.msra.mxu0 0
      %3732 = vmatprep.subr.bf16.mxu0 0
      %3733 = vmatpush1.bf16.msra.mxu0 0
      %3734 = vmatprep.subr.bf16.mxu0 0
      %3735 = vmatpush1.bf16.msra.mxu0 0
      %3736 = vmatprep.subr.bf16.mxu0 0
      %3737 = vmatpush1.bf16.msra.mxu0 0
      %3738 = vmatprep.subr.bf16.mxu0 0
      %3739 = vmatpush1.bf16.msra.mxu0 0
      %3740 = vmatprep.subr.bf16.mxu0 0
      %3741 = vmatpush1.bf16.msra.mxu0 0
      %3742 = vmatprep.subr.bf16.mxu0 0
      %3743 = vmatpush1.bf16.msra.mxu0 0
      %3744 = vmatprep.mubr.bf16.mxu0 0
      %3745 = vmatmul.mubr.bf16.gmra.mrb[0].mxu0 %v3597
      %v3746 = vpop.f32.mrb[0].mxu0
      %v3747 = vadd.f32 %v3691, %v3746
      %v3748 = vpop.f32.mrb[0].mxu0
      %v3749 = vpop.f32.mrb[0].mxu0
      %v3750 = vadd.f32 %v3694, %v3749
      %v3751 = vpop.f32.mrb[0].mxu0
      %3752 = vmatprep.mubr.bf16.mxu0 0
      %3753 = vmatmul.mubr.bf16.gmra.mrb[0].mxu0 %v3598
      %v3754 = vpop.f32.mrb[0].mxu0
      %v3755 = vadd.f32 %v3699, %v3754
      %v3756 = vpop.f32.mrb[0].mxu0
      %v3757 = vpop.f32.mrb[0].mxu0
      %v3758 = vadd.f32 %v3702, %v3757
      %v3759 = vpop.f32.mrb[0].mxu0
      %3760 = vmatprep.mubr.bf16.mxu0 0
      %3761 = vmatmul.mubr.bf16.gmra.mrb[0].mxu0 %v3599
      %v3762 = vpop.f32.mrb[0].mxu0
      %v3763 = vadd.f32 %v3707, %v3762
      %v3764 = vpop.f32.mrb[0].mxu0
      %v3765 = vpop.f32.mrb[0].mxu0
      %v3766 = vpop.f32.mrb[0].mxu0
      %3767 = vdwg.mxu0
      %v3768 = vmax.f32 %v3562, %v3747
      %v3769 = vmax.f32 %v3563, %v3750
      %v3770 = vmax.f32 %v3564, %v3755
      %v3771 = vmax.f32 %v3565, %v3758
      %v3772 = vmax.f32 %v3566, %v3763
      %3773 = vset.pattern.permute.xlu0 19
      %3774 = vperm.xlu0 %3773, %v229
      %v3775 = vpop.permute.xlu0 %3774
      %3776 = vset.pattern.permute.xlu0 19
      %3777 = vperm.xlu0 %3776, %v230
      %v3778 = vpop.permute.xlu0 %3777
      %3779 = vset.pattern.permute.xlu0 19
      %3780 = vperm.xlu0 %3779, %v231
      %v3781 = vpop.permute.xlu0 %3780
      %3782 = vset.pattern.permute.xlu0 19
      %3783 = vperm.xlu0 %3782, %v232
      %v3784 = vpop.permute.xlu0 %3783
      %3785 = vset.pattern.permute.xlu0 19
      %3786 = vperm.xlu0 %3785, %v233
      %v3787 = vpop.permute.xlu0 %3786
      %vm3788 = vcmp.eq.s32.totalorder %v3775, %v235
      %vm3789 = vcmp.eq.s32.totalorder %v3778, %v235
      %vm3790 = vcmp.eq.s32.totalorder %v3781, %v235
      %vm3791 = vcmp.eq.s32.totalorder %v3784, %v235
      %vm3792 = vcmp.eq.s32.totalorder %v3787, %v235
      %v3793 = vsel %vm3788, 1, 0
      %v3794 = vsel %vm3789, 1, 0
      %v3795 = vsel %vm3790, 1, 0
      %v3796 = vsel %vm3791, 1, 0
      %v3797 = vsel %vm3792, 1, 0
      %v3798 = vcvt.s32.f32 %v3793
      %v3799 = vcvt.s32.f32 %v3794
      %v3800 = vcvt.s32.f32 %v3795
      %v3801 = vcvt.s32.f32 %v3796
      %v3802 = vcvt.s32.f32 %v3797
      %v3803 = vpack.c.bf16 %v3799, %v3798
      %v3804 = vpack.c.bf16 %v3801, %v3800
      %v3805 = vpack.c.bf16 %v3802, %v3802
      %3806 = vmatprep.subr.bf16.mxu0 0
      %3807 = vmatpush1.bf16.msra.mxu0 %v641
      %3808 = vmatprep.subr.bf16.mxu0 0
      %3809 = vmatpush1.bf16.msra.mxu0 %v642
      %3810 = vmatprep.subr.bf16.mxu0 0
      %3811 = vmatpush1.bf16.msra.mxu0 %v643
      %3812 = vmatprep.subr.bf16.mxu0 0
      %3813 = vmatpush1.bf16.msra.mxu0 %v644
      %3814 = vmatprep.subr.bf16.mxu0 0
      %3815 = vmatpush1.bf16.msra.mxu0 %v645
      %3816 = vmatprep.subr.bf16.mxu0 0
      %3817 = vmatpush1.bf16.msra.mxu0 %v646
      %3818 = vmatprep.subr.bf16.mxu0 0
      %3819 = vmatpush1.bf16.msra.mxu0 %v647
      %3820 = vmatprep.subr.bf16.mxu0 0
      %3821 = vmatpush1.bf16.msra.mxu0 %v648
      %3822 = vmatprep.subr.bf16.mxu0 0
      %3823 = vmatpush1.bf16.msra.mxu0 %v649
      %3824 = vmatprep.subr.bf16.mxu0 0
      %3825 = vmatpush1.bf16.msra.mxu0 %v650
      %3826 = vmatprep.subr.bf16.mxu0 0
      %3827 = vmatpush1.bf16.msra.mxu0 %v651
      %3828 = vmatprep.subr.bf16.mxu0 0
      %3829 = vmatpush1.bf16.msra.mxu0 %v652
      %3830 = vmatprep.subr.bf16.mxu0 0
      %3831 = vmatpush1.bf16.msra.mxu0 %v653
      %3832 = vmatprep.subr.bf16.mxu0 0
      %3833 = vmatpush1.bf16.msra.mxu0 %v654
      %3834 = vmatprep.subr.bf16.mxu0 0
      %3835 = vmatpush1.bf16.msra.mxu0 %v655
      %3836 = vmatprep.subr.bf16.mxu0 0
      %3837 = vmatpush1.bf16.msra.mxu0 %v656
      %3838 = vmatprep.mubr.bf16.mxu0 %v3185
      %3839 = vmatmul.mubr.bf16.gmra.mrb[0].mxu0 %v2979
      %v3840 = vpop.f32.mrb[0].mxu0
      %v3841 = vadd.f32 0.0, %v3840
      %v3842 = vpop.f32.mrb[0].mxu0
      %v3843 = vpop.f32.mrb[0].mxu0
      %v3844 = vadd.f32 0.0, %v3843
      %v3845 = vpop.f32.mrb[0].mxu0
      %3846 = vmatprep.mubr.bf16.mxu0 %v3186
      %3847 = vmatmul.mubr.bf16.gmra.mrb[0].mxu0 %v2980
      %v3848 = vpop.f32.mrb[0].mxu0
      %v3849 = vadd.f32 0.0, %v3848
      %v3850 = vpop.f32.mrb[0].mxu0
      %v3851 = vpop.f32.mrb[0].mxu0
      %v3852 = vadd.f32 0.0, %v3851
      %v3853 = vpop.f32.mrb[0].mxu0
      %3854 = vmatprep.mubr.bf16.mxu0 %v3187
      %3855 = vmatmul.mubr.bf16.gmra.mrb[0].mxu0 %v2981
      %v3856 = vpop.f32.mrb[0].mxu0
      %v3857 = vadd.f32 0.0, %v3856
      %v3858 = vpop.f32.mrb[0].mxu0
      %v3859 = vpop.f32.mrb[0].mxu0
      %v3860 = vpop.f32.mrb[0].mxu0
      %3861 = vdwg.mxu0
      %3862 = vmatprep.subr.bf16.mxu0 0
      %3863 = vmatpush1.bf16.msra.mxu0 %v657
      %3864 = vmatprep.subr.bf16.mxu0 0
      %3865 = vmatpush1.bf16.msra.mxu0 %v658
      %3866 = vmatprep.subr.bf16.mxu0 0
      %3867 = vmatpush1.bf16.msra.mxu0 %v659
      %3868 = vmatprep.subr.bf16.mxu0 0
      %3869 = vmatpush1.bf16.msra.mxu0 %v660
      %3870 = vmatprep.subr.bf16.mxu0 0
      %3871 = vmatpush1.bf16.msra.mxu0 %v661
      %3872 = vmatprep.subr.bf16.mxu0 0
      %3873 = vmatpush1.bf16.msra.mxu0 %v662
      %3874 = vmatprep.subr.bf16.mxu0 0
      %3875 = vmatpush1.bf16.msra.mxu0 %v663
      %3876 = vmatprep.subr.bf16.mxu0 0
      %3877 = vmatpush1.bf16.msra.mxu0 %v664
      %3878 = vmatprep.subr.bf16.mxu0 0
      %3879 = vmatpush1.bf16.msra.mxu0 %v665
      %3880 = vmatprep.subr.bf16.mxu0 0
      %3881 = vmatpush1.bf16.msra.mxu0 %v666
      %3882 = vmatprep.subr.bf16.mxu0 0
      %3883 = vmatpush1.bf16.msra.mxu0 %v667
      %3884 = vmatprep.subr.bf16.mxu0 0
      %3885 = vmatpush1.bf16.msra.mxu0 %v668
      %3886 = vmatprep.subr.bf16.mxu0 0
      %3887 = vmatpush1.bf16.msra.mxu0 %v669
      %3888 = vmatprep.subr.bf16.mxu0 0
      %3889 = vmatpush1.bf16.msra.mxu0 %v670
      %3890 = vmatprep.subr.bf16.mxu0 0
      %3891 = vmatpush1.bf16.msra.mxu0 %v671
      %3892 = vmatprep.subr.bf16.mxu0 0
      %3893 = vmatpush1.bf16.msra.mxu0 %v672
      %3894 = vmatprep.mubr.bf16.mxu0 %v3597
      %3895 = vmatmul.mubr.bf16.gmra.mrb[0].mxu0 %v3391
      %v3896 = vpop.f32.mrb[0].mxu0
      %v3897 = vadd.f32 %v3841, %v3896
      %v3898 = vpop.f32.mrb[0].mxu0
      %v3899 = vpop.f32.mrb[0].mxu0
      %v3900 = vadd.f32 %v3844, %v3899
      %v3901 = vpop.f32.mrb[0].mxu0
      %3902 = vmatprep.mubr.bf16.mxu0 %v3598
      %3903 = vmatmul.mubr.bf16.gmra.mrb[0].mxu0 %v3392
      %v3904 = vpop.f32.mrb[0].mxu0
      %v3905 = vadd.f32 %v3849, %v3904
      %v3906 = vpop.f32.mrb[0].mxu0
      %v3907 = vpop.f32.mrb[0].mxu0
      %v3908 = vadd.f32 %v3852, %v3907
      %v3909 = vpop.f32.mrb[0].mxu0
      %3910 = vmatprep.mubr.bf16.mxu0 %v3599
      %3911 = vmatmul.mubr.bf16.gmra.mrb[0].mxu0 %v3393
      %v3912 = vpop.f32.mrb[0].mxu0
      %v3913 = vadd.f32 %v3857, %v3912
      %v3914 = vpop.f32.mrb[0].mxu0
      %v3915 = vpop.f32.mrb[0].mxu0
      %v3916 = vpop.f32.mrb[0].mxu0
      %3917 = vdwg.mxu0
      %3918 = vmatprep.subr.bf16.mxu0 0
      %3919 = vmatpush1.bf16.msra.mxu0 %v673
      %3920 = vmatprep.subr.bf16.mxu0 0
      %3921 = vmatpush1.bf16.msra.mxu0 %v674
      %3922 = vmatprep.subr.bf16.mxu0 0
      %3923 = vmatpush1.bf16.msra.mxu0 %v675
      %3924 = vmatprep.subr.bf16.mxu0 0
      %3925 = vmatpush1.bf16.msra.mxu0 %v676
      %3926 = vmatprep.subr.bf16.mxu0 0
      %3927 = vmatpush1.bf16.msra.mxu0 %v677
      %3928 = vmatprep.subr.bf16.mxu0 0
      %3929 = vmatpush1.bf16.msra.mxu0 %v678
      %3930 = vmatprep.subr.bf16.mxu0 0
      %3931 = vmatpush1.bf16.msra.mxu0 %v679
      %3932 = vmatprep.subr.bf16.mxu0 0
      %3933 = vmatpush1.bf16.msra.mxu0 %v680
      %3934 = vmatprep.subr.bf16.mxu0 0
      %3935 = vmatpush1.bf16.msra.mxu0 0
      %3936 = vmatprep.subr.bf16.mxu0 0
      %3937 = vmatpush1.bf16.msra.mxu0 0
      %3938 = vmatprep.subr.bf16.mxu0 0
      %3939 = vmatpush1.bf16.msra.mxu0 0
      %3940 = vmatprep.subr.bf16.mxu0 0
      %3941 = vmatpush1.bf16.msra.mxu0 0
      %3942 = vmatprep.subr.bf16.mxu0 0
      %3943 = vmatpush1.bf16.msra.mxu0 0
      %3944 = vmatprep.subr.bf16.mxu0 0
      %3945 = vmatpush1.bf16.msra.mxu0 0
      %3946 = vmatprep.subr.bf16.mxu0 0
      %3947 = vmatpush1.bf16.msra.mxu0 0
      %3948 = vmatprep.subr.bf16.mxu0 0
      %3949 = vmatpush1.bf16.msra.mxu0 0
      %3950 = vmatprep.mubr.bf16.mxu0 0
      %3951 = vmatmul.mubr.bf16.gmra.mrb[0].mxu0 %v3803
      %v3952 = vpop.f32.mrb[0].mxu0
      %v3953 = vadd.f32 %v3897, %v3952
      %v3954 = vpop.f32.mrb[0].mxu0
      %v3955 = vpop.f32.mrb[0].mxu0
      %v3956 = vadd.f32 %v3900, %v3955
      %v3957 = vpop.f32.mrb[0].mxu0
      %3958 = vmatprep.mubr.bf16.mxu0 0
      %3959 = vmatmul.mubr.bf16.gmra.mrb[0].mxu0 %v3804
      %v3960 = vpop.f32.mrb[0].mxu0
      %v3961 = vadd.f32 %v3905, %v3960
      %v3962 = vpop.f32.mrb[0].mxu0
      %v3963 = vpop.f32.mrb[0].mxu0
      %v3964 = vadd.f32 %v3908, %v3963
      %v3965 = vpop.f32.mrb[0].mxu0
      %3966 = vmatprep.mubr.bf16.mxu0 0
      %3967 = vmatmul.mubr.bf16.gmra.mrb[0].mxu0 %v3805
      %v3968 = vpop.f32.mrb[0].mxu0
      %v3969 = vadd.f32 %v3913, %v3968
      %v3970 = vpop.f32.mrb[0].mxu0
      %v3971 = vpop.f32.mrb[0].mxu0
      %v3972 = vpop.f32.mrb[0].mxu0
      %3973 = vdwg.mxu0
      %v3974 = vmax.f32 %v3768, %v3953
      %v3975 = vmax.f32 %v3769, %v3956
      %v3976 = vmax.f32 %v3770, %v3961
      %v3977 = vmax.f32 %v3771, %v3964
      %v3978 = vmax.f32 %v3772, %v3969
      %3979 = vset.pattern.permute.xlu0 20
      %3980 = vperm.xlu0 %3979, %v229
      %v3981 = vpop.permute.xlu0 %3980
      %3982 = vset.pattern.permute.xlu0 20
      %3983 = vperm.xlu0 %3982, %v230
      %v3984 = vpop.permute.xlu0 %3983
      %3985 = vset.pattern.permute.xlu0 20
      %3986 = vperm.xlu0 %3985, %v231
      %v3987 = vpop.permute.xlu0 %3986
      %3988 = vset.pattern.permute.xlu0 20
      %3989 = vperm.xlu0 %3988, %v232
      %v3990 = vpop.permute.xlu0 %3989
      %3991 = vset.pattern.permute.xlu0 20
      %3992 = vperm.xlu0 %3991, %v233
      %v3993 = vpop.permute.xlu0 %3992
      %vm3994 = vcmp.eq.s32.totalorder %v3981, %v235
      %vm3995 = vcmp.eq.s32.totalorder %v3984, %v235
      %vm3996 = vcmp.eq.s32.totalorder %v3987, %v235
      %vm3997 = vcmp.eq.s32.totalorder %v3990, %v235
      %vm3998 = vcmp.eq.s32.totalorder %v3993, %v235
      %v3999 = vsel %vm3994, 1, 0
      %v4000 = vsel %vm3995, 1, 0
      %v4001 = vsel %vm3996, 1, 0
      %v4002 = vsel %vm3997, 1, 0
      %v4003 = vsel %vm3998, 1, 0
      %v4004 = vcvt.s32.f32 %v3999
      %v4005 = vcvt.s32.f32 %v4000
      %v4006 = vcvt.s32.f32 %v4001
      %v4007 = vcvt.s32.f32 %v4002
      %v4008 = vcvt.s32.f32 %v4003
      %v4009 = vpack.c.bf16 %v4005, %v4004
      %v4010 = vpack.c.bf16 %v4007, %v4006
      %v4011 = vpack.c.bf16 %v4008, %v4008
      %4012 = vmatprep.subr.bf16.mxu0 0
      %4013 = vmatpush1.bf16.msra.mxu0 %v641
      %4014 = vmatprep.subr.bf16.mxu0 0
      %4015 = vmatpush1.bf16.msra.mxu0 %v642
      %4016 = vmatprep.subr.bf16.mxu0 0
      %4017 = vmatpush1.bf16.msra.mxu0 %v643
      %4018 = vmatprep.subr.bf16.mxu0 0
      %4019 = vmatpush1.bf16.msra.mxu0 %v644
      %4020 = vmatprep.subr.bf16.mxu0 0
      %4021 = vmatpush1.bf16.msra.mxu0 %v645
      %4022 = vmatprep.subr.bf16.mxu0 0
      %4023 = vmatpush1.bf16.msra.mxu0 %v646
      %4024 = vmatprep.subr.bf16.mxu0 0
      %4025 = vmatpush1.bf16.msra.mxu0 %v647
      %4026 = vmatprep.subr.bf16.mxu0 0
      %4027 = vmatpush1.bf16.msra.mxu0 %v648
      %4028 = vmatprep.subr.bf16.mxu0 0
      %4029 = vmatpush1.bf16.msra.mxu0 %v649
      %4030 = vmatprep.subr.bf16.mxu0 0
      %4031 = vmatpush1.bf16.msra.mxu0 %v650
      %4032 = vmatprep.subr.bf16.mxu0 0
      %4033 = vmatpush1.bf16.msra.mxu0 %v651
      %4034 = vmatprep.subr.bf16.mxu0 0
      %4035 = vmatpush1.bf16.msra.mxu0 %v652
      %4036 = vmatprep.subr.bf16.mxu0 0
      %4037 = vmatpush1.bf16.msra.mxu0 %v653
      %4038 = vmatprep.subr.bf16.mxu0 0
      %4039 = vmatpush1.bf16.msra.mxu0 %v654
      %4040 = vmatprep.subr.bf16.mxu0 0
      %4041 = vmatpush1.bf16.msra.mxu0 %v655
      %4042 = vmatprep.subr.bf16.mxu0 0
      %4043 = vmatpush1.bf16.msra.mxu0 %v656
      %4044 = vmatprep.mubr.bf16.mxu0 %v3391
      %4045 = vmatmul.mubr.bf16.gmra.mrb[0].mxu0 %v3185
      %v4046 = vpop.f32.mrb[0].mxu0
      %v4047 = vadd.f32 0.0, %v4046
      %v4048 = vpop.f32.mrb[0].mxu0
      %v4049 = vpop.f32.mrb[0].mxu0
      %v4050 = vadd.f32 0.0, %v4049
      %v4051 = vpop.f32.mrb[0].mxu0
      %4052 = vmatprep.mubr.bf16.mxu0 %v3392
      %4053 = vmatmul.mubr.bf16.gmra.mrb[0].mxu0 %v3186
      %v4054 = vpop.f32.mrb[0].mxu0
      %v4055 = vadd.f32 0.0, %v4054
      %v4056 = vpop.f32.mrb[0].mxu0
      %v4057 = vpop.f32.mrb[0].mxu0
      %v4058 = vadd.f32 0.0, %v4057
      %v4059 = vpop.f32.mrb[0].mxu0
      %4060 = vmatprep.mubr.bf16.mxu0 %v3393
      %4061 = vmatmul.mubr.bf16.gmra.mrb[0].mxu0 %v3187
      %v4062 = vpop.f32.mrb[0].mxu0
      %v4063 = vadd.f32 0.0, %v4062
      %v4064 = vpop.f32.mrb[0].mxu0
      %v4065 = vpop.f32.mrb[0].mxu0
      %v4066 = vpop.f32.mrb[0].mxu0
      %4067 = vdwg.mxu0
      %4068 = vmatprep.subr.bf16.mxu0 0
      %4069 = vmatpush1.bf16.msra.mxu0 %v657
      %4070 = vmatprep.subr.bf16.mxu0 0
      %4071 = vmatpush1.bf16.msra.mxu0 %v658
      %4072 = vmatprep.subr.bf16.mxu0 0
      %4073 = vmatpush1.bf16.msra.mxu0 %v659
      %4074 = vmatprep.subr.bf16.mxu0 0
      %4075 = vmatpush1.bf16.msra.mxu0 %v660
      %4076 = vmatprep.subr.bf16.mxu0 0
      %4077 = vmatpush1.bf16.msra.mxu0 %v661
      %4078 = vmatprep.subr.bf16.mxu0 0
      %4079 = vmatpush1.bf16.msra.mxu0 %v662
      %4080 = vmatprep.subr.bf16.mxu0 0
      %4081 = vmatpush1.bf16.msra.mxu0 %v663
      %4082 = vmatprep.subr.bf16.mxu0 0
      %4083 = vmatpush1.bf16.msra.mxu0 %v664
      %4084 = vmatprep.subr.bf16.mxu0 0
      %4085 = vmatpush1.bf16.msra.mxu0 %v665
      %4086 = vmatprep.subr.bf16.mxu0 0
      %4087 = vmatpush1.bf16.msra.mxu0 %v666
      %4088 = vmatprep.subr.bf16.mxu0 0
      %4089 = vmatpush1.bf16.msra.mxu0 %v667
      %4090 = vmatprep.subr.bf16.mxu0 0
      %4091 = vmatpush1.bf16.msra.mxu0 %v668
      %4092 = vmatprep.subr.bf16.mxu0 0
      %4093 = vmatpush1.bf16.msra.mxu0 %v669
      %4094 = vmatprep.subr.bf16.mxu0 0
      %4095 = vmatpush1.bf16.msra.mxu0 %v670
      %4096 = vmatprep.subr.bf16.mxu0 0
      %4097 = vmatpush1.bf16.msra.mxu0 %v671
      %4098 = vmatprep.subr.bf16.mxu0 0
      %4099 = vmatpush1.bf16.msra.mxu0 %v672
      %4100 = vmatprep.mubr.bf16.mxu0 %v3803
      %4101 = vmatmul.mubr.bf16.gmra.mrb[0].mxu0 %v3597
      %v4102 = vpop.f32.mrb[0].mxu0
      %v4103 = vadd.f32 %v4047, %v4102
      %v4104 = vpop.f32.mrb[0].mxu0
      %v4105 = vpop.f32.mrb[0].mxu0
      %v4106 = vadd.f32 %v4050, %v4105
      %v4107 = vpop.f32.mrb[0].mxu0
      %4108 = vmatprep.mubr.bf16.mxu0 %v3804
      %4109 = vmatmul.mubr.bf16.gmra.mrb[0].mxu0 %v3598
      %v4110 = vpop.f32.mrb[0].mxu0
      %v4111 = vadd.f32 %v4055, %v4110
      %v4112 = vpop.f32.mrb[0].mxu0
      %v4113 = vpop.f32.mrb[0].mxu0
      %v4114 = vadd.f32 %v4058, %v4113
      %v4115 = vpop.f32.mrb[0].mxu0
      %4116 = vmatprep.mubr.bf16.mxu0 %v3805
      %4117 = vmatmul.mubr.bf16.gmra.mrb[0].mxu0 %v3599
      %v4118 = vpop.f32.mrb[0].mxu0
      %v4119 = vadd.f32 %v4063, %v4118
      %v4120 = vpop.f32.mrb[0].mxu0
      %v4121 = vpop.f32.mrb[0].mxu0
      %v4122 = vpop.f32.mrb[0].mxu0
      %4123 = vdwg.mxu0
      %4124 = vmatprep.subr.bf16.mxu0 0
      %4125 = vmatpush1.bf16.msra.mxu0 %v673
      %4126 = vmatprep.subr.bf16.mxu0 0
      %4127 = vmatpush1.bf16.msra.mxu0 %v674
      %4128 = vmatprep.subr.bf16.mxu0 0
      %4129 = vmatpush1.bf16.msra.mxu0 %v675
      %4130 = vmatprep.subr.bf16.mxu0 0
      %4131 = vmatpush1.bf16.msra.mxu0 %v676
      %4132 = vmatprep.subr.bf16.mxu0 0
      %4133 = vmatpush1.bf16.msra.mxu0 %v677
      %4134 = vmatprep.subr.bf16.mxu0 0
      %4135 = vmatpush1.bf16.msra.mxu0 %v678
      %4136 = vmatprep.subr.bf16.mxu0 0
      %4137 = vmatpush1.bf16.msra.mxu0 %v679
      %4138 = vmatprep.subr.bf16.mxu0 0
      %4139 = vmatpush1.bf16.msra.mxu0 %v680
      %4140 = vmatprep.subr.bf16.mxu0 0
      %4141 = vmatpush1.bf16.msra.mxu0 0
      %4142 = vmatprep.subr.bf16.mxu0 0
      %4143 = vmatpush1.bf16.msra.mxu0 0
      %4144 = vmatprep.subr.bf16.mxu0 0
      %4145 = vmatpush1.bf16.msra.mxu0 0
      %4146 = vmatprep.subr.bf16.mxu0 0
      %4147 = vmatpush1.bf16.msra.mxu0 0
      %4148 = vmatprep.subr.bf16.mxu0 0
      %4149 = vmatpush1.bf16.msra.mxu0 0
      %4150 = vmatprep.subr.bf16.mxu0 0
      %4151 = vmatpush1.bf16.msra.mxu0 0
      %4152 = vmatprep.subr.bf16.mxu0 0
      %4153 = vmatpush1.bf16.msra.mxu0 0
      %4154 = vmatprep.subr.bf16.mxu0 0
      %4155 = vmatpush1.bf16.msra.mxu0 0
      %4156 = vmatprep.mubr.bf16.mxu0 0
      %4157 = vmatmul.mubr.bf16.gmra.mrb[0].mxu0 %v4009
      %v4158 = vpop.f32.mrb[0].mxu0
      %v4159 = vadd.f32 %v4103, %v4158
      %v4160 = vpop.f32.mrb[0].mxu0
      %v4161 = vpop.f32.mrb[0].mxu0
      %v4162 = vadd.f32 %v4106, %v4161
      %v4163 = vpop.f32.mrb[0].mxu0
      %4164 = vmatprep.mubr.bf16.mxu0 0
      %4165 = vmatmul.mubr.bf16.gmra.mrb[0].mxu0 %v4010
      %v4166 = vpop.f32.mrb[0].mxu0
      %v4167 = vadd.f32 %v4111, %v4166
      %v4168 = vpop.f32.mrb[0].mxu0
      %v4169 = vpop.f32.mrb[0].mxu0
      %v4170 = vadd.f32 %v4114, %v4169
      %v4171 = vpop.f32.mrb[0].mxu0
      %4172 = vmatprep.mubr.bf16.mxu0 0
      %4173 = vmatmul.mubr.bf16.gmra.mrb[0].mxu0 %v4011
      %v4174 = vpop.f32.mrb[0].mxu0
      %v4175 = vadd.f32 %v4119, %v4174
      %v4176 = vpop.f32.mrb[0].mxu0
      %v4177 = vpop.f32.mrb[0].mxu0
      %v4178 = vpop.f32.mrb[0].mxu0
      %4179 = vdwg.mxu0
      %v4180 = vmax.f32 %v3974, %v4159
      %v4181 = vmax.f32 %v3975, %v4162
      %v4182 = vmax.f32 %v3976, %v4167
      %v4183 = vmax.f32 %v3977, %v4170
      %v4184 = vmax.f32 %v3978, %v4175
      %v4185 = vld [vmem:[%s2] sm:$0x1]
      %v4187 = vlaneseq
      %v4188 = vshrl.u32 %v4187, 7
      %v4189 = vsub.s32 0, %v4188
      %v4190 = vrot.slane %v4185, %v4189
      %v4192 = vadd.f32 %v4180, %v4190
      %v4193 = vadd.f32 %v4181, %v4190
      %v4194 = vadd.f32 %v4182, %v4190
      %v4195 = vadd.f32 %v4183, %v4190
      %v4196 = vadd.f32 %v4184, %v4190
      %v4197 = vmax.f32 %v4192, 0.0
      %v4198 = vmax.f32 %v4193, 0.0
      %v4199 = vmax.f32 %v4194, 0.0
      %v4200 = vmax.f32 %v4195, 0.0
      %v4201 = vmax.f32 %v4196, 0.0
      %v4202 = vpack.c.bf16 %v4198, %v4197
      %v4203 = vpack.c.bf16 %v4200, %v4199
      %v4204 = vpack.c.bf16 %v4201, %v4201
      %v4205 = vld [vmem:[%s3] sm:$0xff]
      %v4206 = vld [vmem:[%s3 + $0x8] sm:$0xff]
      %v4207 = vld [vmem:[%s3 + $0x10] sm:$0xff]
      %v4208 = vld [vmem:[%s3 + $0x18] sm:$0xff]
      %v4209 = vld [vmem:[%s3 + $0x20] sm:$0xff]
      %v4210 = vld [vmem:[%s3 + $0x28] sm:$0xff]
      %v4211 = vld [vmem:[%s3 + $0x30] sm:$0xff]
      %v4212 = vld [vmem:[%s3 + $0x38] sm:$0xff]
      %v4213 = vld [vmem:[%s3 + $0x40] sm:$0xff]
      %v4214 = vld [vmem:[%s3 + $0x48] sm:$0xff]
      %v4215 = vld [vmem:[%s3 + $0x50] sm:$0xff]
      %v4216 = vld [vmem:[%s3 + $0x58] sm:$0xff]
      %v4217 = vld [vmem:[%s3 + $0x60] sm:$0xff]
      %v4218 = vld [vmem:[%s3 + $0x68] sm:$0xff]
      %v4219 = vld [vmem:[%s3 + $0x70] sm:$0xff]
      %v4220 = vld [vmem:[%s3 + $0x78] sm:$0xff]
      %v4221 = vld [vmem:[%s4] sm:$0x3]
      %v4223 = vlaneseq
      %v4224 = vshrl.u32 %v4223, 7
      %v4225 = vsub.s32 0, %v4224
      %v4226 = vrot.slane %v4221, %v4225
      %v4227 = vlaneseq
      %v4228 = vshrl.u32 %v4227, 7
      %v4229 = vsub.s32 1, %v4228
      %v4230 = vrot.slane %v4221, %v4229
      %v4249 = vunpack.c.l.b16 %v4205
      %v4250 = vunpack.c.h.b16 %v4205
      %v4251 = vunpack.c.l.b16 %v4206
      %v4252 = vunpack.c.h.b16 %v4206
      %v4253 = vunpack.c.l.b16 %v4207
      %v4254 = vunpack.c.h.b16 %v4207
      %v4255 = vunpack.c.l.b16 %v4208
      %v4256 = vunpack.c.h.b16 %v4208
      %v4257 = vunpack.c.l.b16 %v4209
      %v4258 = vunpack.c.h.b16 %v4209
      %v4259 = vunpack.c.l.b16 %v4210
      %v4260 = vunpack.c.h.b16 %v4210
      %v4261 = vunpack.c.l.b16 %v4211
      %v4262 = vunpack.c.h.b16 %v4211
      %v4263 = vunpack.c.l.b16 %v4212
      %v4264 = vunpack.c.h.b16 %v4212
      %v4265 = vunpack.c.l.b16 %v4213
      %v4266 = vunpack.c.h.b16 %v4213
      %v4267 = vunpack.c.l.b16 %v4214
      %v4268 = vunpack.c.h.b16 %v4214
      %v4269 = vunpack.c.l.b16 %v4215
      %v4270 = vunpack.c.h.b16 %v4215
      %v4271 = vunpack.c.l.b16 %v4216
      %v4272 = vunpack.c.h.b16 %v4216
      %v4273 = vunpack.c.l.b16 %v4217
      %v4274 = vunpack.c.h.b16 %v4217
      %v4275 = vunpack.c.l.b16 %v4218
      %v4276 = vunpack.c.h.b16 %v4218
      %v4277 = vunpack.c.l.b16 %v4219
      %v4278 = vunpack.c.h.b16 %v4219
      %v4279 = vunpack.c.l.b16 %v4220
      %v4280 = vunpack.c.h.b16 %v4220
      %v4281 = vpack.c.b16 %v4251, %v4249
      %v4282 = vpack.c.b16 %v4252, %v4250
      %v4283 = vpack.c.b16 %v4255, %v4253
      %v4284 = vpack.c.b16 %v4256, %v4254
      %v4285 = vpack.c.b16 %v4259, %v4257
      %v4286 = vpack.c.b16 %v4260, %v4258
      %v4287 = vpack.c.b16 %v4263, %v4261
      %v4288 = vpack.c.b16 %v4264, %v4262
      %v4289 = vpack.c.b16 %v4267, %v4265
      %v4290 = vpack.c.b16 %v4268, %v4266
      %v4291 = vpack.c.b16 %v4271, %v4269
      %v4292 = vpack.c.b16 %v4272, %v4270
      %v4293 = vpack.c.b16 %v4275, %v4273
      %v4294 = vpack.c.b16 %v4276, %v4274
      %v4295 = vpack.c.b16 %v4279, %v4277
      %v4296 = vpack.c.b16 %v4280, %v4278
      %4313 = vmatprep.subr.bf16.mxu0 %v4282
      %4314 = vmatpush1.bf16.msra.mxu0 %v4281
      %4315 = vmatprep.subr.bf16.mxu0 %v4284
      %4316 = vmatpush1.bf16.msra.mxu0 %v4283
      %4317 = vmatprep.subr.bf16.mxu0 %v4286
      %4318 = vmatpush1.bf16.msra.mxu0 %v4285
      %4319 = vmatprep.subr.bf16.mxu0 %v4288
      %4320 = vmatpush1.bf16.msra.mxu0 %v4287
      %4321 = vmatprep.subr.bf16.mxu0 %v4290
      %4322 = vmatpush1.bf16.msra.mxu0 %v4289
      %4323 = vmatprep.subr.bf16.mxu0 %v4292
      %4324 = vmatpush1.bf16.msra.mxu0 %v4291
      %4325 = vmatprep.subr.bf16.mxu0 %v4294
      %4326 = vmatpush1.bf16.msra.mxu0 %v4293
      %4327 = vmatprep.subr.bf16.mxu0 %v4296
      %4328 = vmatpush1.bf16.msra.mxu0 %v4295
      %4329 = vmatprep.subr.bf16.mxu0 0
      %4330 = vmatpush1.bf16.msra.mxu0 0
      %4331 = vmatprep.subr.bf16.mxu0 0
      %4332 = vmatpush1.bf16.msra.mxu0 0
      %4333 = vmatprep.subr.bf16.mxu0 0
      %4334 = vmatpush1.bf16.msra.mxu0 0
      %4335 = vmatprep.subr.bf16.mxu0 0
      %4336 = vmatpush1.bf16.msra.mxu0 0
      %4337 = vmatprep.subr.bf16.mxu0 0
      %4338 = vmatpush1.bf16.msra.mxu0 0
      %4339 = vmatprep.subr.bf16.mxu0 0
      %4340 = vmatpush1.bf16.msra.mxu0 0
      %4341 = vmatprep.subr.bf16.mxu0 0
      %4342 = vmatpush1.bf16.msra.mxu0 0
      %4343 = vmatprep.subr.bf16.mxu0 0
      %4344 = vmatpush1.bf16.msra.mxu0 0
      %4345 = vmatprep.mubr.bf16.mxu0 0
      %4346 = vmatmul.mubr.bf16.gmra.mrb[0].mxu0 %v4202
      %v4347 = vpop.f32.mrb[0].mxu0
      %v4348 = vadd.f32 %v4226, %v4347
      %v4349 = vpop.f32.mrb[0].mxu0
      %v4350 = vadd.f32 %v4230, %v4349
      %v4351 = vpop.f32.mrb[0].mxu0
      %v4352 = vadd.f32 %v4226, %v4351
      %v4353 = vpop.f32.mrb[0].mxu0
      %v4354 = vadd.f32 %v4230, %v4353
      %4355 = vmatprep.mubr.bf16.mxu0 0
      %4356 = vmatmul.mubr.bf16.gmra.mrb[0].mxu0 %v4203
      %v4357 = vpop.f32.mrb[0].mxu0
      %v4358 = vadd.f32 %v4226, %v4357
      %v4359 = vpop.f32.mrb[0].mxu0
      %v4360 = vadd.f32 %v4230, %v4359
      %v4361 = vpop.f32.mrb[0].mxu0
      %v4362 = vadd.f32 %v4226, %v4361
      %v4363 = vpop.f32.mrb[0].mxu0
      %v4364 = vadd.f32 %v4230, %v4363
      %4365 = vmatprep.mubr.bf16.mxu0 0
      %4366 = vmatmul.mubr.bf16.gmra.mrb[0].mxu0 %v4204
      %v4367 = vpop.f32.mrb[0].mxu0
      %v4368 = vadd.f32 %v4226, %v4367
      %v4369 = vpop.f32.mrb[0].mxu0
      %v4370 = vadd.f32 %v4230, %v4369
      %v4371 = vpop.f32.mrb[0].mxu0
      %v4372 = vpop.f32.mrb[0].mxu0
      %4373 = vdwg.mxu0
      %v4374 = vmax.f32 %v4348, 0.0
      %v4375 = vmax.f32 %v4352, 0.0
      %v4376 = vmax.f32 %v4358, 0.0
      %v4377 = vmax.f32 %v4362, 0.0
      %v4378 = vmax.f32 %v4368, 0.0
      %v4379 = vxor.u32 %v4350, 2147483648
      %v4380 = vxor.u32 %v4354, 2147483648
      %v4381 = vxor.u32 %v4360, 2147483648
      %v4382 = vxor.u32 %v4364, 2147483648
      %v4383 = vxor.u32 %v4370, 2147483648
      %v4384 = vmul.f32 %v4379, 1.442695
      %v4385 = vpow.pop %v4384
      %v4386 = vmul.f32 %v4380, 1.442695
      %v4387 = vpow.pop %v4386
      %v4388 = vmul.f32 %v4381, 1.442695
      %v4389 = vpow.pop %v4388
      %v4390 = vmul.f32 %v4382, 1.442695
      %v4391 = vpow.pop %v4390
      %v4392 = vmul.f32 %v4383, 1.442695
      %v4393 = vpow.pop %v4392
      %v4394 = vadd.f32 %v4385, 1.0
      %v4395 = vadd.f32 %v4387, 1.0
      %v4396 = vadd.f32 %v4389, 1.0
      %v4397 = vadd.f32 %v4391, 1.0
      %v4398 = vadd.f32 %v4393, 1.0
      %v4399 = vrcp.pop %v4394
      %v4400 = vmul.f32 1.0, %v4399
      %v4401 = vrcp.pop %v4395
      %v4402 = vmul.f32 1.0, %v4401
      %v4403 = vrcp.pop %v4396
      %v4404 = vmul.f32 1.0, %v4403
      %v4405 = vrcp.pop %v4397
      %v4406 = vmul.f32 1.0, %v4405
      %v4407 = vrcp.pop %v4398
      %v4408 = vmul.f32 1.0, %v4407
      %v4409 = vmul.f32 %v4400, %v4374
      %v4410 = vmul.f32 %v4402, %v4375
      %v4411 = vmul.f32 %v4404, %v4376
      %v4412 = vmul.f32 %v4406, %v4377
      %v4413 = vmul.f32 %v4408, %v4378
      %v4414 = vsub.f32 1.0, %v4400
      %v4415 = vsub.f32 1.0, %v4402
      %v4416 = vsub.f32 1.0, %v4404
      %v4417 = vsub.f32 1.0, %v4406
      %v4418 = vsub.f32 1.0, %v4408
      %v4419 = vmul.f32 %v4414, %v4197
      %v4420 = vmul.f32 %v4415, %v4198
      %v4421 = vmul.f32 %v4416, %v4199
      %v4422 = vmul.f32 %v4417, %v4200
      %v4423 = vmul.f32 %v4418, %v4201
      %v4424 = vadd.f32 %v4409, %v4419
      %v4425 = vadd.f32 %v4410, %v4420
      %v4426 = vadd.f32 %v4411, %v4421
      %v4427 = vadd.f32 %v4412, %v4422
      %v4428 = vadd.f32 %v4413, %v4423
      %4429 = vst [vmem:[%s226] sm:$0xff] %v4424
      %4430 = vst [vmem:[%s226 + $0x8] sm:$0xff] %v4425
      %4431 = vst [vmem:[%s226 + $0x10] sm:$0xff] %v4426
      %4432 = vst [vmem:[%s226 + $0x18] sm:$0xff] %v4427
      %4433 = vst [vmem:[%s226 + $0x20] sm:$0xff] %v4428
      %s4434 = smul.u32 5, %s16
      %p4435 = scmp.lt.s32.totalorder %s4434, 9
      %s4436 = scalar_select %p4435, %s4434, 9
      %s4437 = smul.addr %s4436, 8
      %s4438 = scalar_lea.vmem %s5, %s4437
      // Predicated region
      $region41: #{model_embeddings_forward.1} parent=39 // pred_check
        %p4439 = pneg %p144
      $region42: #{model_embeddings_forward.1} parent=39 // pred_check_branch
        %4441 = sbr.rel (%p4439) target = $region44
      $region43: #{model_embeddings_forward.1} parent=39 // pred_region
        %s4442 = smul.u32 5, %s16
      $region44: #{model_embeddings_forward.1} parent=39 // pred_fallthru
        _
    $region40: #{model_embeddings_forward.1} parent=5 // pred_fallthru
      _
    %p4443 = scmp.le.s32.totalorder 2, %s11
    // Predicated region
    $region45: #{model_embeddings_forward.1} parent=5 // pred_check
      %p4444 = pneg %p4443
    $region46: #{model_embeddings_forward.1} parent=5 // pred_check_branch
      %4446 = sbr.rel (%p4444) target = $region48
    $region47: #{model_embeddings_forward.1} parent=5 // pred_region
      %s4447 = ssub.s32 %s11, 2
      // Predicated region
      $region49: #{model_embeddings_forward.1} parent=47 // pred_check
        %p4448 = pneg %p150
      $region50: #{model_embeddings_forward.1} parent=47 // pred_check_branch
        %4450 = sbr.rel (%p4448) target = $region52
      $region51: #{model_embeddings_forward.1} parent=47 // pred_region
        %s4451 = smul.u32 5, %s17
        %p4452 = scmp.lt.s32.totalorder %s4451, 9
        %s4453 = scalar_select %p4452, %s4451, 9
        %s4454 = smul.addr %s4453, 8
        %s4455 = scalar_lea.vmem %s5, %s4454
      $region52: #{model_embeddings_forward.1} parent=47 // pred_fallthru
        _
    $region48: #{model_embeddings_forward.1} parent=5 // pred_fallthru
      _
  $region6: #{model_embeddings_forward.1} parent=0 // loop_footer
    %s15 = sadd.s32 1, %s11
  $region7: #{model_embeddings_forward.1} parent=0 // loop_footer_branch
    %10 = sbr.rel target = $region3
  $region8: #{model_embeddings_forward.1} parent=0 // loop_exit
    _

</llo_original>
